<compile_context>
chip_gen: v6e
topology: v6e:2x2x1
jax: 0.10.0
libtpu: 0.0.40
codegen_flags: <defaults>
</compile_context>

<pallas_src>
import math
from functools import partial

import jax
import jax.numpy as jnp
from jax.experimental import pallas as pl
from jax.experimental.pallas import tpu as pltpu


# ---------------------------------------------------------------------------
# in-kernel helpers
# ---------------------------------------------------------------------------
def _layernorm(x, gamma, beta, eps=1e-5):
    # x: (rows, C) f32; gamma/beta: (1, C).  rsqrt runs on the EUP.
    mean = jnp.mean(x, axis=-1, keepdims=True)
    xc = x - mean
    var = jnp.mean(xc * xc, axis=-1, keepdims=True)
    return xc * jax.lax.rsqrt(var + eps) * gamma + beta


def _gelu_tanh(x):
    # tanh-approx GELU: one EUP tanh + a short VALU polynomial.  Max abs error
    # vs the exact erf GELU (nn.GELU() default) is ~3e-3 at |x|~2, far inside
    # the bf16 noise floor of this block.
    # TODO(synk): swap back to an exact-erf evaluation if a <1e-4 match to the
    # PyTorch module is ever required.
    c = math.sqrt(2.0 / math.pi)
    return 0.5 * x * (1.0 + jnp.tanh(c * (x + 0.044715 * (x * x * x))))


# ---------------------------------------------------------------------------
# kernel 1: LayerNorm1 + fused QKV projection (per batch / row tile)
# ---------------------------------------------------------------------------
def ln_qkv_kernel(x_ref, g_ref, b_ref, wqkv_ref, qkv_ref):
    h = _layernorm(x_ref[...], g_ref[...], b_ref[...])              # (tr, C) f32
    qkv_ref[...] = jnp.dot(h.astype(jnp.bfloat16), wqkv_ref[...],
                           preferred_element_type=jnp.float32
                           ).astype(qkv_ref.dtype)                  # (tr, 3C) bf16


# ---------------------------------------------------------------------------
# kernel 2: attention for one (batch, head-group, q-row-tile)
# ---------------------------------------------------------------------------
def attn_kernel(q_ref, k_ref, v_ref, o_ref, *, hp, hd):
    q = q_ref[...]                                                  # (tq, hp*hd) bf16, Q pre-scaled
    k = k_ref[...]                                                  # (N,  hp*hd) bf16
    v = v_ref[...]                                                  # (N,  hp*hd) bf16
    # Unrolled per-head loop: back-to-back MXU matmuls keep the pipe full
    # while every HBM block stays a multiple of 128 lanes.
    for h in range(hp):
        sl = slice(h * hd, (h + 1) * hd)
        s = jax.lax.dot_general(q[:, sl], k[:, sl],                 # contract hd, no k.T
                                (((1,), (1,)), ((), ())),
                                preferred_element_type=jnp.float32)  # (tq, N) f32
        s = s - jnp.max(s, axis=-1, keepdims=True)
        p = jnp.exp(s)                                               # EUP
        p = p * pl.reciprocal(jnp.sum(p, axis=-1, keepdims=True), approx=True)
        o_ref[:, sl] = jnp.dot(p.astype(jnp.bfloat16), v[:, sl],
                               preferred_element_type=jnp.float32
                               ).astype(o_ref.dtype)


# ---------------------------------------------------------------------------
# kernel 3: attn proj + LS1 + residual + LN2 + MLP + LS2 + residual
# ---------------------------------------------------------------------------
def proj_mlp_kernel(x_ref, attn_ref, wproj_ref, bproj_ref, ls1_ref,
                    ln2g_ref, ln2b_ref, w1_ref, b1_ref, w2_ref, b2_ref,
                    ls2_ref, o_ref):
    x = x_ref[...]                                                  # (tr, C) f32
    a = jnp.dot(attn_ref[...], wproj_ref[...],
                preferred_element_type=jnp.float32) + bproj_ref[...]
    x = x + a * ls1_ref[...]                                        # residual + LayerScale (f32)

    h = _layernorm(x, ln2g_ref[...], ln2b_ref[...])
    m = jnp.dot(h.astype(jnp.bfloat16), w1_ref[...],
                preferred_element_type=jnp.float32) + b1_ref[...]
    m = _gelu_tanh(m)
    m = jnp.dot(m.astype(jnp.bfloat16), w2_ref[...],
                preferred_element_type=jnp.float32) + b2_ref[...]
    o_ref[...] = (x + m * ls2_ref[...]).astype(o_ref.dtype)


# ---------------------------------------------------------------------------
# wrapper helpers
# ---------------------------------------------------------------------------
def _vmem_capacity_bytes():
    # Generation-aware VMEM size (v5e/v6e: 128 MiB, v7x: 64 MiB per core).
    try:
        cap = getattr(pltpu.get_tpu_info(), "vmem_capacity_bytes", None)
        if cap:
            return int(cap)
    except Exception:
        pass
    return 64 << 20        # conservative fallback (v7x)


def _compiler_params(semantics, est_bytes):
    cap = int(_vmem_capacity_bytes() * 0.85)
    vmem = int(min(max(int(est_bytes) + (8 << 20), 32 << 20), cap))
    return pltpu.CompilerParams(dimension_semantics=semantics,
                                vmem_limit_bytes=vmem)


def _tile(n, target):
    t = max(1, min(n, target))
    while n % t:
        t -= 1
    return t


def _head_group(num_heads, head_dim):
    # Smallest head group whose packed lane width is a multiple of 128.
    for hp in range(1, num_heads + 1):
        if num_heads % hp == 0 and (hp * head_dim) % 128 == 0:
            return hp
    return num_heads


def prepare_params(params, num_heads):
    """One-time weight prep (call once, outside the per-step forward): bf16
    casts for every MXU operand and 1/sqrt(head_dim) folded into wqkv's Q
    columns.  Accumulation stays f32 in-kernel."""
    C = params["wqkv"].shape[0]
    hd = C // num_heads
    bf16 = jnp.bfloat16
    prep = dict(params)
    prep["wqkv"] = params["wqkv"].at[:, :C].multiply(hd ** -0.5).astype(bf16)
    prep["wproj"] = params["wproj"].astype(bf16)
    prep["w1"] = params["w1"].astype(bf16)
    prep["w2"] = params["w2"].astype(bf16)
    return prep


# ---------------------------------------------------------------------------
# forward
# ---------------------------------------------------------------------------
def block_forward(x, params, num_heads, tr=None, tq=None):
    B, N, C = x.shape
    H = num_heads
    assert C % H == 0
    hd = C // H
    hidden = params["w1"].shape[1]
    tr = _tile(N, 512) if tr is None else tr        # row tile, kernels 1 & 3
    tq = _tile(N, 256) if tq is None else tq        # query-row tile, kernel 2
    hp = _head_group(H, hd)                         # heads packed per grid step
    ng = H // hp                                    # number of head groups
    gw = hp * hd                                    # group lane width
    assert N % tr == 0 and N % tq == 0
    assert gw % 128 == 0, "head-group width must be a multiple of 128 lanes"

    bf16 = jnp.bfloat16
    wqkv, wproj, w1, w2 = params["wqkv"], params["wproj"], params["w1"], params["w2"]
    assert wqkv.dtype == bf16, "call prepare_params() once before block_forward"

    def full(shape):   # fully-resident parameter block (constant index map)
        # TODO(synk): pipeline_mode=pl.Buffered(1) to single-buffer these once
        # validated on this jax version (halves resident weight VMEM on v7x).
        return pl.BlockSpec(shape, lambda *idx: (0,) * len(shape))

    # ---- kernel 1: LN1 + QKV -------------------------------------------------
    k1_vmem = (2 * wqkv.size * 2 + 4 * C * 4
               + 2 * (tr * C * 4 + tr * 3 * C * 2) + 4 * tr * C * 4)
    qkv = pl.pallas_call(
        ln_qkv_kernel,
        out_shape=jax.ShapeDtypeStruct((B, N, 3 * C), bf16),
        grid=(B, N // tr),
        in_specs=[
            pl.BlockSpec((None, tr, C), lambda b, r: (b, r, 0)),    # x rows
            full((1, C)), full((1, C)),                             # ln1 gamma / beta
            full((C, 3 * C)),                                       # wqkv (bf16, Q cols pre-scaled)
        ],
        out_specs=pl.BlockSpec((None, tr, 3 * C), lambda b, r: (b, r, 0)),
        compiler_params=_compiler_params(("parallel", "parallel"), k1_vmem),
    )(x, params["ln1_g"], params["ln1_b"], wqkv)

    # ---- kernel 2: attention straight out of / into the packed layout --------
    # q/k/v blocks are (tq, gw) / (N, gw) slabs of the (B, N, 3C) qkv tensor,
    # selected purely by the last-axis block index (sel*ng + g); output is
    # written directly into (B, N, C) at block (b, i, g).  No HBM relayouts.
    k2_vmem = 2 * ((tq + 2 * N) * gw * 2 + tq * gw * 2) + hp * tq * N * 4
    attn = pl.pallas_call(
        partial(attn_kernel, hp=hp, hd=hd),
        out_shape=jax.ShapeDtypeStruct((B, N, C), bf16),
        grid=(B, ng, N // tq),
        in_specs=[
            pl.BlockSpec((None, tq, gw), lambda b, g, i: (b, i, g)),          # q group
            pl.BlockSpec((None, N, gw), lambda b, g, i: (b, 0, ng + g)),      # k group
            pl.BlockSpec((None, N, gw), lambda b, g, i: (b, 0, 2 * ng + g)),  # v group
        ],
        out_specs=pl.BlockSpec((None, tq, gw), lambda b, g, i: (b, i, g)),
        compiler_params=_compiler_params(
            ("parallel", "parallel", "parallel"), k2_vmem),
    )(qkv, qkv, qkv)

    # ---- kernel 3: proj + LS1 + residual + LN2 + MLP + LS2 + residual --------
    k3_vmem = (2 * (wproj.size + w1.size + w2.size) * 2          # double-buffered bf16 weights
               + 2 * (2 * hidden + 6 * C) * 4                    # biases / LN / LS vectors
               + 2 * (2 * tr * C * 4 + tr * C * 2)               # x / attn / out row tiles
               + tr * hidden * 4 + 4 * tr * C * 4)               # GELU + LN intermediates
    out = pl.pallas_call(
        proj_mlp_kernel,
        out_shape=jax.ShapeDtypeStruct((B, N, C), x.dtype),
        grid=(B, N // tr),
        in_specs=[
            pl.BlockSpec((None, tr, C), lambda b, r: (b, r, 0)),    # x rows (residual)
            pl.BlockSpec((None, tr, C), lambda b, r: (b, r, 0)),    # attn rows (bf16)
            full((C, C)), full((1, C)),                             # proj weight / bias
            full((1, C)),                                           # ls1 gamma
            full((1, C)), full((1, C)),                             # ln2 gamma / beta
            full((C, hidden)), full((1, hidden)),                   # fc1 weight / bias
            full((hidden, C)), full((1, C)),                        # fc2 weight / bias
            full((1, C)),                                           # ls2 gamma
        ],
        out_specs=pl.BlockSpec((None, tr, C), lambda b, r: (b, r, 0)),
        input_output_aliases={0: 0},                                # out reuses x's buffer
        compiler_params=_compiler_params(("parallel", "parallel"), k3_vmem),
    )(x, attn, wproj, params["bproj"], params["ls1"], params["ln2_g"],
      params["ln2_b"], w1, params["b1"], w2, params["b2"], params["ls2"])
    return out


# ---------------------------------------------------------------------------
# pure-JAX f32 reference (mirrors the PyTorch module, exact erf GELU)
# ---------------------------------------------------------------------------
def block_ref(x, p, num_heads):
    B, N, C = x.shape
    hd = C // num_heads

    def ln(y, g, b):
        m = y.mean(-1, keepdims=True)
        v = ((y - m) ** 2).mean(-1, keepdims=True)
        return (y - m) / jnp.sqrt(v + 1e-5) * g + b

    h = ln(x, p["ln1_g"][0], p["ln1_b"][0])
    qkv = h @ p["wqkv"]
    q, k, v = jnp.split(qkv, 3, axis=-1)
    q = q.reshape(B, N, num_heads, hd).transpose(0, 2, 1, 3)
    k = k.reshape(B, N, num_heads, hd).transpose(0, 2, 1, 3)
    v = v.reshape(B, N, num_heads, hd).transpose(0, 2, 1, 3)
    s = (q * hd ** -0.5) @ jnp.swapaxes(k, -1, -2)
    o = (jax.nn.softmax(s, axis=-1) @ v).transpose(0, 2, 1, 3).reshape(B, N, C)
    o = o @ p["wproj"] + p["bproj"][0]
    x = x + o * p["ls1"][0]
    h2 = ln(x, p["ln2_g"][0], p["ln2_b"][0])
    m = jax.nn.gelu(h2 @ p["w1"] + p["b1"][0], approximate=False)
    m = m @ p["w2"] + p["b2"][0]
    return x + m * p["ls2"][0]


# ---------------------------------------------------------------------------
# main
# ---------------------------------------------------------------------------
if __name__ == "__main__":
    # Small, TPU-friendly demo shapes: C a multiple of 128 keeps every HBM
    # block lane-dense (hd=32, so hp=4 heads are packed per attention step).
    B, N, C = 2, 16, 128
    num_heads = 4
    mlp_ratio = 4.0
    hidden = int(C * mlp_ratio)

    key = jax.random.PRNGKey(0)
    ks = jax.random.split(key, 7)

    # Linear weights ~ trunc_normal(0.02)-style, LayerNorm at its init
    # (weight=1, bias=0).  LayerScale gammas set to 0.1 (module init is 1e-5)
    # so the numerical check exercises both branches, not just the residuals.
    params = {
        "ln1_g": jnp.ones((1, C), jnp.float32),
        "ln1_b": jnp.zeros((1, C), jnp.float32),
        "wqkv": 0.02 * jax.random.normal(ks[1], (C, 3 * C), jnp.float32),
        "wproj": 0.02 * jax.random.normal(ks[2], (C, C), jnp.float32),
        "bproj": jnp.zeros((1, C), jnp.float32),
        "ls1": jnp.full((1, C), 0.1, jnp.float32),
        "ln2_g": jnp.ones((1, C), jnp.float32),
        "ln2_b": jnp.zeros((1, C), jnp.float32),
        "w1": 0.02 * jax.random.normal(ks[3], (C, hidden), jnp.float32),
        "b1": 0.02 * jax.random.normal(ks[4], (1, hidden), jnp.float32),
        "w2": 0.02 * jax.random.normal(ks[5], (hidden, C), jnp.float32),
        "b2": 0.02 * jax.random.normal(ks[6], (1, C), jnp.float32),
        "ls2": jnp.full((1, C), 0.1, jnp.float32),
    }
    x = jax.random.normal(ks[0], (B, N, C), jnp.float32)

    prep = prepare_params(params, num_heads)           # one-time weight prep
    out = jax.jit(block_forward, static_argnums=(2,))(x, prep, num_heads)
    jax.block_until_ready(out)

    ref = block_ref(x, params, num_heads)
    assert out.shape == (B, N, C)
    err = float(jnp.max(jnp.abs(out - ref)))
    assert jnp.allclose(out, ref, atol=1e-2, rtol=1e-2), \
        f"mismatch vs reference (max abs err {err})"
    print("KERNEL_OK")
</pallas_src>

<mosaic_0001>
module attributes {stable_mosaic.version = 11 : i64} {
  func.func @ln_qkv_kernel(%arg0: i32, %arg1: i32, %arg2: memref<1x16x128xf32, #tpu.memory_space<vmem>>, %arg3: memref<1x128xf32, #tpu.memory_space<vmem>>, %arg4: memref<1x128xf32, #tpu.memory_space<vmem>>, %arg5: memref<128x384xbf16, #tpu.memory_space<vmem>>, %arg6: memref<1x16x384xbf16, #tpu.memory_space<vmem>>) attributes {dimension_semantics = [#tpu.dimension_semantics<parallel>, #tpu.dimension_semantics<parallel>], iteration_bounds = array<i64: 2, 1>, scalar_prefetch = 0 : i64, scratch_operands = 0 : i64, tpu.core_type = #tpu.core_type<tc>, window_params = [{transform_indices = @transform_0, window_bounds = array<i64: 1, 16, 128>}, {pipeline_mode = #tpu.pipeline_mode<synchronous>, transform_indices = @transform_1, window_bounds = array<i64: 1, 128>}, {pipeline_mode = #tpu.pipeline_mode<synchronous>, transform_indices = @transform_2, window_bounds = array<i64: 1, 128>}, {pipeline_mode = #tpu.pipeline_mode<synchronous>, transform_indices = @transform_3, window_bounds = array<i64: 128, 384>}, {transform_indices = @transform_4, window_bounds = array<i64: 1, 16, 384>}]} {
    %c0 = arith.constant 0 : index
    %c0_0 = arith.constant 0 : index
    %c0_1 = arith.constant 0 : index
    %0 = vector.load %arg2[%c0, %c0_0, %c0_1] : memref<1x16x128xf32, #tpu.memory_space<vmem>>, vector<1x16x128xf32>
    %1 = vector.shape_cast %0 : vector<1x16x128xf32> to vector<16x128xf32>
    %c0_2 = arith.constant 0 : index
    %c0_3 = arith.constant 0 : index
    %2 = vector.load %arg3[%c0_2, %c0_3] : memref<1x128xf32, #tpu.memory_space<vmem>>, vector<1x128xf32>
    %c0_4 = arith.constant 0 : index
    %c0_5 = arith.constant 0 : index
    %3 = vector.load %arg4[%c0_4, %c0_5] : memref<1x128xf32, #tpu.memory_space<vmem>>, vector<1x128xf32>
    %cst = arith.constant dense<0.000000e+00> : vector<16xf32>
    %4 = vector.multi_reduction <add>, %1, %cst [1] : vector<16x128xf32> to vector<16xf32>
    %5 = vector.shape_cast %4 : vector<16xf32> to vector<16x1xf32>
    %cst_6 = arith.constant 1.280000e+02 : f32
    %6 = vector.broadcast %cst_6 : f32 to vector<16x1xf32>
    %7 = arith.divf %5, %6 : vector<16x1xf32>
    %8 = vector.broadcast %7 : vector<16x1xf32> to vector<16x128xf32>
    %9 = arith.subf %1, %8 : vector<16x128xf32>
    %10 = arith.mulf %9, %9 : vector<16x128xf32>
    %cst_7 = arith.constant dense<0.000000e+00> : vector<16xf32>
    %11 = vector.multi_reduction <add>, %10, %cst_7 [1] : vector<16x128xf32> to vector<16xf32>
    %12 = vector.shape_cast %11 : vector<16xf32> to vector<16x1xf32>
    %cst_8 = arith.constant 1.280000e+02 : f32
    %13 = vector.broadcast %cst_8 : f32 to vector<16x1xf32>
    %14 = arith.divf %12, %13 : vector<16x1xf32>
    %cst_9 = arith.constant 9.99999974E-6 : f32
    %15 = vector.broadcast %cst_9 : f32 to vector<16x1xf32>
    %16 = arith.addf %14, %15 : vector<16x1xf32>
    %17 = math.rsqrt %16 : vector<16x1xf32>
    %18 = vector.broadcast %17 : vector<16x1xf32> to vector<16x128xf32>
    %19 = arith.mulf %9, %18 : vector<16x128xf32>
    %20 = vector.broadcast %2 : vector<1x128xf32> to vector<16x128xf32>
    %21 = arith.mulf %19, %20 : vector<16x128xf32>
    %22 = vector.broadcast %3 : vector<1x128xf32> to vector<16x128xf32>
    %23 = arith.addf %21, %22 : vector<16x128xf32>
    %24 = arith.truncf %23 : vector<16x128xf32> to vector<16x128xbf16>
    %c0_10 = arith.constant 0 : index
    %c0_11 = arith.constant 0 : index
    %25 = vector.load %arg5[%c0_10, %c0_11] : memref<128x384xbf16, #tpu.memory_space<vmem>>, vector<128x384xbf16>
    %cst_12 = arith.constant dense<0.000000e+00> : vector<16x384xf32>
    %26 = tpu.matmul %24, %25, %cst_12 {dimension_numbers = #tpu.dot_dimension_numbers<[1], [0], [0], [1], [0, 0, 1, 1], [], []>} : vector<16x128xbf16>, vector<128x384xbf16>, vector<16x384xf32> -> vector<16x384xf32>
    %27 = arith.truncf %26 : vector<16x384xf32> to vector<16x384xbf16>
    %c0_13 = arith.constant 0 : index
    %c0_14 = arith.constant 0 : index
    %c0_15 = arith.constant 0 : index
    %28 = vector.load %arg6[%c0_13, %c0_14, %c0_15] : memref<1x16x384xbf16, #tpu.memory_space<vmem>>, vector<1x16x384xbf16>
    %29 = vector.shape_cast %28 : vector<1x16x384xbf16> to vector<16x384xbf16>
    %30 = vector.shape_cast %27 : vector<16x384xbf16> to vector<1x16x384xbf16>
    tpu.vector_store %arg6[%c0_13, %c0_14, %c0_15], %30 {strides = array<i32>} : memref<1x16x384xbf16, #tpu.memory_space<vmem>>, vector<1x16x384xbf16>,
    return
  }
  func.func @transform_0(%arg0: i32, %arg1: i32) -> (i32, i32, i32) {
    %c0_i32 = arith.constant 0 : i32
    %c0_i32_0 = arith.constant 0 : i32
    return %arg0, %arg1, %c0_i32 : i32, i32, i32
  }
  func.func @transform_1(%arg0: i32, %arg1: i32) -> (i32, i32) {
    %c0_i32 = arith.constant 0 : i32
    %c0_i32_0 = arith.constant 0 : i32
    %c0_i32_1 = arith.constant 0 : i32
    return %c0_i32, %c0_i32_0 : i32, i32
  }
  func.func @transform_2(%arg0: i32, %arg1: i32) -> (i32, i32) {
    %c0_i32 = arith.constant 0 : i32
    %c0_i32_0 = arith.constant 0 : i32
    %c0_i32_1 = arith.constant 0 : i32
    return %c0_i32, %c0_i32_0 : i32, i32
  }
  func.func @transform_3(%arg0: i32, %arg1: i32) -> (i32, i32) {
    %c0_i32 = arith.constant 0 : i32
    %c0_i32_0 = arith.constant 0 : i32
    %c0_i32_1 = arith.constant 0 : i32
    return %c0_i32, %c0_i32_0 : i32, i32
  }
  func.func @transform_4(%arg0: i32, %arg1: i32) -> (i32, i32, i32) {
    %c0_i32 = arith.constant 0 : i32
    %c0_i32_0 = arith.constant 0 : i32
    return %arg0, %arg1, %c0_i32 : i32, i32, i32
  }
}

module attributes {stable_mosaic.version = 11 : i64} {
  func.func @attn_kernel(%arg0: i32, %arg1: i32, %arg2: i32, %arg3: memref<1x16x128xbf16, #tpu.memory_space<vmem>>, %arg4: memref<1x16x128xbf16, #tpu.memory_space<vmem>>, %arg5: memref<1x16x128xbf16, #tpu.memory_space<vmem>>, %arg6: memref<1x16x128xbf16, #tpu.memory_space<vmem>>) attributes {dimension_semantics = [#tpu.dimension_semantics<parallel>, #tpu.dimension_semantics<parallel>, #tpu.dimension_semantics<parallel>], iteration_bounds = array<i64: 2, 1, 1>, scalar_prefetch = 0 : i64, scratch_operands = 0 : i64, tpu.core_type = #tpu.core_type<tc>, window_params = [{transform_indices = @transform_0, window_bounds = array<i64: 1, 16, 128>}, {transform_indices = @transform_1, window_bounds = array<i64: 1, 16, 128>}, {transform_indices = @transform_2, window_bounds = array<i64: 1, 16, 128>}, {transform_indices = @transform_3, window_bounds = array<i64: 1, 16, 128>}]} {
    %c0 = arith.constant 0 : index
    %c0_0 = arith.constant 0 : index
    %c0_1 = arith.constant 0 : index
    %0 = vector.load %arg3[%c0, %c0_0, %c0_1] : memref<1x16x128xbf16, #tpu.memory_space<vmem>>, vector<1x16x128xbf16>
    %1 = vector.shape_cast %0 : vector<1x16x128xbf16> to vector<16x128xbf16>
    %c0_2 = arith.constant 0 : index
    %c0_3 = arith.constant 0 : index
    %c0_4 = arith.constant 0 : index
    %2 = vector.load %arg4[%c0_2, %c0_3, %c0_4] : memref<1x16x128xbf16, #tpu.memory_space<vmem>>, vector<1x16x128xbf16>
    %3 = vector.shape_cast %2 : vector<1x16x128xbf16> to vector<16x128xbf16>
    %c0_5 = arith.constant 0 : index
    %c0_6 = arith.constant 0 : index
    %c0_7 = arith.constant 0 : index
    %4 = vector.load %arg5[%c0_5, %c0_6, %c0_7] : memref<1x16x128xbf16, #tpu.memory_space<vmem>>, vector<1x16x128xbf16>
    %5 = vector.shape_cast %4 : vector<1x16x128xbf16> to vector<16x128xbf16>
    %6 = vector.extract_strided_slice %1 {offsets = [0, 0], sizes = [16, 32], strides = [1, 1]} : vector<16x128xbf16> to vector<16x32xbf16>
    %7 = vector.extract_strided_slice %3 {offsets = [0, 0], sizes = [16, 32], strides = [1, 1]} : vector<16x128xbf16> to vector<16x32xbf16>
    %cst = arith.constant dense<0.000000e+00> : vector<16x16xf32>
    %8 = tpu.matmul %6, %7, %cst {dimension_numbers = #tpu.dot_dimension_numbers<[1], [1], [0], [0], [0, 0, 1, 0], [], []>} : vector<16x32xbf16>, vector<16x32xbf16>, vector<16x16xf32> -> vector<16x16xf32>
    %cst_8 = arith.constant dense<0xFF800000> : vector<16xf32>
    %9 = vector.multi_reduction <maximumf>, %8, %cst_8 [1] : vector<16x16xf32> to vector<16xf32>
    %10 = vector.shape_cast %9 : vector<16xf32> to vector<16x1xf32>
    %11 = vector.broadcast %10 : vector<16x1xf32> to vector<16x16xf32>
    %12 = arith.subf %8, %11 : vector<16x16xf32>
    %13 = math.exp %12 : vector<16x16xf32>
    %cst_9 = arith.constant dense<0.000000e+00> : vector<16xf32>
    %14 = vector.multi_reduction <add>, %13, %cst_9 [1] : vector<16x16xf32> to vector<16xf32>
    %15 = vector.shape_cast %14 : vector<16xf32> to vector<16x1xf32>
    %16 = tpu.reciprocal %15 {approx = true} : vector<16x1xf32> -> vector<16x1xf32>
    %17 = vector.broadcast %16 : vector<16x1xf32> to vector<16x16xf32>
    %18 = arith.mulf %13, %17 : vector<16x16xf32>
    %19 = arith.truncf %18 : vector<16x16xf32> to vector<16x16xbf16>
    %20 = vector.extract_strided_slice %5 {offsets = [0, 0], sizes = [16, 32], strides = [1, 1]} : vector<16x128xbf16> to vector<16x32xbf16>
    %cst_10 = arith.constant dense<0.000000e+00> : vector<16x32xf32>
    %21 = tpu.matmul %19, %20, %cst_10 {dimension_numbers = #tpu.dot_dimension_numbers<[1], [0], [0], [1], [0, 0, 1, 1], [], []>} : vector<16x16xbf16>, vector<16x32xbf16>, vector<16x32xf32> -> vector<16x32xf32>
    %22 = arith.truncf %21 : vector<16x32xf32> to vector<16x32xbf16>
    %c0_11 = arith.constant 0 : index
    %c0_12 = arith.constant 0 : index
    %c0_13 = arith.constant 0 : index
    %23 = vector.load %arg6[%c0_11, %c0_12, %c0_13] : memref<1x16x128xbf16, #tpu.memory_space<vmem>>, vector<1x16x32xbf16>
    %24 = vector.shape_cast %23 : vector<1x16x32xbf16> to vector<16x32xbf16>
    %25 = vector.shape_cast %22 : vector<16x32xbf16> to vector<1x16x32xbf16>
    tpu.vector_store %arg6[%c0_11, %c0_12, %c0_13], %25 {strides = array<i32>} : memref<1x16x128xbf16, #tpu.memory_space<vmem>>, vector<1x16x32xbf16>,
    %26 = vector.extract_strided_slice %1 {offsets = [0, 32], sizes = [16, 32], strides = [1, 1]} : vector<16x128xbf16> to vector<16x32xbf16>
    %27 = vector.extract_strided_slice %3 {offsets = [0, 32], sizes = [16, 32], strides = [1, 1]} : vector<16x128xbf16> to vector<16x32xbf16>
    %cst_14 = arith.constant dense<0.000000e+00> : vector<16x16xf32>
    %28 = tpu.matmul %26, %27, %cst_14 {dimension_numbers = #tpu.dot_dimension_numbers<[1], [1], [0], [0], [0, 0, 1, 0], [], []>} : vector<16x32xbf16>, vector<16x32xbf16>, vector<16x16xf32> -> vector<16x16xf32>
    %cst_15 = arith.constant dense<0xFF800000> : vector<16xf32>
    %29 = vector.multi_reduction <maximumf>, %28, %cst_15 [1] : vector<16x16xf32> to vector<16xf32>
    %30 = vector.shape_cast %29 : vector<16xf32> to vector<16x1xf32>
    %31 = vector.broadcast %30 : vector<16x1xf32> to vector<16x16xf32>
    %32 = arith.subf %28, %31 : vector<16x16xf32>
    %33 = math.exp %32 : vector<16x16xf32>
    %cst_16 = arith.constant dense<0.000000e+00> : vector<16xf32>
    %34 = vector.multi_reduction <add>, %33, %cst_16 [1] : vector<16x16xf32> to vector<16xf32>
    %35 = vector.shape_cast %34 : vector<16xf32> to vector<16x1xf32>
    %36 = tpu.reciprocal %35 {approx = true} : vector<16x1xf32> -> vector<16x1xf32>
    %37 = vector.broadcast %36 : vector<16x1xf32> to vector<16x16xf32>
    %38 = arith.mulf %33, %37 : vector<16x16xf32>
    %39 = arith.truncf %38 : vector<16x16xf32> to vector<16x16xbf16>
    %40 = vector.extract_strided_slice %5 {offsets = [0, 32], sizes = [16, 32], strides = [1, 1]} : vector<16x128xbf16> to vector<16x32xbf16>
    %cst_17 = arith.constant dense<0.000000e+00> : vector<16x32xf32>
    %41 = tpu.matmul %39, %40, %cst_17 {dimension_numbers = #tpu.dot_dimension_numbers<[1], [0], [0], [1], [0, 0, 1, 1], [], []>} : vector<16x16xbf16>, vector<16x32xbf16>, vector<16x32xf32> -> vector<16x32xf32>
    %42 = arith.truncf %41 : vector<16x32xf32> to vector<16x32xbf16>
    %c0_18 = arith.constant 0 : index
    %c0_19 = arith.constant 0 : index
    %c32 = arith.constant 32 : index
    %43 = vector.load %arg6[%c0_18, %c0_19, %c32] : memref<1x16x128xbf16, #tpu.memory_space<vmem>>, vector<1x16x32xbf16>
    %44 = vector.shape_cast %43 : vector<1x16x32xbf16> to vector<16x32xbf16>
    %45 = vector.shape_cast %42 : vector<16x32xbf16> to vector<1x16x32xbf16>
    tpu.vector_store %arg6[%c0_18, %c0_19, %c32], %45 {strides = array<i32>} : memref<1x16x128xbf16, #tpu.memory_space<vmem>>, vector<1x16x32xbf16>,
    %46 = vector.extract_strided_slice %1 {offsets = [0, 64], sizes = [16, 32], strides = [1, 1]} : vector<16x128xbf16> to vector<16x32xbf16>
    %47 = vector.extract_strided_slice %3 {offsets = [0, 64], sizes = [16, 32], strides = [1, 1]} : vector<16x128xbf16> to vector<16x32xbf16>
    %cst_20 = arith.constant dense<0.000000e+00> : vector<16x16xf32>
    %48 = tpu.matmul %46, %47, %cst_20 {dimension_numbers = #tpu.dot_dimension_numbers<[1], [1], [0], [0], [0, 0, 1, 0], [], []>} : vector<16x32xbf16>, vector<16x32xbf16>, vector<16x16xf32> -> vector<16x16xf32>
    %cst_21 = arith.constant dense<0xFF800000> : vector<16xf32>
    %49 = vector.multi_reduction <maximumf>, %48, %cst_21 [1] : vector<16x16xf32> to vector<16xf32>
    %50 = vector.shape_cast %49 : vector<16xf32> to vector<16x1xf32>
    %51 = vector.broadcast %50 : vector<16x1xf32> to vector<16x16xf32>
    %52 = arith.subf %48, %51 : vector<16x16xf32>
    %53 = math.exp %52 : vector<16x16xf32>
    %cst_22 = arith.constant dense<0.000000e+00> : vector<16xf32>
    %54 = vector.multi_reduction <add>, %53, %cst_22 [1] : vector<16x16xf32> to vector<16xf32>
    %55 = vector.shape_cast %54 : vector<16xf32> to vector<16x1xf32>
    %56 = tpu.reciprocal %55 {approx = true} : vector<16x1xf32> -> vector<16x1xf32>
    %57 = vector.broadcast %56 : vector<16x1xf32> to vector<16x16xf32>
    %58 = arith.mulf %53, %57 : vector<16x16xf32>
    %59 = arith.truncf %58 : vector<16x16xf32> to vector<16x16xbf16>
    %60 = vector.extract_strided_slice %5 {offsets = [0, 64], sizes = [16, 32], strides = [1, 1]} : vector<16x128xbf16> to vector<16x32xbf16>
    %cst_23 = arith.constant dense<0.000000e+00> : vector<16x32xf32>
    %61 = tpu.matmul %59, %60, %cst_23 {dimension_numbers = #tpu.dot_dimension_numbers<[1], [0], [0], [1], [0, 0, 1, 1], [], []>} : vector<16x16xbf16>, vector<16x32xbf16>, vector<16x32xf32> -> vector<16x32xf32>
    %62 = arith.truncf %61 : vector<16x32xf32> to vector<16x32xbf16>
    %c0_24 = arith.constant 0 : index
    %c0_25 = arith.constant 0 : index
    %c64 = arith.constant 64 : index
    %63 = vector.load %arg6[%c0_24, %c0_25, %c64] : memref<1x16x128xbf16, #tpu.memory_space<vmem>>, vector<1x16x32xbf16>
    %64 = vector.shape_cast %63 : vector<1x16x32xbf16> to vector<16x32xbf16>
    %65 = vector.shape_cast %62 : vector<16x32xbf16> to vector<1x16x32xbf16>
    tpu.vector_store %arg6[%c0_24, %c0_25, %c64], %65 {strides = array<i32>} : memref<1x16x128xbf16, #tpu.memory_space<vmem>>, vector<1x16x32xbf16>,
    %66 = vector.extract_strided_slice %1 {offsets = [0, 96], sizes = [16, 32], strides = [1, 1]} : vector<16x128xbf16> to vector<16x32xbf16>
    %67 = vector.extract_strided_slice %3 {offsets = [0, 96], sizes = [16, 32], strides = [1, 1]} : vector<16x128xbf16> to vector<16x32xbf16>
    %cst_26 = arith.constant dense<0.000000e+00> : vector<16x16xf32>
    %68 = tpu.matmul %66, %67, %cst_26 {dimension_numbers = #tpu.dot_dimension_numbers<[1], [1], [0], [0], [0, 0, 1, 0], [], []>} : vector<16x32xbf16>, vector<16x32xbf16>, vector<16x16xf32> -> vector<16x16xf32>
    %cst_27 = arith.constant dense<0xFF800000> : vector<16xf32>
    %69 = vector.multi_reduction <maximumf>, %68, %cst_27 [1] : vector<16x16xf32> to vector<16xf32>
    %70 = vector.shape_cast %69 : vector<16xf32> to vector<16x1xf32>
    %71 = vector.broadcast %70 : vector<16x1xf32> to vector<16x16xf32>
    %72 = arith.subf %68, %71 : vector<16x16xf32>
    %73 = math.exp %72 : vector<16x16xf32>
    %cst_28 = arith.constant dense<0.000000e+00> : vector<16xf32>
    %74 = vector.multi_reduction <add>, %73, %cst_28 [1] : vector<16x16xf32> to vector<16xf32>
    %75 = vector.shape_cast %74 : vector<16xf32> to vector<16x1xf32>
    %76 = tpu.reciprocal %75 {approx = true} : vector<16x1xf32> -> vector<16x1xf32>
    %77 = vector.broadcast %76 : vector<16x1xf32> to vector<16x16xf32>
    %78 = arith.mulf %73, %77 : vector<16x16xf32>
    %79 = arith.truncf %78 : vector<16x16xf32> to vector<16x16xbf16>
    %80 = vector.extract_strided_slice %5 {offsets = [0, 96], sizes = [16, 32], strides = [1, 1]} : vector<16x128xbf16> to vector<16x32xbf16>
    %cst_29 = arith.constant dense<0.000000e+00> : vector<16x32xf32>
    %81 = tpu.matmul %79, %80, %cst_29 {dimension_numbers = #tpu.dot_dimension_numbers<[1], [0], [0], [1], [0, 0, 1, 1], [], []>} : vector<16x16xbf16>, vector<16x32xbf16>, vector<16x32xf32> -> vector<16x32xf32>
    %82 = arith.truncf %81 : vector<16x32xf32> to vector<16x32xbf16>
    %c0_30 = arith.constant 0 : index
    %c0_31 = arith.constant 0 : index
    %c96 = arith.constant 96 : index
    %83 = vector.load %arg6[%c0_30, %c0_31, %c96] : memref<1x16x128xbf16, #tpu.memory_space<vmem>>, vector<1x16x32xbf16>
    %84 = vector.shape_cast %83 : vector<1x16x32xbf16> to vector<16x32xbf16>
    %85 = vector.shape_cast %82 : vector<16x32xbf16> to vector<1x16x32xbf16>
    tpu.vector_store %arg6[%c0_30, %c0_31, %c96], %85 {strides = array<i32>} : memref<1x16x128xbf16, #tpu.memory_space<vmem>>, vector<1x16x32xbf16>,
    return
  }
  func.func @transform_0(%arg0: i32, %arg1: i32, %arg2: i32) -> (i32, i32, i32) {
    %c0_i32 = arith.constant 0 : i32
    return %arg0, %arg2, %arg1 : i32, i32, i32
  }
  func.func @transform_1(%arg0: i32, %arg1: i32, %arg2: i32) -> (i32, i32, i32) {
    %c1_i32 = arith.constant 1 : i32
    %0 = arith.addi %c1_i32, %arg1 : i32
    %c0_i32 = arith.constant 0 : i32
    %c0_i32_0 = arith.constant 0 : i32
    return %arg0, %c0_i32, %0 : i32, i32, i32
  }
  func.func @transform_2(%arg0: i32, %arg1: i32, %arg2: i32) -> (i32, i32, i32) {
    %c2_i32 = arith.constant 2 : i32
    %0 = arith.addi %c2_i32, %arg1 : i32
    %c0_i32 = arith.constant 0 : i32
    %c0_i32_0 = arith.constant 0 : i32
    return %arg0, %c0_i32, %0 : i32, i32, i32
  }
  func.func @transform_3(%arg0: i32, %arg1: i32, %arg2: i32) -> (i32, i32, i32) {
    %c0_i32 = arith.constant 0 : i32
    return %arg0, %arg2, %arg1 : i32, i32, i32
  }
}

module attributes {stable_mosaic.version = 11 : i64} {
  func.func @proj_mlp_kernel(%arg0: i32, %arg1: i32, %arg2: memref<1x16x128xf32, #tpu.memory_space<vmem>>, %arg3: memref<1x16x128xbf16, #tpu.memory_space<vmem>>, %arg4: memref<128x128xbf16, #tpu.memory_space<vmem>>, %arg5: memref<1x128xf32, #tpu.memory_space<vmem>>, %arg6: memref<1x128xf32, #tpu.memory_space<vmem>>, %arg7: memref<1x128xf32, #tpu.memory_space<vmem>>, %arg8: memref<1x128xf32, #tpu.memory_space<vmem>>, %arg9: memref<128x512xbf16, #tpu.memory_space<vmem>>, %arg10: memref<1x512xf32, #tpu.memory_space<vmem>>, %arg11: memref<512x128xbf16, #tpu.memory_space<vmem>>, %arg12: memref<1x128xf32, #tpu.memory_space<vmem>>, %arg13: memref<1x128xf32, #tpu.memory_space<vmem>>, %arg14: memref<1x16x128xf32, #tpu.memory_space<vmem>>) attributes {dimension_semantics = [#tpu.dimension_semantics<parallel>, #tpu.dimension_semantics<parallel>], iteration_bounds = array<i64: 2, 1>, scalar_prefetch = 0 : i64, scratch_operands = 0 : i64, tpu.core_type = #tpu.core_type<tc>, window_params = [{transform_indices = @transform_0, window_bounds = array<i64: 1, 16, 128>}, {transform_indices = @transform_1, window_bounds = array<i64: 1, 16, 128>}, {pipeline_mode = #tpu.pipeline_mode<synchronous>, transform_indices = @transform_2, window_bounds = array<i64: 128, 128>}, {pipeline_mode = #tpu.pipeline_mode<synchronous>, transform_indices = @transform_3, window_bounds = array<i64: 1, 128>}, {pipeline_mode = #tpu.pipeline_mode<synchronous>, transform_indices = @transform_4, window_bounds = array<i64: 1, 128>}, {pipeline_mode = #tpu.pipeline_mode<synchronous>, transform_indices = @transform_5, window_bounds = array<i64: 1, 128>}, {pipeline_mode = #tpu.pipeline_mode<synchronous>, transform_indices = @transform_6, window_bounds = array<i64: 1, 128>}, {pipeline_mode = #tpu.pipeline_mode<synchronous>, transform_indices = @transform_7, window_bounds = array<i64: 128, 512>}, {pipeline_mode = #tpu.pipeline_mode<synchronous>, transform_indices = @transform_8, window_bounds = array<i64: 1, 512>}, {pipeline_mode = #tpu.pipeline_mode<synchronous>, transform_indices = @transform_9, window_bounds = array<i64: 512, 128>}, {pipeline_mode = #tpu.pipeline_mode<synchronous>, transform_indices = @transform_10, window_bounds = array<i64: 1, 128>}, {pipeline_mode = #tpu.pipeline_mode<synchronous>, transform_indices = @transform_11, window_bounds = array<i64: 1, 128>}, {transform_indices = @transform_12, window_bounds = array<i64: 1, 16, 128>}]} {
    %c0 = arith.constant 0 : index
    %c0_0 = arith.constant 0 : index
    %c0_1 = arith.constant 0 : index
    %0 = vector.load %arg2[%c0, %c0_0, %c0_1] : memref<1x16x128xf32, #tpu.memory_space<vmem>>, vector<1x16x128xf32>
    %1 = vector.shape_cast %0 : vector<1x16x128xf32> to vector<16x128xf32>
    %c0_2 = arith.constant 0 : index
    %c0_3 = arith.constant 0 : index
    %c0_4 = arith.constant 0 : index
    %2 = vector.load %arg3[%c0_2, %c0_3, %c0_4] : memref<1x16x128xbf16, #tpu.memory_space<vmem>>, vector<1x16x128xbf16>
    %3 = vector.shape_cast %2 : vector<1x16x128xbf16> to vector<16x128xbf16>
    %c0_5 = arith.constant 0 : index
    %c0_6 = arith.constant 0 : index
    %4 = vector.load %arg4[%c0_5, %c0_6] : memref<128x128xbf16, #tpu.memory_space<vmem>>, vector<128x128xbf16>
    %cst = arith.constant dense<0.000000e+00> : vector<16x128xf32>
    %5 = tpu.matmul %3, %4, %cst {dimension_numbers = #tpu.dot_dimension_numbers<[1], [0], [0], [1], [0, 0, 1, 1], [], []>} : vector<16x128xbf16>, vector<128x128xbf16>, vector<16x128xf32> -> vector<16x128xf32>
    %c0_7 = arith.constant 0 : index
    %c0_8 = arith.constant 0 : index
    %6 = vector.load %arg5[%c0_7, %c0_8] : memref<1x128xf32, #tpu.memory_space<vmem>>, vector<1x128xf32>
    %7 = vector.broadcast %6 : vector<1x128xf32> to vector<16x128xf32>
    %8 = arith.addf %5, %7 : vector<16x128xf32>
    %c0_9 = arith.constant 0 : index
    %c0_10 = arith.constant 0 : index
    %9 = vector.load %arg6[%c0_9, %c0_10] : memref<1x128xf32, #tpu.memory_space<vmem>>, vector<1x128xf32>
    %10 = vector.broadcast %9 : vector<1x128xf32> to vector<16x128xf32>
    %11 = arith.mulf %8, %10 : vector<16x128xf32>
    %12 = arith.addf %1, %11 : vector<16x128xf32>
    %c0_11 = arith.constant 0 : index
    %c0_12 = arith.constant 0 : index
    %13 = vector.load %arg7[%c0_11, %c0_12] : memref<1x128xf32, #tpu.memory_space<vmem>>, vector<1x128xf32>
    %c0_13 = arith.constant 0 : index
    %c0_14 = arith.constant 0 : index
    %14 = vector.load %arg8[%c0_13, %c0_14] : memref<1x128xf32, #tpu.memory_space<vmem>>, vector<1x128xf32>
    %cst_15 = arith.constant dense<0.000000e+00> : vector<16xf32>
    %15 = vector.multi_reduction <add>, %12, %cst_15 [1] : vector<16x128xf32> to vector<16xf32>
    %16 = vector.shape_cast %15 : vector<16xf32> to vector<16x1xf32>
    %cst_16 = arith.constant 1.280000e+02 : f32
    %17 = vector.broadcast %cst_16 : f32 to vector<16x1xf32>
    %18 = arith.divf %16, %17 : vector<16x1xf32>
    %19 = vector.broadcast %18 : vector<16x1xf32> to vector<16x128xf32>
    %20 = arith.subf %12, %19 : vector<16x128xf32>
    %21 = arith.mulf %20, %20 : vector<16x128xf32>
    %cst_17 = arith.constant dense<0.000000e+00> : vector<16xf32>
    %22 = vector.multi_reduction <add>, %21, %cst_17 [1] : vector<16x128xf32> to vector<16xf32>
    %23 = vector.shape_cast %22 : vector<16xf32> to vector<16x1xf32>
    %cst_18 = arith.constant 1.280000e+02 : f32
    %24 = vector.broadcast %cst_18 : f32 to vector<16x1xf32>
    %25 = arith.divf %23, %24 : vector<16x1xf32>
    %cst_19 = arith.constant 9.99999974E-6 : f32
    %26 = vector.broadcast %cst_19 : f32 to vector<16x1xf32>
    %27 = arith.addf %25, %26 : vector<16x1xf32>
    %28 = math.rsqrt %27 : vector<16x1xf32>
    %29 = vector.broadcast %28 : vector<16x1xf32> to vector<16x128xf32>
    %30 = arith.mulf %20, %29 : vector<16x128xf32>
    %31 = vector.broadcast %13 : vector<1x128xf32> to vector<16x128xf32>
    %32 = arith.mulf %30, %31 : vector<16x128xf32>
    %33 = vector.broadcast %14 : vector<1x128xf32> to vector<16x128xf32>
    %34 = arith.addf %32, %33 : vector<16x128xf32>
    %35 = arith.truncf %34 : vector<16x128xf32> to vector<16x128xbf16>
    %c0_20 = arith.constant 0 : index
    %c0_21 = arith.constant 0 : index
    %36 = vector.load %arg9[%c0_20, %c0_21] : memref<128x512xbf16, #tpu.memory_space<vmem>>, vector<128x512xbf16>
    %cst_22 = arith.constant dense<0.000000e+00> : vector<16x512xf32>
    %37 = tpu.matmul %35, %36, %cst_22 {dimension_numbers = #tpu.dot_dimension_numbers<[1], [0], [0], [1], [0, 0, 1, 1], [], []>} : vector<16x128xbf16>, vector<128x512xbf16>, vector<16x512xf32> -> vector<16x512xf32>
    %c0_23 = arith.constant 0 : index
    %c0_24 = arith.constant 0 : index
    %38 = vector.load %arg10[%c0_23, %c0_24] : memref<1x512xf32, #tpu.memory_space<vmem>>, vector<1x512xf32>
    %39 = vector.broadcast %38 : vector<1x512xf32> to vector<16x512xf32>
    %40 = arith.addf %37, %39 : vector<16x512xf32>
    %cst_25 = arith.constant 5.000000e-01 : f32
    %41 = vector.broadcast %cst_25 : f32 to vector<16x512xf32>
    %42 = arith.mulf %41, %40 : vector<16x512xf32>
    %43 = arith.mulf %40, %40 : vector<16x512xf32>
    %44 = arith.mulf %43, %40 : vector<16x512xf32>
    %cst_26 = arith.constant 4.471500e-02 : f32
    %45 = vector.broadcast %cst_26 : f32 to vector<16x512xf32>
    %46 = arith.mulf %45, %44 : vector<16x512xf32>
    %47 = arith.addf %40, %46 : vector<16x512xf32>
    %cst_27 = arith.constant 0.797884583 : f32
    %48 = vector.broadcast %cst_27 : f32 to vector<16x512xf32>
    %49 = arith.mulf %48, %47 : vector<16x512xf32>
    %50 = math.tanh %49 : vector<16x512xf32>
    %cst_28 = arith.constant 1.000000e+00 : f32
    %51 = vector.broadcast %cst_28 : f32 to vector<16x512xf32>
    %52 = arith.addf %51, %50 : vector<16x512xf32>
    %53 = arith.mulf %42, %52 : vector<16x512xf32>
    %54 = arith.truncf %53 : vector<16x512xf32> to vector<16x512xbf16>
    %c0_29 = arith.constant 0 : index
    %c0_30 = arith.constant 0 : index
    %55 = vector.load %arg11[%c0_29, %c0_30] : memref<512x128xbf16, #tpu.memory_space<vmem>>, vector<512x128xbf16>
    %cst_31 = arith.constant dense<0.000000e+00> : vector<16x128xf32>
    %56 = tpu.matmul %54, %55, %cst_31 {dimension_numbers = #tpu.dot_dimension_numbers<[1], [0], [0], [1], [0, 0, 1, 1], [], []>} : vector<16x512xbf16>, vector<512x128xbf16>, vector<16x128xf32> -> vector<16x128xf32>
    %c0_32 = arith.constant 0 : index
    %c0_33 = arith.constant 0 : index
    %57 = vector.load %arg12[%c0_32, %c0_33] : memref<1x128xf32, #tpu.memory_space<vmem>>, vector<1x128xf32>
    %58 = vector.broadcast %57 : vector<1x128xf32> to vector<16x128xf32>
    %59 = arith.addf %56, %58 : vector<16x128xf32>
    %c0_34 = arith.constant 0 : index
    %c0_35 = arith.constant 0 : index
    %60 = vector.load %arg13[%c0_34, %c0_35] : memref<1x128xf32, #tpu.memory_space<vmem>>, vector<1x128xf32>
    %61 = vector.broadcast %60 : vector<1x128xf32> to vector<16x128xf32>
    %62 = arith.mulf %59, %61 : vector<16x128xf32>
    %63 = arith.addf %12, %62 : vector<16x128xf32>
    %c0_36 = arith.constant 0 : index
    %c0_37 = arith.constant 0 : index
    %c0_38 = arith.constant 0 : index
    %64 = vector.load %arg14[%c0_36, %c0_37, %c0_38] : memref<1x16x128xf32, #tpu.memory_space<vmem>>, vector<1x16x128xf32>
    %65 = vector.shape_cast %64 : vector<1x16x128xf32> to vector<16x128xf32>
    %66 = vector.shape_cast %63 : vector<16x128xf32> to vector<1x16x128xf32>
    tpu.vector_store %arg14[%c0_36, %c0_37, %c0_38], %66 {strides = array<i32>} : memref<1x16x128xf32, #tpu.memory_space<vmem>>, vector<1x16x128xf32>,
    return
  }
  func.func @transform_0(%arg0: i32, %arg1: i32) -> (i32, i32, i32) {
    %c0_i32 = arith.constant 0 : i32
    %c0_i32_0 = arith.constant 0 : i32
    return %arg0, %arg1, %c0_i32 : i32, i32, i32
  }
  func.func @transform_1(%arg0: i32, %arg1: i32) -> (i32, i32, i32) {
    %c0_i32 = arith.constant 0 : i32
    %c0_i32_0 = arith.constant 0 : i32
    return %arg0, %arg1, %c0_i32 : i32, i32, i32
  }
  func.func @transform_2(%arg0: i32, %arg1: i32) -> (i32, i32) {
    %c0_i32 = arith.constant 0 : i32
    %c0_i32_0 = arith.constant 0 : i32
    %c0_i32_1 = arith.constant 0 : i32
    return %c0_i32, %c0_i32_0 : i32, i32
  }
  func.func @transform_3(%arg0: i32, %arg1: i32) -> (i32, i32) {
    %c0_i32 = arith.constant 0 : i32
    %c0_i32_0 = arith.constant 0 : i32
    %c0_i32_1 = arith.constant 0 : i32
    return %c0_i32, %c0_i32_0 : i32, i32
  }
  func.func @transform_4(%arg0: i32, %arg1: i32) -> (i32, i32) {
    %c0_i32 = arith.constant 0 : i32
    %c0_i32_0 = arith.constant 0 : i32
    %c0_i32_1 = arith.constant 0 : i32
    return %c0_i32, %c0_i32_0 : i32, i32
  }
  func.func @transform_5(%arg0: i32, %arg1: i32) -> (i32, i32) {
    %c0_i32 = arith.constant 0 : i32
    %c0_i32_0 = arith.constant 0 : i32
    %c0_i32_1 = arith.constant 0 : i32
    return %c0_i32, %c0_i32_0 : i32, i32
  }
  func.func @transform_6(%arg0: i32, %arg1: i32) -> (i32, i32) {
    %c0_i32 = arith.constant 0 : i32
    %c0_i32_0 = arith.constant 0 : i32
    %c0_i32_1 = arith.constant 0 : i32
    return %c0_i32, %c0_i32_0 : i32, i32
  }
  func.func @transform_7(%arg0: i32, %arg1: i32) -> (i32, i32) {
    %c0_i32 = arith.constant 0 : i32
    %c0_i32_0 = arith.constant 0 : i32
    %c0_i32_1 = arith.constant 0 : i32
    return %c0_i32, %c0_i32_0 : i32, i32
  }
  func.func @transform_8(%arg0: i32, %arg1: i32) -> (i32, i32) {
    %c0_i32 = arith.constant 0 : i32
    %c0_i32_0 = arith.constant 0 : i32
    %c0_i32_1 = arith.constant 0 : i32
    return %c0_i32, %c0_i32_0 : i32, i32
  }
  func.func @transform_9(%arg0: i32, %arg1: i32) -> (i32, i32) {
    %c0_i32 = arith.constant 0 : i32
    %c0_i32_0 = arith.constant 0 : i32
    %c0_i32_1 = arith.constant 0 : i32
    return %c0_i32, %c0_i32_0 : i32, i32
  }
  func.func @transform_10(%arg0: i32, %arg1: i32) -> (i32, i32) {
    %c0_i32 = arith.constant 0 : i32
    %c0_i32_0 = arith.constant 0 : i32
    %c0_i32_1 = arith.constant 0 : i32
    return %c0_i32, %c0_i32_0 : i32, i32
  }
  func.func @transform_11(%arg0: i32, %arg1: i32) -> (i32, i32) {
    %c0_i32 = arith.constant 0 : i32
    %c0_i32_0 = arith.constant 0 : i32
    %c0_i32_1 = arith.constant 0 : i32
    return %c0_i32, %c0_i32_0 : i32, i32
  }
  func.func @transform_12(%arg0: i32, %arg1: i32) -> (i32, i32, i32) {
    %c0_i32 = arith.constant 0 : i32
    %c0_i32_0 = arith.constant 0 : i32
    return %arg0, %arg1, %c0_i32 : i32, i32, i32
  }
}

</mosaic_0001>

<llo_original>
// kernel: block_forward.3
$region0: #{block_forward.3}
  #allocation0 [shape = 'u32[]', space=smem, size = 0x4, offset = 0x4, fixed_abs, tag = 'smem constant byte address 0x4 - core index']
  #allocation1 [shape = 'u32[144,128]{1,0:T(1,128)}', space=vmem, size = 0x12000, scoped, tag = 'internal scratch']
  %s0 = inlined_call_operand.vmem [shape: f32[2,16,128], index: 0, kind: input, shape index: {}]
  %s1 = inlined_call_operand.hbm [shape: f32[1,128], index: 1, kind: input, shape index: {}]
  %s2 = inlined_call_operand.hbm [shape: f32[1,128], index: 2, kind: input, shape index: {}]
  %s3 = inlined_call_operand.hbm [shape: bf16[128,384], index: 3, kind: input, shape index: {}]
  %s4 = inlined_call_operand.vmem [shape: bf16[2,16,384], index: 4, kind: output, shape index: {}]
  %s5 = sld [smem:[#allocation0]]
  $region61: #{block_forward.3} parent=0
    _
  %s7 = ssub.s32 1, %s5
  %s8 = scalar_select 0, %s7, %s5
  $region1: #{block_forward.3} parent=0
    #allocation2 [shape = 'u8[512]{0}', space=vmem, size = 0x400, scoped, tag = 'input window, operand 1, single buffered']
    #allocation3 [shape = 's32[2]{0}', space=sflag, size = 0x8, scoped, tag = 'scoped memory for block_forward.3']
    #allocation4 [shape = 'u8[512]{0}', space=vmem, size = 0x400, scoped, tag = 'input window, operand 2, single buffered']
    #allocation5 [shape = 's32[1]{0}', space=sflag, size = 0x4, scoped, tag = 'scoped memory for block_forward.3']
    #allocation6 [shape = 'u8[98304]{0}', space=vmem, size = 0x18000, scoped, tag = 'input window, operand 3, single buffered']
    %9 = vsyncpa [#allocation3], 0
    %10 = vsyncpa [#allocation5], 0
    loop: start=0, step=1, limit=4
    $region2: #{block_forward.3} parent=1 // loop_pre_header
      _
    $region3: #{block_forward.3} parent=1 // loop_header
      %s12 = sphi 0, %s16
      %p13 = scmp.ge.s32.totalorder %s12, 4
      %s19 = sphi 0, %s31
      %s20 = sphi 0, %s27
      %s21 = sphi 0, %s19
      %s22 = sphi 0, %s20
      %s23 = sphi 0, %s21
      %s24 = sphi 0, %s22
      %s36 = sphi 0, %s38
      %s39 = sphi 0, %s36
      %s40 = sphi 0, %s39
      %s56 = sphi 0, %s40
      %s60 = sphi 0, %s60
      %s62 = sphi 0, %s60
      %s63 = sphi 0, %s62
      %s77 = sphi 0, %s63
      %s81 = sphi 0, %s81
      %s83 = sphi 0, %s81
      %s84 = sphi 0, %s83
      %s98 = sphi 0, %s84
      %s102 = sphi 0, %s102
      %s104 = sphi 0, %s102
      %s105 = sphi 0, %s104
      %s119 = sphi 0, %s105
      %s127 = sphi 0, %s129
      %s130 = sphi 0, %s127
      %s131 = sphi 0, %s130
      %s147 = sphi 0, %s131
    $region4: #{block_forward.3} parent=1 // loop_header_branch
      %15 = sbr.rel (%p13) target = $region8
    $region5: #{block_forward.3} parent=1 // loop_body
      %s17 = ssub.s32 %s12, 1
      %s18 = ssub.s32 %s12, 2
      %s25 = sadd.s32 1, %s20
      %p26 = scmp.ge.s32.totalorder %s25, 1
      %s27 = scalar_select %p26, 0, %s25
      %s28 = sadd.s32 1, %s19
      %s29 = scalar_select %p26, %s28, %s19
      %p30 = scmp.ge.s32.totalorder %s29, 2
      %s31 = scalar_select %p30, 0, %s29
      %s32 = ssub.s32 %s19, %s31
      %s33 = ssub.s32 %s20, %s27
      %s34 = sor.u32 %s32, %s33
      %p35 = scmp.eq.s32.totalorder %s34, 0
      %s37 = sadd.s32 %s36, 1
      %s38 = scalar_select %p35, %s36, %s37
      %p41 = pneg %p35
      %p42 = scmp.eq.s32.totalorder %s12, 1
      %p43 = por %p41, %p42
      %p44 = scmp.ne.s32.totalorder %s36, %s39
      %p45 = scmp.eq.s32.totalorder %s12, 0
      %p46 = por %p44, %p45
      %p47 = scmp.ne.s32.totalorder %s36, %s39
      %p48 = scmp.eq.s32.totalorder %s17, 1
      %p49 = por %p47, %p48
      %p50 = scmp.ne.s32.totalorder %s39, %s40
      %p51 = scmp.eq.s32.totalorder %s17, 0
      %p52 = por %p50, %p51
      %p53 = scmp.ne.s32.totalorder %s39, %s40
      %p54 = scmp.eq.s32.totalorder %s18, 1
      %p55 = por %p53, %p54
      %p57 = scmp.ne.s32.totalorder %s40, %s56
      %p58 = scmp.eq.s32.totalorder %s18, 0
      %p59 = por %p57, %p58
      %s61 = sadd.s32 %s60, 1
      %p64 = scmp.eq.s32.totalorder %s12, 1
      %p65 = scmp.ne.s32.totalorder %s60, %s62
      %p66 = scmp.eq.s32.totalorder %s12, 0
      %p67 = por %p65, %p66
      %p68 = scmp.ne.s32.totalorder %s60, %s62
      %p69 = scmp.eq.s32.totalorder %s17, 1
      %p70 = por %p68, %p69
      %p71 = scmp.ne.s32.totalorder %s62, %s63
      %p72 = scmp.eq.s32.totalorder %s17, 0
      %p73 = por %p71, %p72
      %p74 = scmp.ne.s32.totalorder %s62, %s63
      %p75 = scmp.eq.s32.totalorder %s18, 1
      %p76 = por %p74, %p75
      %p78 = scmp.ne.s32.totalorder %s63, %s77
      %p79 = scmp.eq.s32.totalorder %s18, 0
      %p80 = por %p78, %p79
      %s82 = sadd.s32 %s81, 1
      %p85 = scmp.eq.s32.totalorder %s12, 1
      %p86 = scmp.ne.s32.totalorder %s81, %s83
      %p87 = scmp.eq.s32.totalorder %s12, 0
      %p88 = por %p86, %p87
      %p89 = scmp.ne.s32.totalorder %s81, %s83
      %p90 = scmp.eq.s32.totalorder %s17, 1
      %p91 = por %p89, %p90
      %p92 = scmp.ne.s32.totalorder %s83, %s84
      %p93 = scmp.eq.s32.totalorder %s17, 0
      %p94 = por %p92, %p93
      %p95 = scmp.ne.s32.totalorder %s83, %s84
      %p96 = scmp.eq.s32.totalorder %s18, 1
      %p97 = por %p95, %p96
      %p99 = scmp.ne.s32.totalorder %s84, %s98
      %p100 = scmp.eq.s32.totalorder %s18, 0
      %p101 = por %p99, %p100
      %s103 = sadd.s32 %s102, 1
      %p106 = scmp.eq.s32.totalorder %s12, 1
      %p107 = scmp.ne.s32.totalorder %s102, %s104
      %p108 = scmp.eq.s32.totalorder %s12, 0
      %p109 = por %p107, %p108
      %p110 = scmp.ne.s32.totalorder %s102, %s104
      %p111 = scmp.eq.s32.totalorder %s17, 1
      %p112 = por %p110, %p111
      %p113 = scmp.ne.s32.totalorder %s104, %s105
      %p114 = scmp.eq.s32.totalorder %s17, 0
      %p115 = por %p113, %p114
      %p116 = scmp.ne.s32.totalorder %s104, %s105
      %p117 = scmp.eq.s32.totalorder %s18, 1
      %p118 = por %p116, %p117
      %p120 = scmp.ne.s32.totalorder %s105, %s119
      %p121 = scmp.eq.s32.totalorder %s18, 0
      %p122 = por %p120, %p121
      %s123 = ssub.s32 %s19, %s31
      %s124 = ssub.s32 %s20, %s27
      %s125 = sor.u32 %s123, %s124
      %p126 = scmp.eq.s32.totalorder %s125, 0
      %s128 = sadd.s32 %s127, 1
      %s129 = scalar_select %p126, %s127, %s128
      %p132 = pneg %p126
      %p133 = scmp.eq.s32.totalorder %s12, 1
      %p134 = por %p132, %p133
      %p135 = scmp.ne.s32.totalorder %s127, %s130
      %p136 = scmp.eq.s32.totalorder %s12, 0
      %p137 = por %p135, %p136
      %p138 = scmp.ne.s32.totalorder %s127, %s130
      %p139 = scmp.eq.s32.totalorder %s17, 1
      %p140 = por %p138, %p139
      %p141 = scmp.ne.s32.totalorder %s130, %s131
      %p142 = scmp.eq.s32.totalorder %s17, 0
      %p143 = por %p141, %p142
      %p144 = scmp.ne.s32.totalorder %s130, %s131
      %p145 = scmp.eq.s32.totalorder %s18, 1
      %p146 = por %p144, %p145
      %p148 = scmp.ne.s32.totalorder %s131, %s147
      %p149 = scmp.eq.s32.totalorder %s18, 0
      %p150 = por %p148, %p149
      %p151 = scmp.le.s32.totalorder 1, %s12
      %p152 = scmp.lt.s32.totalorder %s12, 3
      %p153 = pnand %p151, %p152
      %p154 = pneg %p153
      // Predicated region
      $region9: #{block_forward.3} parent=5 // pred_check
        _
      $region10: #{block_forward.3} parent=5 // pred_check_branch
        %156 = sbr.rel (%p153) target = $region12
      $region11: #{block_forward.3} parent=5 // pred_region
        %s157 = ssub.s32 %s12, 1
        // Predicated region
        $region13: #{block_forward.3} parent=11 // pred_check
          %p158 = pneg %p73
        $region14: #{block_forward.3} parent=11 // pred_check_branch
          %160 = sbr.rel (%p158) target = $region16
        $region15: #{block_forward.3} parent=11 // pred_region
          %s162 = ssub.s32 16, 16
          %163 = vsyncadd [#allocation3], %s162
          %s165 = sshll.u32 [#allocation2], 4
          %s166 = int_to_ptr.vmem [resolvable:$true] %s165
          %168 = dma.hbm_to_vmem [thread:$0]  %s1, 16, %s166, [#allocation3]
        $region16: #{block_forward.3} parent=11 // pred_fallthru
          _
        // Predicated region
        $region17: #{block_forward.3} parent=11 // pred_check
          %p169 = pneg %p94
        $region18: #{block_forward.3} parent=11 // pred_check_branch
          %171 = sbr.rel (%p169) target = $region20
        $region19: #{block_forward.3} parent=11 // pred_region
          %s173 = ssub.s32 16, 16
          %174 = vsyncadd [#allocation5], %s173
          %s176 = sshll.u32 [#allocation4], 4
          %s177 = int_to_ptr.vmem [resolvable:$true] %s176
          %179 = dma.hbm_to_vmem [thread:$0]  %s2, 16, %s177, [#allocation5]
        $region20: #{block_forward.3} parent=11 // pred_fallthru
          _
        // Predicated region
        $region21: #{block_forward.3} parent=11 // pred_check
          %p180 = pneg %p115
        $region22: #{block_forward.3} parent=11 // pred_check_branch
          %182 = sbr.rel (%p180) target = $region24
        $region23: #{block_forward.3} parent=11 // pred_region
          %s184 = ssub.s32 3072, 3072
          %185 = vsyncadd [#allocation5], %s184
          %s186 = sshll.u32 [#allocation6], 4
          %s187 = int_to_ptr.vmem [resolvable:$true] %s186
          %192 = dma.hbm_to_vmem [thread:$0]  %s3, 3072, %s187, [#allocation5], 192, 192, 12
        $region24: #{block_forward.3} parent=11 // pred_fallthru
          _
      $region12: #{block_forward.3} parent=5 // pred_fallthru
        _
      %p193 = scmp.lt.s32.totalorder %s12, 2
      // Predicated region
      $region25: #{block_forward.3} parent=5 // pred_check
        %p194 = pneg %p193
      $region26: #{block_forward.3} parent=5 // pred_check_branch
        %196 = sbr.rel (%p194) target = $region28
      $region27: #{block_forward.3} parent=5 // pred_region
        // Predicated region
        $region29: #{block_forward.3} parent=27 // pred_check
          %p197 = pneg %p46
        $region30: #{block_forward.3} parent=27 // pred_check_branch
          %199 = sbr.rel (%p197) target = $region32
        $region31: #{block_forward.3} parent=27 // pred_region
          %s200 = smul.u32 2, %s20
          %p201 = scmp.lt.s32.totalorder %s19, 1
          %s202 = scalar_select %p201, %s19, 1
          %p203 = scmp.lt.s32.totalorder %s200, 1
          %s204 = scalar_select %p203, %s200, 1
          %s205 = smul.addr %s202, 2
          %s206 = sadd.s32 %s204, %s205
          %s207 = smul.addr %s206, 8
          %s208 = scalar_lea.vmem %s0, %s207
          %s209 = smul.u32 2, %s20
        $region32: #{block_forward.3} parent=27 // pred_fallthru
          _
      $region28: #{block_forward.3} parent=5 // pred_fallthru
        _
      %p210 = scmp.le.s32.totalorder 1, %s12
      %p211 = scmp.lt.s32.totalorder %s12, 3
      %p212 = pnand %p210, %p211
      %p213 = pneg %p212
      // Predicated region
      $region33: #{block_forward.3} parent=5 // pred_check
        _
      $region34: #{block_forward.3} parent=5 // pred_check_branch
        %215 = sbr.rel (%p212) target = $region36
      $region35: #{block_forward.3} parent=5 // pred_region
        %s216 = ssub.s32 %s12, 1
        // Predicated region
        $region37: #{block_forward.3} parent=35 // pred_check
          %p217 = pneg %p73
        $region38: #{block_forward.3} parent=35 // pred_check_branch
          %219 = sbr.rel (%p217) target = $region40
        $region39: #{block_forward.3} parent=35 // pred_region
          %220 = dma.done [#allocation3], 16
        $region40: #{block_forward.3} parent=35 // pred_fallthru
          _
        // Predicated region
        $region41: #{block_forward.3} parent=35 // pred_check
          %p221 = pneg %p94
        $region42: #{block_forward.3} parent=35 // pred_check_branch
          %223 = sbr.rel (%p221) target = $region44
        $region43: #{block_forward.3} parent=35 // pred_region
          %224 = dma.done [#allocation5], 16
        $region44: #{block_forward.3} parent=35 // pred_fallthru
          _
        // Predicated region
        $region45: #{block_forward.3} parent=35 // pred_check
          %p225 = pneg %p115
        $region46: #{block_forward.3} parent=35 // pred_check_branch
          %227 = sbr.rel (%p225) target = $region48
        $region47: #{block_forward.3} parent=35 // pred_region
          %228 = dma.done [#allocation5], 3072
        $region48: #{block_forward.3} parent=35 // pred_fallthru
          _
        %s229 = smul.u32 2, %s22
        %p230 = scmp.lt.s32.totalorder %s21, 1
        %s231 = scalar_select %p230, %s21, 1
        %p232 = scmp.lt.s32.totalorder %s229, 1
        %s233 = scalar_select %p232, %s229, 1
        %s234 = smul.addr %s231, 2
        %s235 = sadd.s32 %s233, %s234
        %s236 = smul.addr %s235, 8
        %s237 = scalar_lea.vmem %s0, %s236
        %p238 = pneg %p52
        %p239 = pneg %p49
        %p240 = pneg %p73
        %p241 = pneg %p70
        %p242 = pneg %p94
        %p243 = pneg %p91
        %p244 = pneg %p115
        %p245 = pneg %p112
        %p246 = pneg %p143
        %p247 = pneg %p140
        %s248 = smul.u32 2, %s22
        %p249 = scmp.lt.s32.totalorder %s21, 1
        %s250 = scalar_select %p249, %s21, 1
        %p251 = scmp.lt.s32.totalorder %s248, 1
        %s252 = scalar_select %p251, %s248, 1
        %s253 = smul.addr %s252, 3
        %s254 = smul.addr %s250, 6
        %s255 = sadd.s32 %s253, %s254
        %s256 = smul.addr %s255, 4
        %s257 = scalar_lea.vmem %s4, %s256
        %s258 = smul.u32 2, %s22
        %p259 = scmp.lt.s32.totalorder %s21, 1
        %s260 = scalar_select %p259, %s21, 1
        %p261 = scmp.lt.s32.totalorder %s258, 1
        %s262 = scalar_select %p261, %s258, 1
        %s263 = smul.addr %s260, 2
        %s264 = sadd.s32 %s262, %s263
        %s265 = smul.addr %s264, 8
        %s266 = scalar_lea.vmem %s0, %s265
        %s267 = smul.u32 2, %s22
        %s268 = smul.u32 2, %s22
        %p269 = scmp.lt.s32.totalorder %s21, 1
        %s270 = scalar_select %p269, %s21, 1
        %p271 = scmp.lt.s32.totalorder %s268, 1
        %s272 = scalar_select %p271, %s268, 1
        %s273 = smul.addr %s272, 3
        %s274 = smul.addr %s270, 6
        %s275 = sadd.s32 %s273, %s274
        %s276 = smul.addr %s275, 4
        %s277 = scalar_lea.vmem %s4, %s276
        %s278 = smul.u32 2, %s22
        %v280 = vld [vmem:[%s266] sm:$0xff]
        %v281 = vld [vmem:[%s266 + $0x8] sm:$0xff]
        %v282 = vld [vmem:[#allocation2] sm:$0x1]
        %v283 = vld [vmem:[#allocation4] sm:$0x1]
        %284 = vadd.xlane.f32.xlu0 %v280
        %v285 = vpop.xlane.xlu0 %284
        %286 = vadd.xlane.f32.xlu0 %v281
        %v287 = vpop.xlane.xlu0 %286
        %v288 = vrcp.pop 128.0
        %v289 = vmul.f32 %v285, %v288
        %v290 = vmul.f32 %v287, %v288
        %v291 = vsub.f32 %v280, %v289
        %v292 = vsub.f32 %v281, %v290
        %v293 = vmul.f32 %v291, %v291
        %v294 = vmul.f32 %v292, %v292
        %295 = vadd.xlane.f32.xlu0 %v293
        %v296 = vpop.xlane.xlu0 %295
        %297 = vadd.xlane.f32.xlu0 %v294
        %v298 = vpop.xlane.xlu0 %297
        %v299 = vmul.f32 %v296, %v288
        %v300 = vmul.f32 %v298, %v288
        %v301 = vadd.f32 %v299, 1e-05
        %v302 = vadd.f32 %v300, 1e-05
        %v303 = vrsqrt.pop %v301
        %v304 = vrsqrt.pop %v302
        %v305 = vmul.f32 %v291, %v303
        %v306 = vmul.f32 %v292, %v304
        %v308 = vlaneseq
        %v309 = vshrl.u32 %v308, 7
        %v310 = vsub.s32 0, %v309
        %v311 = vrot.slane %v282, %v310
        %v313 = vmul.f32 %v305, %v311
        %v314 = vmul.f32 %v306, %v311
        %v316 = vlaneseq
        %v317 = vshrl.u32 %v316, 7
        %v318 = vsub.s32 0, %v317
        %v319 = vrot.slane %v283, %v318
        %v321 = vadd.f32 %v313, %v319
        %v322 = vadd.f32 %v314, %v319
        %v323 = vpack.c.bf16 %v322, %v321
        %v324 = vld [vmem:[#allocation6] sm:$0xff]
        %v325 = vld [vmem:[#allocation6 + $0x8] sm:$0xf]
        %v326 = vld [vmem:[#allocation6 + $0xc] sm:$0xff]
        %v327 = vld [vmem:[#allocation6 + $0x14] sm:$0xf]
        %v328 = vld [vmem:[#allocation6 + $0x18] sm:$0xff]
        %v329 = vld [vmem:[#allocation6 + $0x20] sm:$0xf]
        %v330 = vld [vmem:[#allocation6 + $0x24] sm:$0xff]
        %v331 = vld [vmem:[#allocation6 + $0x2c] sm:$0xf]
        %v332 = vld [vmem:[#allocation6 + $0x30] sm:$0xff]
        %v333 = vld [vmem:[#allocation6 + $0x38] sm:$0xf]
        %v334 = vld [vmem:[#allocation6 + $0x3c] sm:$0xff]
        %v335 = vld [vmem:[#allocation6 + $0x44] sm:$0xf]
        %v336 = vld [vmem:[#allocation6 + $0x48] sm:$0xff]
        %v337 = vld [vmem:[#allocation6 + $0x50] sm:$0xf]
        %v338 = vld [vmem:[#allocation6 + $0x54] sm:$0xff]
        %v339 = vld [vmem:[#allocation6 + $0x5c] sm:$0xf]
        %v340 = vld [vmem:[#allocation6 + $0x60] sm:$0xff]
        %v341 = vld [vmem:[#allocation6 + $0x68] sm:$0xf]
        %v342 = vld [vmem:[#allocation6 + $0x6c] sm:$0xff]
        %v343 = vld [vmem:[#allocation6 + $0x74] sm:$0xf]
        %v344 = vld [vmem:[#allocation6 + $0x78] sm:$0xff]
        %v345 = vld [vmem:[#allocation6 + $0x80] sm:$0xf]
        %v346 = vld [vmem:[#allocation6 + $0x84] sm:$0xff]
        %v347 = vld [vmem:[#allocation6 + $0x8c] sm:$0xf]
        %v348 = vld [vmem:[#allocation6 + $0x90] sm:$0xff]
        %v349 = vld [vmem:[#allocation6 + $0x98] sm:$0xf]
        %v350 = vld [vmem:[#allocation6 + $0x9c] sm:$0xff]
        %v351 = vld [vmem:[#allocation6 + $0xa4] sm:$0xf]
        %v352 = vld [vmem:[#allocation6 + $0xa8] sm:$0xff]
        %v353 = vld [vmem:[#allocation6 + $0xb0] sm:$0xf]
        %v354 = vld [vmem:[#allocation6 + $0xb4] sm:$0xff]
        %v355 = vld [vmem:[#allocation6 + $0xbc] sm:$0xf]
        %v388 = vunpack.c.l.b16 %v324
        %v389 = vunpack.c.h.b16 %v324
        %v390 = vunpack.c.l.b16 %v325
        %v391 = vunpack.c.l.b16 %v326
        %v392 = vunpack.c.h.b16 %v326
        %v393 = vunpack.c.l.b16 %v327
        %v394 = vunpack.c.l.b16 %v328
        %v395 = vunpack.c.h.b16 %v328
        %v396 = vunpack.c.l.b16 %v329
        %v397 = vunpack.c.l.b16 %v330
        %v398 = vunpack.c.h.b16 %v330
        %v399 = vunpack.c.l.b16 %v331
        %v400 = vunpack.c.l.b16 %v332
        %v401 = vunpack.c.h.b16 %v332
        %v402 = vunpack.c.l.b16 %v333
        %v403 = vunpack.c.l.b16 %v334
        %v404 = vunpack.c.h.b16 %v334
        %v405 = vunpack.c.l.b16 %v335
        %v406 = vunpack.c.l.b16 %v336
        %v407 = vunpack.c.h.b16 %v336
        %v408 = vunpack.c.l.b16 %v337
        %v409 = vunpack.c.l.b16 %v338
        %v410 = vunpack.c.h.b16 %v338
        %v411 = vunpack.c.l.b16 %v339
        %v412 = vunpack.c.l.b16 %v340
        %v413 = vunpack.c.h.b16 %v340
        %v414 = vunpack.c.l.b16 %v341
        %v415 = vunpack.c.l.b16 %v342
        %v416 = vunpack.c.h.b16 %v342
        %v417 = vunpack.c.l.b16 %v343
        %v418 = vunpack.c.l.b16 %v344
        %v419 = vunpack.c.h.b16 %v344
        %v420 = vunpack.c.l.b16 %v345
        %v421 = vunpack.c.l.b16 %v346
        %v422 = vunpack.c.h.b16 %v346
        %v423 = vunpack.c.l.b16 %v347
        %v424 = vunpack.c.l.b16 %v348
        %v425 = vunpack.c.h.b16 %v348
        %v426 = vunpack.c.l.b16 %v349
        %v427 = vunpack.c.l.b16 %v350
        %v428 = vunpack.c.h.b16 %v350
        %v429 = vunpack.c.l.b16 %v351
        %v430 = vunpack.c.l.b16 %v352
        %v431 = vunpack.c.h.b16 %v352
        %v432 = vunpack.c.l.b16 %v353
        %v433 = vunpack.c.l.b16 %v354
        %v434 = vunpack.c.h.b16 %v354
        %v435 = vunpack.c.l.b16 %v355
        %v436 = vpack.c.b16 %v391, %v388
        %v437 = vpack.c.b16 %v392, %v389
        %v438 = vpack.c.b16 %v393, %v390
        %v439 = vpack.c.b16 %v397, %v394
        %v440 = vpack.c.b16 %v398, %v395
        %v441 = vpack.c.b16 %v399, %v396
        %v442 = vpack.c.b16 %v403, %v400
        %v443 = vpack.c.b16 %v404, %v401
        %v444 = vpack.c.b16 %v405, %v402
        %v445 = vpack.c.b16 %v409, %v406
        %v446 = vpack.c.b16 %v410, %v407
        %v447 = vpack.c.b16 %v411, %v408
        %v448 = vpack.c.b16 %v415, %v412
        %v449 = vpack.c.b16 %v416, %v413
        %v450 = vpack.c.b16 %v417, %v414
        %v451 = vpack.c.b16 %v421, %v418
        %v452 = vpack.c.b16 %v422, %v419
        %v453 = vpack.c.b16 %v423, %v420
        %v454 = vpack.c.b16 %v427, %v424
        %v455 = vpack.c.b16 %v428, %v425
        %v456 = vpack.c.b16 %v429, %v426
        %v457 = vpack.c.b16 %v433, %v430
        %v458 = vpack.c.b16 %v434, %v431
        %v459 = vpack.c.b16 %v435, %v432
        %484 = vmatprep.subr.bf16.mxu0 %v458
        %485 = vmatpush1.bf16.msra.mxu0 %v457
        %486 = vmatprep.subr.bf16.mxu0 %v455
        %487 = vmatpush1.bf16.msra.mxu0 %v454
        %488 = vmatprep.subr.bf16.mxu0 %v452
        %489 = vmatpush1.bf16.msra.mxu0 %v451
        %490 = vmatprep.subr.bf16.mxu0 %v449
        %491 = vmatpush1.bf16.msra.mxu0 %v448
        %492 = vmatprep.subr.bf16.mxu0 %v446
        %493 = vmatpush1.bf16.msra.mxu0 %v445
        %494 = vmatprep.subr.bf16.mxu0 %v443
        %495 = vmatpush1.bf16.msra.mxu0 %v442
        %496 = vmatprep.subr.bf16.mxu0 %v440
        %497 = vmatpush1.bf16.msra.mxu0 %v439
        %498 = vmatprep.subr.bf16.mxu0 %v437
        %499 = vmatpush1.bf16.msra.mxu0 %v436
        %500 = vmatprep.subr.bf16.mxu0 0
        %501 = vmatpush2.bf16.msra.mxu0 0
        %502 = vmatprep.subr.bf16.mxu0 0
        %503 = vmatpush2.bf16.msra.mxu0 0
        %504 = vmatprep.subr.bf16.mxu0 0
        %505 = vmatpush2.bf16.msra.mxu0 0
        %506 = vmatprep.subr.bf16.mxu0 0
        %507 = vmatpush2.bf16.msra.mxu0 0
        %508 = vmatprep.subr.bf16.mxu0 0
        %509 = vmatpush2.bf16.msra.mxu0 0
        %510 = vmatprep.subr.bf16.mxu0 0
        %511 = vmatpush2.bf16.msra.mxu0 0
        %512 = vmatprep.subr.bf16.mxu0 0
        %513 = vmatpush2.bf16.msra.mxu0 0
        %514 = vmatprep.subr.bf16.mxu0 0
        %515 = vmatpush2.bf16.msra.mxu0 0
        %516 = vmatprep.mubr.bf16.mxu0 0
        %517 = vmatmul.mubr.bf16.gmra.mxu0 %v323
        %v518 = vpop.f32.mrf.mxu0
        %v519 = vadd.f32 0.0, %v518
        %v520 = vpop.f32.mrf.mxu0
        %v521 = vadd.f32 0.0, %v520
        %v522 = vpop.f32.mrf.mxu0
        %v523 = vadd.f32 0.0, %v522
        %v524 = vpop.f32.mrf.mxu0
        %v525 = vadd.f32 0.0, %v524
        %526 = vdwg.mxu0
        %527 = vmatprep.subr.bf16.mxu0 0
        %528 = vmatpush1.bf16.msra.mxu0 %v459
        %529 = vmatprep.subr.bf16.mxu0 0
        %530 = vmatpush1.bf16.msra.mxu0 %v456
        %531 = vmatprep.subr.bf16.mxu0 0
        %532 = vmatpush1.bf16.msra.mxu0 %v453
        %533 = vmatprep.subr.bf16.mxu0 0
        %534 = vmatpush1.bf16.msra.mxu0 %v450
        %535 = vmatprep.subr.bf16.mxu0 0
        %536 = vmatpush1.bf16.msra.mxu0 %v447
        %537 = vmatprep.subr.bf16.mxu0 0
        %538 = vmatpush1.bf16.msra.mxu0 %v444
        %539 = vmatprep.subr.bf16.mxu0 0
        %540 = vmatpush1.bf16.msra.mxu0 %v441
        %541 = vmatprep.subr.bf16.mxu0 0
        %542 = vmatpush1.bf16.msra.mxu0 %v438
        %543 = vmatprep.subr.bf16.mxu0 0
        %544 = vmatpush2.bf16.msra.mxu0 0
        %545 = vmatprep.subr.bf16.mxu0 0
        %546 = vmatpush2.bf16.msra.mxu0 0
        %547 = vmatprep.subr.bf16.mxu0 0
        %548 = vmatpush2.bf16.msra.mxu0 0
        %549 = vmatprep.subr.bf16.mxu0 0
        %550 = vmatpush2.bf16.msra.mxu0 0
        %551 = vmatprep.subr.bf16.mxu0 0
        %552 = vmatpush2.bf16.msra.mxu0 0
        %553 = vmatprep.subr.bf16.mxu0 0
        %554 = vmatpush2.bf16.msra.mxu0 0
        %555 = vmatprep.subr.bf16.mxu0 0
        %556 = vmatpush2.bf16.msra.mxu0 0
        %557 = vmatprep.subr.bf16.mxu0 0
        %558 = vmatpush2.bf16.msra.mxu0 0
        %559 = vmatprep.mubr.bf16.mxu0 0
        %560 = vmatmul.mubr.bf16.gmra.mxu0 %v323
        %v561 = vpop.f32.mrf.mxu0
        %v562 = vadd.f32 0.0, %v561
        %v563 = vpop.f32.mrf.mxu0
        %v564 = vpop.f32.mrf.mxu0
        %v565 = vadd.f32 0.0, %v564
        %v566 = vpop.f32.mrf.mxu0
        %567 = vdwg.mxu0
        %v568 = vpack.c.bf16 %v523, %v519
        %v569 = vpack.c.bf16 %v525, %v521
        %v570 = vpack.c.bf16 %v565, %v562
        %v574 = vunpack.c.l.b16 %v568
        %v575 = vunpack.c.l.b16 %v569
        %v576 = vunpack.c.l.b16 %v570
        %v577 = vunpack.c.h.b16 %v568
        %v578 = vunpack.c.h.b16 %v569
        %v579 = vunpack.c.h.b16 %v570
        %v580 = vpack.c.b16 %v575, %v574
        %v581 = vpack.c.b16 %v576, %v576
        %v582 = vpack.c.b16 %v578, %v577
        %v583 = vpack.c.b16 %v579, %v579
        %588 = vst [vmem:[%s277] sm:$0xff] %v580
        %589 = vst [vmem:[%s277 + $0x8] sm:$0xf] %v581
        %590 = vst [vmem:[%s277 + $0xc] sm:$0xff] %v582
        %591 = vst [vmem:[%s277 + $0x14] sm:$0xf] %v583
        %s592 = smul.u32 2, %s22
        %p593 = scmp.lt.s32.totalorder %s21, 1
        %s594 = scalar_select %p593, %s21, 1
        %p595 = scmp.lt.s32.totalorder %s592, 1
        %s596 = scalar_select %p595, %s592, 1
        %s597 = smul.addr %s596, 3
        %s598 = smul.addr %s594, 6
        %s599 = sadd.s32 %s597, %s598
        %s600 = smul.addr %s599, 4
        %s601 = scalar_lea.vmem %s4, %s600
        // Predicated region
        $region49: #{block_forward.3} parent=35 // pred_check
          %p602 = pneg %p140
        $region50: #{block_forward.3} parent=35 // pred_check_branch
          %604 = sbr.rel (%p602) target = $region52
        $region51: #{block_forward.3} parent=35 // pred_region
          %s605 = smul.u32 2, %s22
        $region52: #{block_forward.3} parent=35 // pred_fallthru
          _
      $region36: #{block_forward.3} parent=5 // pred_fallthru
        _
      %p606 = scmp.le.s32.totalorder 2, %s12
      // Predicated region
      $region53: #{block_forward.3} parent=5 // pred_check
        %p607 = pneg %p606
      $region54: #{block_forward.3} parent=5 // pred_check_branch
        %609 = sbr.rel (%p607) target = $region56
      $region55: #{block_forward.3} parent=5 // pred_region
        %s610 = ssub.s32 %s12, 2
        // Predicated region
        $region57: #{block_forward.3} parent=55 // pred_check
          %p611 = pneg %p146
        $region58: #{block_forward.3} parent=55 // pred_check_branch
          %613 = sbr.rel (%p611) target = $region60
        $region59: #{block_forward.3} parent=55 // pred_region
          %s614 = smul.u32 2, %s24
          %p615 = scmp.lt.s32.totalorder %s23, 1
          %s616 = scalar_select %p615, %s23, 1
          %p617 = scmp.lt.s32.totalorder %s614, 1
          %s618 = scalar_select %p617, %s614, 1
          %s619 = smul.addr %s618, 3
          %s620 = smul.addr %s616, 6
          %s621 = sadd.s32 %s619, %s620
          %s622 = smul.addr %s621, 4
          %s623 = scalar_lea.vmem %s4, %s622
        $region60: #{block_forward.3} parent=55 // pred_fallthru
          _
      $region56: #{block_forward.3} parent=5 // pred_fallthru
        _
    $region6: #{block_forward.3} parent=1 // loop_footer
      %s16 = sadd.s32 1, %s12
    $region7: #{block_forward.3} parent=1 // loop_footer_branch
      %11 = sbr.rel target = $region3
    $region8: #{block_forward.3} parent=1 // loop_exit
      _
    %624 = vsyncpa [#allocation3], 1
    %s625 = scalar_lea.sflag [#allocation3], 1
    %626 = vsyncpa %s625, 1
    %627 = vsyncpa [#allocation5], 1

// kernel: block_forward.4
$region0: #{block_forward.4}
  #allocation0 [shape = 'u32[]', space=smem, size = 0x4, offset = 0x4, fixed_abs, tag = 'smem constant byte address 0x4 - core index']
  #allocation1 [shape = 'u32[144,128]{1,0:T(1,128)}', space=vmem, size = 0x12000, scoped, tag = 'internal scratch']
  %s0 = inlined_call_operand.vmem [shape: bf16[2,16,384], index: 0, kind: input, shape index: {}, may-alias: {0,1,2}]
  %s1 = inlined_call_operand.vmem [shape: bf16[2,16,384], index: 1, kind: input, shape index: {}, may-alias: {0,1,2}]
  %s2 = inlined_call_operand.vmem [shape: bf16[2,16,384], index: 2, kind: input, shape index: {}, may-alias: {0,1,2}]
  %s3 = inlined_call_operand.vmem [shape: bf16[2,16,128], index: 3, kind: output, shape index: {}]
  %s4 = sld [smem:[#allocation0]]
  $region168: #{block_forward.4} parent=0
    _
  %s6 = ssub.s32 1, %s4
  %s7 = scalar_select 0, %s6, %s4
  $region1: #{block_forward.4} parent=0
    #allocation2 [shape = 'u8[8192]{0}', space=vmem, size = 0x2000, scoped, tag = 'input window, operand 0']
    #allocation3 [shape = 'u8[8192]{0}', space=vmem, size = 0x2000, scoped, tag = 'input window, operand 1']
    #allocation4 [shape = 'u8[8192]{0}', space=vmem, size = 0x2000, scoped, tag = 'input window, operand 2']
    loop: start=0, step=1, limit=4
    $region2: #{block_forward.4} parent=1 // loop_pre_header
      _
    $region3: #{block_forward.4} parent=1 // loop_header
      %s9 = sphi 0, %s13
      %p10 = scmp.ge.s32.totalorder %s9, 4
      %s16 = sphi 0, %s35
      %s17 = sphi 0, %s31
      %s18 = sphi 0, %s27
      %s19 = sphi 0, %s16
      %s20 = sphi 0, %s17
      %s21 = sphi 0, %s18
      %s22 = sphi 0, %s19
      %s23 = sphi 0, %s20
      %s24 = sphi 0, %s21
      %s42 = sphi 0, %s44
      %s45 = sphi 0, %s42
      %s46 = sphi 0, %s45
      %s62 = sphi 0, %s46
      %s72 = sphi 0, %s74
      %s75 = sphi 0, %s72
      %s76 = sphi 0, %s75
      %s92 = sphi 0, %s76
      %s102 = sphi 0, %s104
      %s105 = sphi 0, %s102
      %s106 = sphi 0, %s105
      %s122 = sphi 0, %s106
      %s132 = sphi 0, %s134
      %s135 = sphi 0, %s132
      %s136 = sphi 0, %s135
      %s152 = sphi 0, %s136
    $region4: #{block_forward.4} parent=1 // loop_header_branch
      %12 = sbr.rel (%p10) target = $region8
    $region5: #{block_forward.4} parent=1 // loop_body
      %s14 = ssub.s32 %s9, 1
      %s15 = ssub.s32 %s9, 2
      %s25 = sadd.s32 1, %s18
      %p26 = scmp.ge.s32.totalorder %s25, 1
      %s27 = scalar_select %p26, 0, %s25
      %s28 = sadd.s32 1, %s17
      %s29 = scalar_select %p26, %s28, %s17
      %p30 = scmp.ge.s32.totalorder %s29, 1
      %s31 = scalar_select %p30, 0, %s29
      %s32 = sadd.s32 1, %s16
      %s33 = scalar_select %p30, %s32, %s16
      %p34 = scmp.ge.s32.totalorder %s33, 2
      %s35 = scalar_select %p34, 0, %s33
      %s36 = ssub.s32 %s16, %s35
      %s37 = ssub.s32 %s18, %s27
      %s38 = sor.u32 %s36, %s37
      %s39 = ssub.s32 %s17, %s31
      %s40 = sor.u32 %s38, %s39
      %p41 = scmp.eq.s32.totalorder %s40, 0
      %s43 = sadd.s32 %s42, 1
      %s44 = scalar_select %p41, %s42, %s43
      %p47 = pneg %p41
      %p48 = scmp.eq.s32.totalorder %s9, 1
      %p49 = por %p47, %p48
      %p50 = scmp.ne.s32.totalorder %s42, %s45
      %p51 = scmp.eq.s32.totalorder %s9, 0
      %p52 = por %p50, %p51
      %p53 = scmp.ne.s32.totalorder %s42, %s45
      %p54 = scmp.eq.s32.totalorder %s14, 1
      %p55 = por %p53, %p54
      %p56 = scmp.ne.s32.totalorder %s45, %s46
      %p57 = scmp.eq.s32.totalorder %s14, 0
      %p58 = por %p56, %p57
      %p59 = scmp.ne.s32.totalorder %s45, %s46
      %p60 = scmp.eq.s32.totalorder %s15, 1
      %p61 = por %p59, %p60
      %p63 = scmp.ne.s32.totalorder %s46, %s62
      %p64 = scmp.eq.s32.totalorder %s15, 0
      %p65 = por %p63, %p64
      %s66 = sadd.s32 %s17, 1
      %s67 = sadd.s32 %s31, 1
      %s68 = ssub.s32 %s16, %s35
      %s69 = ssub.s32 %s66, %s67
      %s70 = sor.u32 %s68, %s69
      %p71 = scmp.eq.s32.totalorder %s70, 0
      %s73 = sadd.s32 %s72, 1
      %s74 = scalar_select %p71, %s72, %s73
      %p77 = pneg %p71
      %p78 = scmp.eq.s32.totalorder %s9, 1
      %p79 = por %p77, %p78
      %p80 = scmp.ne.s32.totalorder %s72, %s75
      %p81 = scmp.eq.s32.totalorder %s9, 0
      %p82 = por %p80, %p81
      %p83 = scmp.ne.s32.totalorder %s72, %s75
      %p84 = scmp.eq.s32.totalorder %s14, 1
      %p85 = por %p83, %p84
      %p86 = scmp.ne.s32.totalorder %s75, %s76
      %p87 = scmp.eq.s32.totalorder %s14, 0
      %p88 = por %p86, %p87
      %p89 = scmp.ne.s32.totalorder %s75, %s76
      %p90 = scmp.eq.s32.totalorder %s15, 1
      %p91 = por %p89, %p90
      %p93 = scmp.ne.s32.totalorder %s76, %s92
      %p94 = scmp.eq.s32.totalorder %s15, 0
      %p95 = por %p93, %p94
      %s96 = sadd.s32 %s17, 2
      %s97 = sadd.s32 %s31, 2
      %s98 = ssub.s32 %s16, %s35
      %s99 = ssub.s32 %s96, %s97
      %s100 = sor.u32 %s98, %s99
      %p101 = scmp.eq.s32.totalorder %s100, 0
      %s103 = sadd.s32 %s102, 1
      %s104 = scalar_select %p101, %s102, %s103
      %p107 = pneg %p101
      %p108 = scmp.eq.s32.totalorder %s9, 1
      %p109 = por %p107, %p108
      %p110 = scmp.ne.s32.totalorder %s102, %s105
      %p111 = scmp.eq.s32.totalorder %s9, 0
      %p112 = por %p110, %p111
      %p113 = scmp.ne.s32.totalorder %s102, %s105
      %p114 = scmp.eq.s32.totalorder %s14, 1
      %p115 = por %p113, %p114
      %p116 = scmp.ne.s32.totalorder %s105, %s106
      %p117 = scmp.eq.s32.totalorder %s14, 0
      %p118 = por %p116, %p117
      %p119 = scmp.ne.s32.totalorder %s105, %s106
      %p120 = scmp.eq.s32.totalorder %s15, 1
      %p121 = por %p119, %p120
      %p123 = scmp.ne.s32.totalorder %s106, %s122
      %p124 = scmp.eq.s32.totalorder %s15, 0
      %p125 = por %p123, %p124
      %s126 = ssub.s32 %s16, %s35
      %s127 = ssub.s32 %s18, %s27
      %s128 = sor.u32 %s126, %s127
      %s129 = ssub.s32 %s17, %s31
      %s130 = sor.u32 %s128, %s129
      %p131 = scmp.eq.s32.totalorder %s130, 0
      %s133 = sadd.s32 %s132, 1
      %s134 = scalar_select %p131, %s132, %s133
      %p137 = pneg %p131
      %p138 = scmp.eq.s32.totalorder %s9, 1
      %p139 = por %p137, %p138
      %p140 = scmp.ne.s32.totalorder %s132, %s135
      %p141 = scmp.eq.s32.totalorder %s9, 0
      %p142 = por %p140, %p141
      %p143 = scmp.ne.s32.totalorder %s132, %s135
      %p144 = scmp.eq.s32.totalorder %s14, 1
      %p145 = por %p143, %p144
      %p146 = scmp.ne.s32.totalorder %s135, %s136
      %p147 = scmp.eq.s32.totalorder %s14, 0
      %p148 = por %p146, %p147
      %p149 = scmp.ne.s32.totalorder %s135, %s136
      %p150 = scmp.eq.s32.totalorder %s15, 1
      %p151 = por %p149, %p150
      %p153 = scmp.ne.s32.totalorder %s136, %s152
      %p154 = scmp.eq.s32.totalorder %s15, 0
      %p155 = por %p153, %p154
      %p156 = scmp.le.s32.totalorder 1, %s9
      %p157 = scmp.lt.s32.totalorder %s9, 3
      %p158 = pnand %p156, %p157
      %p159 = pneg %p158
      // Predicated region
      $region9: #{block_forward.4} parent=5 // pred_check
        _
      $region10: #{block_forward.4} parent=5 // pred_check_branch
        %161 = sbr.rel (%p158) target = $region12
      $region11: #{block_forward.4} parent=5 // pred_region
        %s162 = ssub.s32 %s9, 1
      $region12: #{block_forward.4} parent=5 // pred_fallthru
        _
      %p163 = scmp.lt.s32.totalorder %s9, 2
      // Predicated region
      $region13: #{block_forward.4} parent=5 // pred_check
        %p164 = pneg %p163
      $region14: #{block_forward.4} parent=5 // pred_check_branch
        %166 = sbr.rel (%p164) target = $region16
      $region15: #{block_forward.4} parent=5 // pred_region
        // Predicated region
        $region17: #{block_forward.4} parent=15 // pred_check
          %p167 = pneg %p52
        $region18: #{block_forward.4} parent=15 // pred_check_branch
          %169 = sbr.rel (%p167) target = $region20
        $region19: #{block_forward.4} parent=15 // pred_region
          %s170 = sand.u32 %s42, 1
          %s171 = sand.u32 %s42, 1
          %s172 = smul.addr %s171, 8
          %s173 = scalar_lea.vmem [#allocation2], %s172
          %s174 = smul.u32 2, %s18
          %s175 = smul.addr %s174, 3
          %s176 = sadd.s32 %s17, %s175
          %s177 = smul.addr %s16, 6
          %s178 = sadd.s32 %s176, %s177
          %s179 = smul.addr %s178, 4
          %s180 = scalar_lea.vmem %s0, %s179
          // Predicated region
          $region21: #{block_forward.4} parent=19 // pred_check
            _
          $region22: #{block_forward.4} parent=19 // pred_check_branch
            %182 = sbr.rel (0) target = $region24
          $region23: #{block_forward.4} parent=19 // pred_region
            // Predicated region
            $region25: #{block_forward.4} parent=23 // pred_check
              _
            $region26: #{block_forward.4} parent=23 // pred_check_branch
              %184 = sbr.rel target = $region28
            $region27: #{block_forward.4} parent=23 // pred_region
              // Predicated region
              $region40: #{block_forward.4} parent=27 // pred_check
                _
              $region41: #{block_forward.4} parent=27 // pred_check_branch
                %202 = sbr.rel (0) target = $region43
              $region42: #{block_forward.4} parent=27 // pred_region
                loop: start=0, step=1, limit=1
                $region44: #{block_forward.4} parent=42 // loop_pre_header
                  _
                $region45: #{block_forward.4} parent=42 // loop_header
                  %s204 = sphi 0, %s208
                  %p205 = scmp.ge.s32.totalorder %s204, 1
                  %s209 = sphi %s180, %s180
                  %s210 = sphi %s173, %s173
                $region46: #{block_forward.4} parent=42 // loop_header_branch
                  %207 = sbr.rel (%p205) target = $region50
                $region47: #{block_forward.4} parent=42 // loop_body
                  _
                $region48: #{block_forward.4} parent=42 // loop_footer
                  %s208 = sadd.s32 1, %s204
                $region49: #{block_forward.4} parent=42 // loop_footer_branch
                  %203 = sbr.rel target = $region45
                $region50: #{block_forward.4} parent=42 // loop_exit
                  _
                %s212 = ssub.s32 16, 1
                loop: start=0, step=1, limit=1
                $region51: #{block_forward.4} parent=42 // loop_pre_header
                  _
                $region52: #{block_forward.4} parent=42 // loop_header
                  %s214 = sphi 0, %s218
                  %p215 = scmp.ge.s32.totalorder %s214, 1
                  %s219 = sphi %s180, %s180
                  %s220 = sphi %s173, %s173
                $region53: #{block_forward.4} parent=42 // loop_header_branch
                  %217 = sbr.rel (%p215) target = $region57
                $region54: #{block_forward.4} parent=42 // loop_body
                  %v221 = vld [vmem:[%s219] sm:%s212]
                  %222 = vst [vmem:[%s220] sm:%s212] %v221
                  %v223 = vld [vmem:[%s219 + $0xc] sm:%s212]
                  %224 = vst [vmem:[%s220 + $0x4] sm:%s212] %v223
                $region55: #{block_forward.4} parent=42 // loop_footer
                  %s218 = sadd.s32 1, %s214
                $region56: #{block_forward.4} parent=42 // loop_footer_branch
                  %213 = sbr.rel target = $region52
                $region57: #{block_forward.4} parent=42 // loop_exit
                  _
              $region43: #{block_forward.4} parent=27 // pred_fallthru
                _
            $region28: #{block_forward.4} parent=23 // pred_fallthru
              _
            // Predicated region
            $region29: #{block_forward.4} parent=23 // pred_check
              _
            $region30: #{block_forward.4} parent=23 // pred_check_branch
              %186 = sbr.rel (0) target = $region32
            $region31: #{block_forward.4} parent=23 // pred_region
              %s188 = ssub.s32 16, 1
              loop: start=0, step=1, limit=1
              $region33: #{block_forward.4} parent=31 // loop_pre_header
                _
              $region34: #{block_forward.4} parent=31 // loop_header
                %s190 = sphi 0, %s194
                %p191 = scmp.ge.s32.totalorder %s190, 1
                %s195 = sphi %s180, %s180
                %s196 = sphi %s173, %s173
              $region35: #{block_forward.4} parent=31 // loop_header_branch
                %193 = sbr.rel (%p191) target = $region39
              $region36: #{block_forward.4} parent=31 // loop_body
                %v197 = vld [vmem:[%s195] sm:%s188]
                %198 = vst [vmem:[%s196] sm:%s188] %v197
                %v199 = vld [vmem:[%s195 + $0xc] sm:%s188]
                %200 = vst [vmem:[%s196 + $0x4] sm:%s188] %v199
              $region37: #{block_forward.4} parent=31 // loop_footer
                %s194 = sadd.s32 1, %s190
              $region38: #{block_forward.4} parent=31 // loop_footer_branch
                %189 = sbr.rel target = $region34
              $region39: #{block_forward.4} parent=31 // loop_exit
                _
            $region32: #{block_forward.4} parent=23 // pred_fallthru
              _
          $region24: #{block_forward.4} parent=19 // pred_fallthru
            _
          %225 = vnop
        $region20: #{block_forward.4} parent=15 // pred_fallthru
          _
        // Predicated region
        $region58: #{block_forward.4} parent=15 // pred_check
          %p226 = pneg %p82
        $region59: #{block_forward.4} parent=15 // pred_check_branch
          %228 = sbr.rel (%p226) target = $region61
        $region60: #{block_forward.4} parent=15 // pred_region
          %s229 = sand.u32 %s72, 1
          %s230 = sand.u32 %s72, 1
          %s231 = smul.addr %s230, 8
          %s232 = scalar_lea.vmem [#allocation3], %s231
          %s233 = sadd.s32 %s17, 1
          %s234 = smul.addr %s16, 6
          %s235 = sadd.s32 %s233, %s234
          %s236 = smul.addr %s235, 4
          %s237 = scalar_lea.vmem %s1, %s236
          // Predicated region
          $region62: #{block_forward.4} parent=60 // pred_check
            _
          $region63: #{block_forward.4} parent=60 // pred_check_branch
            %239 = sbr.rel (0) target = $region65
          $region64: #{block_forward.4} parent=60 // pred_region
            // Predicated region
            $region66: #{block_forward.4} parent=64 // pred_check
              _
            $region67: #{block_forward.4} parent=64 // pred_check_branch
              %241 = sbr.rel target = $region69
            $region68: #{block_forward.4} parent=64 // pred_region
              // Predicated region
              $region81: #{block_forward.4} parent=68 // pred_check
                _
              $region82: #{block_forward.4} parent=68 // pred_check_branch
                %259 = sbr.rel (0) target = $region84
              $region83: #{block_forward.4} parent=68 // pred_region
                loop: start=0, step=1, limit=1
                $region85: #{block_forward.4} parent=83 // loop_pre_header
                  _
                $region86: #{block_forward.4} parent=83 // loop_header
                  %s261 = sphi 0, %s265
                  %p262 = scmp.ge.s32.totalorder %s261, 1
                  %s266 = sphi %s237, %s237
                  %s267 = sphi %s232, %s232
                $region87: #{block_forward.4} parent=83 // loop_header_branch
                  %264 = sbr.rel (%p262) target = $region91
                $region88: #{block_forward.4} parent=83 // loop_body
                  _
                $region89: #{block_forward.4} parent=83 // loop_footer
                  %s265 = sadd.s32 1, %s261
                $region90: #{block_forward.4} parent=83 // loop_footer_branch
                  %260 = sbr.rel target = $region86
                $region91: #{block_forward.4} parent=83 // loop_exit
                  _
                %s269 = ssub.s32 16, 1
                loop: start=0, step=1, limit=1
                $region92: #{block_forward.4} parent=83 // loop_pre_header
                  _
                $region93: #{block_forward.4} parent=83 // loop_header
                  %s271 = sphi 0, %s275
                  %p272 = scmp.ge.s32.totalorder %s271, 1
                  %s276 = sphi %s237, %s237
                  %s277 = sphi %s232, %s232
                $region94: #{block_forward.4} parent=83 // loop_header_branch
                  %274 = sbr.rel (%p272) target = $region98
                $region95: #{block_forward.4} parent=83 // loop_body
                  %v278 = vld [vmem:[%s276] sm:%s269]
                  %279 = vst [vmem:[%s277] sm:%s269] %v278
                  %v280 = vld [vmem:[%s276 + $0xc] sm:%s269]
                  %281 = vst [vmem:[%s277 + $0x4] sm:%s269] %v280
                $region96: #{block_forward.4} parent=83 // loop_footer
                  %s275 = sadd.s32 1, %s271
                $region97: #{block_forward.4} parent=83 // loop_footer_branch
                  %270 = sbr.rel target = $region93
                $region98: #{block_forward.4} parent=83 // loop_exit
                  _
              $region84: #{block_forward.4} parent=68 // pred_fallthru
                _
            $region69: #{block_forward.4} parent=64 // pred_fallthru
              _
            // Predicated region
            $region70: #{block_forward.4} parent=64 // pred_check
              _
            $region71: #{block_forward.4} parent=64 // pred_check_branch
              %243 = sbr.rel (0) target = $region73
            $region72: #{block_forward.4} parent=64 // pred_region
              %s245 = ssub.s32 16, 1
              loop: start=0, step=1, limit=1
              $region74: #{block_forward.4} parent=72 // loop_pre_header
                _
              $region75: #{block_forward.4} parent=72 // loop_header
                %s247 = sphi 0, %s251
                %p248 = scmp.ge.s32.totalorder %s247, 1
                %s252 = sphi %s237, %s237
                %s253 = sphi %s232, %s232
              $region76: #{block_forward.4} parent=72 // loop_header_branch
                %250 = sbr.rel (%p248) target = $region80
              $region77: #{block_forward.4} parent=72 // loop_body
                %v254 = vld [vmem:[%s252] sm:%s245]
                %255 = vst [vmem:[%s253] sm:%s245] %v254
                %v256 = vld [vmem:[%s252 + $0xc] sm:%s245]
                %257 = vst [vmem:[%s253 + $0x4] sm:%s245] %v256
              $region78: #{block_forward.4} parent=72 // loop_footer
                %s251 = sadd.s32 1, %s247
              $region79: #{block_forward.4} parent=72 // loop_footer_branch
                %246 = sbr.rel target = $region75
              $region80: #{block_forward.4} parent=72 // loop_exit
                _
            $region73: #{block_forward.4} parent=64 // pred_fallthru
              _
          $region65: #{block_forward.4} parent=60 // pred_fallthru
            _
          %282 = vnop
        $region61: #{block_forward.4} parent=15 // pred_fallthru
          _
        // Predicated region
        $region99: #{block_forward.4} parent=15 // pred_check
          %p283 = pneg %p112
        $region100: #{block_forward.4} parent=15 // pred_check_branch
          %285 = sbr.rel (%p283) target = $region102
        $region101: #{block_forward.4} parent=15 // pred_region
          %s286 = sand.u32 %s102, 1
          %s287 = sand.u32 %s102, 1
          %s288 = smul.addr %s287, 8
          %s289 = scalar_lea.vmem [#allocation4], %s288
          %s290 = sadd.s32 %s17, 2
          %s291 = smul.addr %s16, 6
          %s292 = sadd.s32 %s290, %s291
          %s293 = smul.addr %s292, 4
          %s294 = scalar_lea.vmem %s2, %s293
          // Predicated region
          $region103: #{block_forward.4} parent=101 // pred_check
            _
          $region104: #{block_forward.4} parent=101 // pred_check_branch
            %296 = sbr.rel (0) target = $region106
          $region105: #{block_forward.4} parent=101 // pred_region
            // Predicated region
            $region107: #{block_forward.4} parent=105 // pred_check
              _
            $region108: #{block_forward.4} parent=105 // pred_check_branch
              %298 = sbr.rel target = $region110
            $region109: #{block_forward.4} parent=105 // pred_region
              // Predicated region
              $region122: #{block_forward.4} parent=109 // pred_check
                _
              $region123: #{block_forward.4} parent=109 // pred_check_branch
                %316 = sbr.rel (0) target = $region125
              $region124: #{block_forward.4} parent=109 // pred_region
                loop: start=0, step=1, limit=1
                $region126: #{block_forward.4} parent=124 // loop_pre_header
                  _
                $region127: #{block_forward.4} parent=124 // loop_header
                  %s318 = sphi 0, %s322
                  %p319 = scmp.ge.s32.totalorder %s318, 1
                  %s323 = sphi %s294, %s294
                  %s324 = sphi %s289, %s289
                $region128: #{block_forward.4} parent=124 // loop_header_branch
                  %321 = sbr.rel (%p319) target = $region132
                $region129: #{block_forward.4} parent=124 // loop_body
                  _
                $region130: #{block_forward.4} parent=124 // loop_footer
                  %s322 = sadd.s32 1, %s318
                $region131: #{block_forward.4} parent=124 // loop_footer_branch
                  %317 = sbr.rel target = $region127
                $region132: #{block_forward.4} parent=124 // loop_exit
                  _
                %s326 = ssub.s32 16, 1
                loop: start=0, step=1, limit=1
                $region133: #{block_forward.4} parent=124 // loop_pre_header
                  _
                $region134: #{block_forward.4} parent=124 // loop_header
                  %s328 = sphi 0, %s332
                  %p329 = scmp.ge.s32.totalorder %s328, 1
                  %s333 = sphi %s294, %s294
                  %s334 = sphi %s289, %s289
                $region135: #{block_forward.4} parent=124 // loop_header_branch
                  %331 = sbr.rel (%p329) target = $region139
                $region136: #{block_forward.4} parent=124 // loop_body
                  %v335 = vld [vmem:[%s333] sm:%s326]
                  %336 = vst [vmem:[%s334] sm:%s326] %v335
                  %v337 = vld [vmem:[%s333 + $0xc] sm:%s326]
                  %338 = vst [vmem:[%s334 + $0x4] sm:%s326] %v337
                $region137: #{block_forward.4} parent=124 // loop_footer
                  %s332 = sadd.s32 1, %s328
                $region138: #{block_forward.4} parent=124 // loop_footer_branch
                  %327 = sbr.rel target = $region134
                $region139: #{block_forward.4} parent=124 // loop_exit
                  _
              $region125: #{block_forward.4} parent=109 // pred_fallthru
                _
            $region110: #{block_forward.4} parent=105 // pred_fallthru
              _
            // Predicated region
            $region111: #{block_forward.4} parent=105 // pred_check
              _
            $region112: #{block_forward.4} parent=105 // pred_check_branch
              %300 = sbr.rel (0) target = $region114
            $region113: #{block_forward.4} parent=105 // pred_region
              %s302 = ssub.s32 16, 1
              loop: start=0, step=1, limit=1
              $region115: #{block_forward.4} parent=113 // loop_pre_header
                _
              $region116: #{block_forward.4} parent=113 // loop_header
                %s304 = sphi 0, %s308
                %p305 = scmp.ge.s32.totalorder %s304, 1
                %s309 = sphi %s294, %s294
                %s310 = sphi %s289, %s289
              $region117: #{block_forward.4} parent=113 // loop_header_branch
                %307 = sbr.rel (%p305) target = $region121
              $region118: #{block_forward.4} parent=113 // loop_body
                %v311 = vld [vmem:[%s309] sm:%s302]
                %312 = vst [vmem:[%s310] sm:%s302] %v311
                %v313 = vld [vmem:[%s309 + $0xc] sm:%s302]
                %314 = vst [vmem:[%s310 + $0x4] sm:%s302] %v313
              $region119: #{block_forward.4} parent=113 // loop_footer
                %s308 = sadd.s32 1, %s304
              $region120: #{block_forward.4} parent=113 // loop_footer_branch
                %303 = sbr.rel target = $region116
              $region121: #{block_forward.4} parent=113 // loop_exit
                _
            $region114: #{block_forward.4} parent=105 // pred_fallthru
              _
          $region106: #{block_forward.4} parent=101 // pred_fallthru
            _
          %339 = vnop
        $region102: #{block_forward.4} parent=15 // pred_fallthru
          _
      $region16: #{block_forward.4} parent=5 // pred_fallthru
        _
      %p340 = scmp.le.s32.totalorder 1, %s9
      %p341 = scmp.lt.s32.totalorder %s9, 3
      %p342 = pnand %p340, %p341
      %p343 = pneg %p342
      // Predicated region
      $region140: #{block_forward.4} parent=5 // pred_check
        _
      $region141: #{block_forward.4} parent=5 // pred_check_branch
        %345 = sbr.rel (%p342) target = $region143
      $region142: #{block_forward.4} parent=5 // pred_region
        %s346 = ssub.s32 %s9, 1
        %s347 = sand.u32 %s45, 1
        %s348 = sand.u32 %s45, 1
        %s349 = smul.addr %s348, 8
        %s350 = scalar_lea.vmem [#allocation2], %s349
        // Predicated region
        $region144: #{block_forward.4} parent=142 // pred_check
          %p351 = pneg %p58
        $region145: #{block_forward.4} parent=142 // pred_check_branch
          %353 = sbr.rel (%p351) target = $region147
        $region146: #{block_forward.4} parent=142 // pred_region
          _
        $region147: #{block_forward.4} parent=142 // pred_fallthru
          _
        %s354 = sand.u32 %s75, 1
        %s355 = sand.u32 %s75, 1
        %s356 = smul.addr %s355, 8
        %s357 = scalar_lea.vmem [#allocation3], %s356
        // Predicated region
        $region148: #{block_forward.4} parent=142 // pred_check
          %p358 = pneg %p88
        $region149: #{block_forward.4} parent=142 // pred_check_branch
          %360 = sbr.rel (%p358) target = $region151
        $region150: #{block_forward.4} parent=142 // pred_region
          _
        $region151: #{block_forward.4} parent=142 // pred_fallthru
          _
        %s361 = sand.u32 %s105, 1
        %s362 = sand.u32 %s105, 1
        %s363 = smul.addr %s362, 8
        %s364 = scalar_lea.vmem [#allocation4], %s363
        // Predicated region
        $region152: #{block_forward.4} parent=142 // pred_check
          %p365 = pneg %p118
        $region153: #{block_forward.4} parent=142 // pred_check_branch
          %367 = sbr.rel (%p365) target = $region155
        $region154: #{block_forward.4} parent=142 // pred_region
          _
        $region155: #{block_forward.4} parent=142 // pred_fallthru
          _
        %s368 = sand.u32 %s45, 1
        %s369 = sand.u32 %s45, 1
        %s370 = smul.addr %s369, 8
        %s371 = scalar_lea.vmem [#allocation2], %s370
        %p372 = pneg %p58
        %p373 = pneg %p55
        %s374 = sand.u32 %s75, 1
        %s375 = sand.u32 %s75, 1
        %s376 = smul.addr %s375, 8
        %s377 = scalar_lea.vmem [#allocation3], %s376
        %p378 = pneg %p88
        %p379 = pneg %p85
        %s380 = sand.u32 %s105, 1
        %s381 = sand.u32 %s105, 1
        %s382 = smul.addr %s381, 8
        %s383 = scalar_lea.vmem [#allocation4], %s382
        %p384 = pneg %p118
        %p385 = pneg %p115
        %p386 = pneg %p148
        %p387 = pneg %p145
        %s388 = smul.u32 2, %s21
        %p389 = scmp.lt.s32.totalorder %s19, 1
        %s390 = scalar_select %p389, %s19, 1
        %p391 = scmp.lt.s32.totalorder %s388, 1
        %s392 = scalar_select %p391, %s388, 1
        %p393 = scmp.lt.s32.totalorder %s20, 0
        %s394 = scalar_select %p393, %s20, 0
        %s395 = sadd.s32 %s394, %s392
        %s396 = smul.addr %s390, 2
        %s397 = sadd.s32 %s395, %s396
        %s398 = smul.addr %s397, 4
        %s399 = scalar_lea.vmem %s3, %s398
        %s400 = smul.u32 2, %s21
        %s401 = sadd.s32 %s20, 1
        %s402 = sadd.s32 %s20, 2
        %s403 = smul.u32 2, %s21
        %p404 = scmp.lt.s32.totalorder %s19, 1
        %s405 = scalar_select %p404, %s19, 1
        %p406 = scmp.lt.s32.totalorder %s403, 1
        %s407 = scalar_select %p406, %s403, 1
        %p408 = scmp.lt.s32.totalorder %s20, 0
        %s409 = scalar_select %p408, %s20, 0
        %s410 = sadd.s32 %s409, %s407
        %s411 = smul.addr %s405, 2
        %s412 = sadd.s32 %s410, %s411
        %s413 = smul.addr %s412, 4
        %s414 = scalar_lea.vmem %s3, %s413
        %s415 = smul.u32 2, %s21
        %v417 = vld [vmem:[%s350] sm:$0xf]
        %v418 = vld [vmem:[%s350 + $0x4] sm:$0xf]
        %v419 = vld [vmem:[%s357] sm:$0xf]
        %v420 = vld [vmem:[%s357 + $0x4] sm:$0xf]
        %v421 = vld [vmem:[%s364] sm:$0xf]
        %v422 = vld [vmem:[%s364 + $0x4] sm:$0xf]
        %v425 = vunpack.c.l.b16 %v417
        %v426 = vunpack.c.l.b16 %v418
        %v427 = vpack.c.b16 %v426, %v425
        %v430 = vunpack.c.l.b16 %v419
        %v431 = vunpack.c.l.b16 %v420
        %v432 = vpack.c.b16 %v431, %v430
        %vm433 = vcmask 261120
        %v435 = vsel %vm433, %v427, 0
        %v438 = vsel %vm433, %v432, 0
        %440 = vmatprep.subr.bf16.mxu0 0
        %441 = vmatpush1.bf16.xpose.msra.mxu0 0
        %442 = vmatprep.subr.bf16.mxu0 0
        %443 = vmatpush1.bf16.xpose.msra.mxu0 0
        %444 = vmatprep.subr.bf16.mxu0 0
        %445 = vmatpush1.bf16.xpose.msra.mxu0 0
        %446 = vmatprep.subr.bf16.mxu0 0
        %447 = vmatpush1.bf16.xpose.msra.mxu0 0
        %448 = vmatprep.subr.bf16.mxu0 0
        %449 = vmatpush1.bf16.xpose.msra.mxu0 0
        %450 = vmatprep.subr.bf16.mxu0 0
        %451 = vmatpush1.bf16.xpose.msra.mxu0 0
        %452 = vmatprep.subr.bf16.mxu0 0
        %453 = vmatpush1.bf16.xpose.msra.mxu0 0
        %454 = vmatprep.subr.bf16.mxu0 0
        %455 = vmatpush1.bf16.xpose.msra.mxu0 %v438
        %456 = vmatprep.subr.bf16.mxu0 0
        %457 = vmatpush2.bf16.xpose.msra.mxu0 0
        %458 = vmatprep.subr.bf16.mxu0 0
        %459 = vmatpush2.bf16.xpose.msra.mxu0 0
        %460 = vmatprep.subr.bf16.mxu0 0
        %461 = vmatpush2.bf16.xpose.msra.mxu0 0
        %462 = vmatprep.subr.bf16.mxu0 0
        %463 = vmatpush2.bf16.xpose.msra.mxu0 0
        %464 = vmatprep.subr.bf16.mxu0 0
        %465 = vmatpush2.bf16.xpose.msra.mxu0 0
        %466 = vmatprep.subr.bf16.mxu0 0
        %467 = vmatpush2.bf16.xpose.msra.mxu0 0
        %468 = vmatprep.subr.bf16.mxu0 0
        %469 = vmatpush2.bf16.xpose.msra.mxu0 0
        %470 = vmatprep.subr.bf16.mxu0 0
        %471 = vmatpush2.bf16.xpose.msra.mxu0 0
        %472 = vmatprep.mubr.bf16.mxu0 0
        %473 = vmatmul.mubr.bf16.gmra.mxu0 %v435
        %v474 = vpop.f32.mrf.mxu0
        %v475 = vadd.f32 0.0, %v474
        %v476 = vpop.f32.mrf.mxu0
        %v477 = vpop.f32.mrf.mxu0
        %v478 = vadd.f32 0.0, %v477
        %v479 = vpop.f32.mrf.mxu0
        %480 = vdwg.mxu0
        %vm481 = vcmask 130048
        %v482 = vsel %vm481, %v475, -inf
        %483 = vmax.xlane.f32.xlu0 %v482
        %v484 = vpop.xlane.xlu0 %483
        %v485 = vsel %vm481, %v478, -inf
        %486 = vmax.xlane.f32.xlu0 %v485
        %v487 = vpop.xlane.xlu0 %486
        %v488 = vsub.f32 %v475, %v484
        %v489 = vsub.f32 %v478, %v487
        %v490 = vmul.f32 %v488, 1.442695
        %v491 = vpow.pop %v490
        %v492 = vmul.f32 %v489, 1.442695
        %v493 = vpow.pop %v492
        %v494 = vsel %vm481, %v491, 0.0
        %495 = vadd.xlane.f32.xlu0 %v494
        %v496 = vpop.xlane.xlu0 %495
        %v497 = vsel %vm481, %v493, 0.0
        %498 = vadd.xlane.f32.xlu0 %v497
        %v499 = vpop.xlane.xlu0 %498
        %v500 = vrcp.pop %v496
        %v501 = vrcp.pop %v499
        %v502 = vmul.f32 %v491, %v500
        %v503 = vmul.f32 %v493, %v501
        %v504 = vpack.c.bf16 %v503, %v502
        %v507 = vunpack.c.l.b16 %v421
        %v508 = vunpack.c.l.b16 %v422
        %v509 = vpack.c.b16 %v508, %v507
        %v512 = vsel %vm481, %v504, 0
        %514 = vmatprep.subr.bf16.mxu0 0
        %515 = vmatpush1.bf16.msra.mxu0 0
        %516 = vmatprep.subr.bf16.mxu0 0
        %517 = vmatpush1.bf16.msra.mxu0 0
        %518 = vmatprep.subr.bf16.mxu0 0
        %519 = vmatpush1.bf16.msra.mxu0 0
        %520 = vmatprep.subr.bf16.mxu0 0
        %521 = vmatpush1.bf16.msra.mxu0 0
        %522 = vmatprep.subr.bf16.mxu0 0
        %523 = vmatpush1.bf16.msra.mxu0 0
        %524 = vmatprep.subr.bf16.mxu0 0
        %525 = vmatpush1.bf16.msra.mxu0 0
        %526 = vmatprep.subr.bf16.mxu0 0
        %527 = vmatpush1.bf16.msra.mxu0 0
        %528 = vmatprep.subr.bf16.mxu0 0
        %529 = vmatpush1.bf16.msra.mxu0 %v509
        %530 = vmatprep.subr.bf16.mxu0 0
        %531 = vmatpush2.bf16.msra.mxu0 0
        %532 = vmatprep.subr.bf16.mxu0 0
        %533 = vmatpush2.bf16.msra.mxu0 0
        %534 = vmatprep.subr.bf16.mxu0 0
        %535 = vmatpush2.bf16.msra.mxu0 0
        %536 = vmatprep.subr.bf16.mxu0 0
        %537 = vmatpush2.bf16.msra.mxu0 0
        %538 = vmatprep.subr.bf16.mxu0 0
        %539 = vmatpush2.bf16.msra.mxu0 0
        %540 = vmatprep.subr.bf16.mxu0 0
        %541 = vmatpush2.bf16.msra.mxu0 0
        %542 = vmatprep.subr.bf16.mxu0 0
        %543 = vmatpush2.bf16.msra.mxu0 0
        %544 = vmatprep.subr.bf16.mxu0 0
        %545 = vmatpush2.bf16.msra.mxu0 0
        %546 = vmatprep.mubr.bf16.mxu0 0
        %547 = vmatmul.mubr.bf16.gmra.mxu0 %v512
        %v548 = vpop.f32.mrf.mxu0
        %v549 = vadd.f32 0.0, %v548
        %v550 = vpop.f32.mrf.mxu0
        %v551 = vpop.f32.mrf.mxu0
        %v552 = vadd.f32 0.0, %v551
        %v553 = vpop.f32.mrf.mxu0
        %554 = vdwg.mxu0
        %v555 = vpack.c.bf16 %v552, %v549
        %v557 = vunpack.c.l.b16 %v555
        %v558 = vunpack.c.h.b16 %v555
        %v559 = vpack.c.b16 %v557, %v557
        %v560 = vpack.c.b16 %v558, %v558
        %vm563 = vcmask 257024
        %564 = vst.msk [vmem:[%s414] sm:$0xf] %vm563, %v559
        %565 = vst.msk [vmem:[%s414 + $0x4] sm:$0xf] %vm563, %v560
        %566 = vrot.lane.b32.xlu0 %v427, 96
        %v567 = vpop.permute.xlu0 %566
        %568 = vrot.lane.b32.xlu0 %v432, 96
        %v569 = vpop.permute.xlu0 %568
        %v571 = vsel %vm433, %v567, 0
        %v574 = vsel %vm433, %v569, 0
        %576 = vmatprep.subr.bf16.mxu0 0
        %577 = vmatpush1.bf16.xpose.msra.mxu0 0
        %578 = vmatprep.subr.bf16.mxu0 0
        %579 = vmatpush1.bf16.xpose.msra.mxu0 0
        %580 = vmatprep.subr.bf16.mxu0 0
        %581 = vmatpush1.bf16.xpose.msra.mxu0 0
        %582 = vmatprep.subr.bf16.mxu0 0
        %583 = vmatpush1.bf16.xpose.msra.mxu0 0
        %584 = vmatprep.subr.bf16.mxu0 0
        %585 = vmatpush1.bf16.xpose.msra.mxu0 0
        %586 = vmatprep.subr.bf16.mxu0 0
        %587 = vmatpush1.bf16.xpose.msra.mxu0 0
        %588 = vmatprep.subr.bf16.mxu0 0
        %589 = vmatpush1.bf16.xpose.msra.mxu0 0
        %590 = vmatprep.subr.bf16.mxu0 0
        %591 = vmatpush1.bf16.xpose.msra.mxu0 %v574
        %592 = vmatprep.subr.bf16.mxu0 0
        %593 = vmatpush2.bf16.xpose.msra.mxu0 0
        %594 = vmatprep.subr.bf16.mxu0 0
        %595 = vmatpush2.bf16.xpose.msra.mxu0 0
        %596 = vmatprep.subr.bf16.mxu0 0
        %597 = vmatpush2.bf16.xpose.msra.mxu0 0
        %598 = vmatprep.subr.bf16.mxu0 0
        %599 = vmatpush2.bf16.xpose.msra.mxu0 0
        %600 = vmatprep.subr.bf16.mxu0 0
        %601 = vmatpush2.bf16.xpose.msra.mxu0 0
        %602 = vmatprep.subr.bf16.mxu0 0
        %603 = vmatpush2.bf16.xpose.msra.mxu0 0
        %604 = vmatprep.subr.bf16.mxu0 0
        %605 = vmatpush2.bf16.xpose.msra.mxu0 0
        %606 = vmatprep.subr.bf16.mxu0 0
        %607 = vmatpush2.bf16.xpose.msra.mxu0 0
        %608 = vmatprep.mubr.bf16.mxu0 0
        %609 = vmatmul.mubr.bf16.gmra.mxu0 %v571
        %v610 = vpop.f32.mrf.mxu0
        %v611 = vadd.f32 0.0, %v610
        %v612 = vpop.f32.mrf.mxu0
        %v613 = vpop.f32.mrf.mxu0
        %v614 = vadd.f32 0.0, %v613
        %v615 = vpop.f32.mrf.mxu0
        %616 = vdwg.mxu0
        %v617 = vsel %vm481, %v611, -inf
        %618 = vmax.xlane.f32.xlu0 %v617
        %v619 = vpop.xlane.xlu0 %618
        %v620 = vsel %vm481, %v614, -inf
        %621 = vmax.xlane.f32.xlu0 %v620
        %v622 = vpop.xlane.xlu0 %621
        %v623 = vsub.f32 %v611, %v619
        %v624 = vsub.f32 %v614, %v622
        %v625 = vmul.f32 %v623, 1.442695
        %v626 = vpow.pop %v625
        %v627 = vmul.f32 %v624, 1.442695
        %v628 = vpow.pop %v627
        %v629 = vsel %vm481, %v626, 0.0
        %630 = vadd.xlane.f32.xlu0 %v629
        %v631 = vpop.xlane.xlu0 %630
        %v632 = vsel %vm481, %v628, 0.0
        %633 = vadd.xlane.f32.xlu0 %v632
        %v634 = vpop.xlane.xlu0 %633
        %v635 = vrcp.pop %v631
        %v636 = vrcp.pop %v634
        %v637 = vmul.f32 %v626, %v635
        %v638 = vmul.f32 %v628, %v636
        %v639 = vpack.c.bf16 %v638, %v637
        %640 = vrot.lane.b32.xlu0 %v509, 96
        %v641 = vpop.permute.xlu0 %640
        %v644 = vsel %vm481, %v639, 0
        %646 = vmatprep.subr.bf16.mxu0 0
        %647 = vmatpush1.bf16.msra.mxu0 0
        %648 = vmatprep.subr.bf16.mxu0 0
        %649 = vmatpush1.bf16.msra.mxu0 0
        %650 = vmatprep.subr.bf16.mxu0 0
        %651 = vmatpush1.bf16.msra.mxu0 0
        %652 = vmatprep.subr.bf16.mxu0 0
        %653 = vmatpush1.bf16.msra.mxu0 0
        %654 = vmatprep.subr.bf16.mxu0 0
        %655 = vmatpush1.bf16.msra.mxu0 0
        %656 = vmatprep.subr.bf16.mxu0 0
        %657 = vmatpush1.bf16.msra.mxu0 0
        %658 = vmatprep.subr.bf16.mxu0 0
        %659 = vmatpush1.bf16.msra.mxu0 0
        %660 = vmatprep.subr.bf16.mxu0 0
        %661 = vmatpush1.bf16.msra.mxu0 %v641
        %662 = vmatprep.subr.bf16.mxu0 0
        %663 = vmatpush2.bf16.msra.mxu0 0
        %664 = vmatprep.subr.bf16.mxu0 0
        %665 = vmatpush2.bf16.msra.mxu0 0
        %666 = vmatprep.subr.bf16.mxu0 0
        %667 = vmatpush2.bf16.msra.mxu0 0
        %668 = vmatprep.subr.bf16.mxu0 0
        %669 = vmatpush2.bf16.msra.mxu0 0
        %670 = vmatprep.subr.bf16.mxu0 0
        %671 = vmatpush2.bf16.msra.mxu0 0
        %672 = vmatprep.subr.bf16.mxu0 0
        %673 = vmatpush2.bf16.msra.mxu0 0
        %674 = vmatprep.subr.bf16.mxu0 0
        %675 = vmatpush2.bf16.msra.mxu0 0
        %676 = vmatprep.subr.bf16.mxu0 0
        %677 = vmatpush2.bf16.msra.mxu0 0
        %678 = vmatprep.mubr.bf16.mxu0 0
        %679 = vmatmul.mubr.bf16.gmra.mxu0 %v644
        %v680 = vpop.f32.mrf.mxu0
        %v681 = vadd.f32 0.0, %v680
        %v682 = vpop.f32.mrf.mxu0
        %v683 = vpop.f32.mrf.mxu0
        %v684 = vadd.f32 0.0, %v683
        %v685 = vpop.f32.mrf.mxu0
        %686 = vdwg.mxu0
        %v687 = vpack.c.bf16 %v684, %v681
        %v689 = vunpack.c.l.b16 %v687
        %v690 = vunpack.c.h.b16 %v687
        %v691 = vpack.c.b16 %v689, %v689
        %v692 = vpack.c.b16 %v690, %v690
        %693 = vrot.lane.b32.xlu0 %v691, 32
        %v694 = vpop.permute.xlu0 %693
        %695 = vrot.lane.b32.xlu0 %v692, 32
        %v696 = vpop.permute.xlu0 %695
        %vm699 = vcmask 519424
        %700 = vst.msk [vmem:[%s414] sm:$0xf] %vm699, %v694
        %701 = vst.msk [vmem:[%s414 + $0x4] sm:$0xf] %vm699, %v696
        %702 = vrot.lane.b32.xlu0 %v427, 64
        %v703 = vpop.permute.xlu0 %702
        %704 = vrot.lane.b32.xlu0 %v432, 64
        %v705 = vpop.permute.xlu0 %704
        %v707 = vsel %vm433, %v703, 0
        %v710 = vsel %vm433, %v705, 0
        %712 = vmatprep.subr.bf16.mxu0 0
        %713 = vmatpush1.bf16.xpose.msra.mxu0 0
        %714 = vmatprep.subr.bf16.mxu0 0
        %715 = vmatpush1.bf16.xpose.msra.mxu0 0
        %716 = vmatprep.subr.bf16.mxu0 0
        %717 = vmatpush1.bf16.xpose.msra.mxu0 0
        %718 = vmatprep.subr.bf16.mxu0 0
        %719 = vmatpush1.bf16.xpose.msra.mxu0 0
        %720 = vmatprep.subr.bf16.mxu0 0
        %721 = vmatpush1.bf16.xpose.msra.mxu0 0
        %722 = vmatprep.subr.bf16.mxu0 0
        %723 = vmatpush1.bf16.xpose.msra.mxu0 0
        %724 = vmatprep.subr.bf16.mxu0 0
        %725 = vmatpush1.bf16.xpose.msra.mxu0 0
        %726 = vmatprep.subr.bf16.mxu0 0
        %727 = vmatpush1.bf16.xpose.msra.mxu0 %v710
        %728 = vmatprep.subr.bf16.mxu0 0
        %729 = vmatpush2.bf16.xpose.msra.mxu0 0
        %730 = vmatprep.subr.bf16.mxu0 0
        %731 = vmatpush2.bf16.xpose.msra.mxu0 0
        %732 = vmatprep.subr.bf16.mxu0 0
        %733 = vmatpush2.bf16.xpose.msra.mxu0 0
        %734 = vmatprep.subr.bf16.mxu0 0
        %735 = vmatpush2.bf16.xpose.msra.mxu0 0
        %736 = vmatprep.subr.bf16.mxu0 0
        %737 = vmatpush2.bf16.xpose.msra.mxu0 0
        %738 = vmatprep.subr.bf16.mxu0 0
        %739 = vmatpush2.bf16.xpose.msra.mxu0 0
        %740 = vmatprep.subr.bf16.mxu0 0
        %741 = vmatpush2.bf16.xpose.msra.mxu0 0
        %742 = vmatprep.subr.bf16.mxu0 0
        %743 = vmatpush2.bf16.xpose.msra.mxu0 0
        %744 = vmatprep.mubr.bf16.mxu0 0
        %745 = vmatmul.mubr.bf16.gmra.mxu0 %v707
        %v746 = vpop.f32.mrf.mxu0
        %v747 = vadd.f32 0.0, %v746
        %v748 = vpop.f32.mrf.mxu0
        %v749 = vpop.f32.mrf.mxu0
        %v750 = vadd.f32 0.0, %v749
        %v751 = vpop.f32.mrf.mxu0
        %752 = vdwg.mxu0
        %v753 = vsel %vm481, %v747, -inf
        %754 = vmax.xlane.f32.xlu0 %v753
        %v755 = vpop.xlane.xlu0 %754
        %v756 = vsel %vm481, %v750, -inf
        %757 = vmax.xlane.f32.xlu0 %v756
        %v758 = vpop.xlane.xlu0 %757
        %v759 = vsub.f32 %v747, %v755
        %v760 = vsub.f32 %v750, %v758
        %v761 = vmul.f32 %v759, 1.442695
        %v762 = vpow.pop %v761
        %v763 = vmul.f32 %v760, 1.442695
        %v764 = vpow.pop %v763
        %v765 = vsel %vm481, %v762, 0.0
        %766 = vadd.xlane.f32.xlu0 %v765
        %v767 = vpop.xlane.xlu0 %766
        %v768 = vsel %vm481, %v764, 0.0
        %769 = vadd.xlane.f32.xlu0 %v768
        %v770 = vpop.xlane.xlu0 %769
        %v771 = vrcp.pop %v767
        %v772 = vrcp.pop %v770
        %v773 = vmul.f32 %v762, %v771
        %v774 = vmul.f32 %v764, %v772
        %v775 = vpack.c.bf16 %v774, %v773
        %776 = vrot.lane.b32.xlu0 %v509, 64
        %v777 = vpop.permute.xlu0 %776
        %v780 = vsel %vm481, %v775, 0
        %782 = vmatprep.subr.bf16.mxu0 0
        %783 = vmatpush1.bf16.msra.mxu0 0
        %784 = vmatprep.subr.bf16.mxu0 0
        %785 = vmatpush1.bf16.msra.mxu0 0
        %786 = vmatprep.subr.bf16.mxu0 0
        %787 = vmatpush1.bf16.msra.mxu0 0
        %788 = vmatprep.subr.bf16.mxu0 0
        %789 = vmatpush1.bf16.msra.mxu0 0
        %790 = vmatprep.subr.bf16.mxu0 0
        %791 = vmatpush1.bf16.msra.mxu0 0
        %792 = vmatprep.subr.bf16.mxu0 0
        %793 = vmatpush1.bf16.msra.mxu0 0
        %794 = vmatprep.subr.bf16.mxu0 0
        %795 = vmatpush1.bf16.msra.mxu0 0
        %796 = vmatprep.subr.bf16.mxu0 0
        %797 = vmatpush1.bf16.msra.mxu0 %v777
        %798 = vmatprep.subr.bf16.mxu0 0
        %799 = vmatpush2.bf16.msra.mxu0 0
        %800 = vmatprep.subr.bf16.mxu0 0
        %801 = vmatpush2.bf16.msra.mxu0 0
        %802 = vmatprep.subr.bf16.mxu0 0
        %803 = vmatpush2.bf16.msra.mxu0 0
        %804 = vmatprep.subr.bf16.mxu0 0
        %805 = vmatpush2.bf16.msra.mxu0 0
        %806 = vmatprep.subr.bf16.mxu0 0
        %807 = vmatpush2.bf16.msra.mxu0 0
        %808 = vmatprep.subr.bf16.mxu0 0
        %809 = vmatpush2.bf16.msra.mxu0 0
        %810 = vmatprep.subr.bf16.mxu0 0
        %811 = vmatpush2.bf16.msra.mxu0 0
        %812 = vmatprep.subr.bf16.mxu0 0
        %813 = vmatpush2.bf16.msra.mxu0 0
        %814 = vmatprep.mubr.bf16.mxu0 0
        %815 = vmatmul.mubr.bf16.gmra.mxu0 %v780
        %v816 = vpop.f32.mrf.mxu0
        %v817 = vadd.f32 0.0, %v816
        %v818 = vpop.f32.mrf.mxu0
        %v819 = vpop.f32.mrf.mxu0
        %v820 = vadd.f32 0.0, %v819
        %v821 = vpop.f32.mrf.mxu0
        %822 = vdwg.mxu0
        %v823 = vpack.c.bf16 %v820, %v817
        %v825 = vunpack.c.l.b16 %v823
        %v826 = vunpack.c.h.b16 %v823
        %v827 = vpack.c.b16 %v825, %v825
        %v828 = vpack.c.b16 %v826, %v826
        %829 = vrot.lane.b32.xlu0 %v827, 64
        %v830 = vpop.permute.xlu0 %829
        %831 = vrot.lane.b32.xlu0 %v828, 64
        %v832 = vpop.permute.xlu0 %831
        %vm835 = vcmask 781824
        %836 = vst.msk [vmem:[%s414] sm:$0xf] %vm835, %v830
        %837 = vst.msk [vmem:[%s414 + $0x4] sm:$0xf] %vm835, %v832
        %838 = vrot.lane.b32.xlu0 %v427, 32
        %v839 = vpop.permute.xlu0 %838
        %840 = vrot.lane.b32.xlu0 %v432, 32
        %v841 = vpop.permute.xlu0 %840
        %v843 = vsel %vm433, %v839, 0
        %v846 = vsel %vm433, %v841, 0
        %848 = vmatprep.subr.bf16.mxu0 0
        %849 = vmatpush1.bf16.xpose.msra.mxu0 0
        %850 = vmatprep.subr.bf16.mxu0 0
        %851 = vmatpush1.bf16.xpose.msra.mxu0 0
        %852 = vmatprep.subr.bf16.mxu0 0
        %853 = vmatpush1.bf16.xpose.msra.mxu0 0
        %854 = vmatprep.subr.bf16.mxu0 0
        %855 = vmatpush1.bf16.xpose.msra.mxu0 0
        %856 = vmatprep.subr.bf16.mxu0 0
        %857 = vmatpush1.bf16.xpose.msra.mxu0 0
        %858 = vmatprep.subr.bf16.mxu0 0
        %859 = vmatpush1.bf16.xpose.msra.mxu0 0
        %860 = vmatprep.subr.bf16.mxu0 0
        %861 = vmatpush1.bf16.xpose.msra.mxu0 0
        %862 = vmatprep.subr.bf16.mxu0 0
        %863 = vmatpush1.bf16.xpose.msra.mxu0 %v846
        %864 = vmatprep.subr.bf16.mxu0 0
        %865 = vmatpush2.bf16.xpose.msra.mxu0 0
        %866 = vmatprep.subr.bf16.mxu0 0
        %867 = vmatpush2.bf16.xpose.msra.mxu0 0
        %868 = vmatprep.subr.bf16.mxu0 0
        %869 = vmatpush2.bf16.xpose.msra.mxu0 0
        %870 = vmatprep.subr.bf16.mxu0 0
        %871 = vmatpush2.bf16.xpose.msra.mxu0 0
        %872 = vmatprep.subr.bf16.mxu0 0
        %873 = vmatpush2.bf16.xpose.msra.mxu0 0
        %874 = vmatprep.subr.bf16.mxu0 0
        %875 = vmatpush2.bf16.xpose.msra.mxu0 0
        %876 = vmatprep.subr.bf16.mxu0 0
        %877 = vmatpush2.bf16.xpose.msra.mxu0 0
        %878 = vmatprep.subr.bf16.mxu0 0
        %879 = vmatpush2.bf16.xpose.msra.mxu0 0
        %880 = vmatprep.mubr.bf16.mxu0 0
        %881 = vmatmul.mubr.bf16.gmra.mxu0 %v843
        %v882 = vpop.f32.mrf.mxu0
        %v883 = vadd.f32 0.0, %v882
        %v884 = vpop.f32.mrf.mxu0
        %v885 = vpop.f32.mrf.mxu0
        %v886 = vadd.f32 0.0, %v885
        %v887 = vpop.f32.mrf.mxu0
        %888 = vdwg.mxu0
        %v889 = vsel %vm481, %v883, -inf
        %890 = vmax.xlane.f32.xlu0 %v889
        %v891 = vpop.xlane.xlu0 %890
        %v892 = vsel %vm481, %v886, -inf
        %893 = vmax.xlane.f32.xlu0 %v892
        %v894 = vpop.xlane.xlu0 %893
        %v895 = vsub.f32 %v883, %v891
        %v896 = vsub.f32 %v886, %v894
        %v897 = vmul.f32 %v895, 1.442695
        %v898 = vpow.pop %v897
        %v899 = vmul.f32 %v896, 1.442695
        %v900 = vpow.pop %v899
        %v901 = vsel %vm481, %v898, 0.0
        %902 = vadd.xlane.f32.xlu0 %v901
        %v903 = vpop.xlane.xlu0 %902
        %v904 = vsel %vm481, %v900, 0.0
        %905 = vadd.xlane.f32.xlu0 %v904
        %v906 = vpop.xlane.xlu0 %905
        %v907 = vrcp.pop %v903
        %v908 = vrcp.pop %v906
        %v909 = vmul.f32 %v898, %v907
        %v910 = vmul.f32 %v900, %v908
        %v911 = vpack.c.bf16 %v910, %v909
        %912 = vrot.lane.b32.xlu0 %v509, 32
        %v913 = vpop.permute.xlu0 %912
        %v916 = vsel %vm481, %v911, 0
        %918 = vmatprep.subr.bf16.mxu0 0
        %919 = vmatpush1.bf16.msra.mxu0 0
        %920 = vmatprep.subr.bf16.mxu0 0
        %921 = vmatpush1.bf16.msra.mxu0 0
        %922 = vmatprep.subr.bf16.mxu0 0
        %923 = vmatpush1.bf16.msra.mxu0 0
        %924 = vmatprep.subr.bf16.mxu0 0
        %925 = vmatpush1.bf16.msra.mxu0 0
        %926 = vmatprep.subr.bf16.mxu0 0
        %927 = vmatpush1.bf16.msra.mxu0 0
        %928 = vmatprep.subr.bf16.mxu0 0
        %929 = vmatpush1.bf16.msra.mxu0 0
        %930 = vmatprep.subr.bf16.mxu0 0
        %931 = vmatpush1.bf16.msra.mxu0 0
        %932 = vmatprep.subr.bf16.mxu0 0
        %933 = vmatpush1.bf16.msra.mxu0 %v913
        %934 = vmatprep.subr.bf16.mxu0 0
        %935 = vmatpush2.bf16.msra.mxu0 0
        %936 = vmatprep.subr.bf16.mxu0 0
        %937 = vmatpush2.bf16.msra.mxu0 0
        %938 = vmatprep.subr.bf16.mxu0 0
        %939 = vmatpush2.bf16.msra.mxu0 0
        %940 = vmatprep.subr.bf16.mxu0 0
        %941 = vmatpush2.bf16.msra.mxu0 0
        %942 = vmatprep.subr.bf16.mxu0 0
        %943 = vmatpush2.bf16.msra.mxu0 0
        %944 = vmatprep.subr.bf16.mxu0 0
        %945 = vmatpush2.bf16.msra.mxu0 0
        %946 = vmatprep.subr.bf16.mxu0 0
        %947 = vmatpush2.bf16.msra.mxu0 0
        %948 = vmatprep.subr.bf16.mxu0 0
        %949 = vmatpush2.bf16.msra.mxu0 0
        %950 = vmatprep.mubr.bf16.mxu0 0
        %951 = vmatmul.mubr.bf16.gmra.mxu0 %v916
        %v952 = vpop.f32.mrf.mxu0
        %v953 = vadd.f32 0.0, %v952
        %v954 = vpop.f32.mrf.mxu0
        %v955 = vpop.f32.mrf.mxu0
        %v956 = vadd.f32 0.0, %v955
        %v957 = vpop.f32.mrf.mxu0
        %958 = vdwg.mxu0
        %v959 = vpack.c.bf16 %v956, %v953
        %v961 = vunpack.c.l.b16 %v959
        %v962 = vunpack.c.h.b16 %v959
        %v963 = vpack.c.b16 %v961, %v961
        %v964 = vpack.c.b16 %v962, %v962
        %965 = vrot.lane.b32.xlu0 %v963, 96
        %v966 = vpop.permute.xlu0 %965
        %967 = vrot.lane.b32.xlu0 %v964, 96
        %v968 = vpop.permute.xlu0 %967
        %vm971 = vcmask 1044224
        %972 = vst.msk [vmem:[%s414] sm:$0xf] %vm971, %v966
        %973 = vst.msk [vmem:[%s414 + $0x4] sm:$0xf] %vm971, %v968
        %s974 = smul.u32 2, %s21
        %p975 = scmp.lt.s32.totalorder %s19, 1
        %s976 = scalar_select %p975, %s19, 1
        %p977 = scmp.lt.s32.totalorder %s974, 1
        %s978 = scalar_select %p977, %s974, 1
        %p979 = scmp.lt.s32.totalorder %s20, 0
        %s980 = scalar_select %p979, %s20, 0
        %s981 = sadd.s32 %s980, %s978
        %s982 = smul.addr %s976, 2
        %s983 = sadd.s32 %s981, %s982
        %s984 = smul.addr %s983, 4
        %s985 = scalar_lea.vmem %s3, %s984
        // Predicated region
        $region156: #{block_forward.4} parent=142 // pred_check
          %p986 = pneg %p145
        $region157: #{block_forward.4} parent=142 // pred_check_branch
          %988 = sbr.rel (%p986) target = $region159
        $region158: #{block_forward.4} parent=142 // pred_region
          %s989 = smul.u32 2, %s21
        $region159: #{block_forward.4} parent=142 // pred_fallthru
          _
      $region143: #{block_forward.4} parent=5 // pred_fallthru
        _
      %p990 = scmp.le.s32.totalorder 2, %s9
      // Predicated region
      $region160: #{block_forward.4} parent=5 // pred_check
        %p991 = pneg %p990
      $region161: #{block_forward.4} parent=5 // pred_check_branch
        %993 = sbr.rel (%p991) target = $region163
      $region162: #{block_forward.4} parent=5 // pred_region
        %s994 = ssub.s32 %s9, 2
        // Predicated region
        $region164: #{block_forward.4} parent=162 // pred_check
          %p995 = pneg %p151
        $region165: #{block_forward.4} parent=162 // pred_check_branch
          %997 = sbr.rel (%p995) target = $region167
        $region166: #{block_forward.4} parent=162 // pred_region
          %s998 = smul.u32 2, %s24
          %p999 = scmp.lt.s32.totalorder %s22, 1
          %s1000 = scalar_select %p999, %s22, 1
          %p1001 = scmp.lt.s32.totalorder %s998, 1
          %s1002 = scalar_select %p1001, %s998, 1
          %p1003 = scmp.lt.s32.totalorder %s23, 0
          %s1004 = scalar_select %p1003, %s23, 0
          %s1005 = sadd.s32 %s1004, %s1002
          %s1006 = smul.addr %s1000, 2
          %s1007 = sadd.s32 %s1005, %s1006
          %s1008 = smul.addr %s1007, 4
          %s1009 = scalar_lea.vmem %s3, %s1008
        $region167: #{block_forward.4} parent=162 // pred_fallthru
          _
      $region163: #{block_forward.4} parent=5 // pred_fallthru
        _
    $region6: #{block_forward.4} parent=1 // loop_footer
      %s13 = sadd.s32 1, %s9
    $region7: #{block_forward.4} parent=1 // loop_footer_branch
      %8 = sbr.rel target = $region3
    $region8: #{block_forward.4} parent=1 // loop_exit
      _

// kernel: block_forward.5
$region0: #{block_forward.5}
  #allocation0 [shape = 'u32[]', space=smem, size = 0x4, offset = 0x4, fixed_abs, tag = 'smem constant byte address 0x4 - core index']
  #allocation1 [shape = 'u32[144,128]{1,0:T(1,128)}', space=vmem, size = 0x12000, scoped, tag = 'internal scratch']
  %s0 = inlined_call_operand.hbm [shape: f32[2,16,128], index: 0, kind: input, shape index: {}, may-alias: {0,12}]
  %s1 = inlined_call_operand.vmem [shape: bf16[2,16,128], index: 1, kind: input, shape index: {}]
  %s2 = inlined_call_operand.hbm [shape: bf16[128,128], index: 2, kind: input, shape index: {}]
  %s3 = inlined_call_operand.hbm [shape: f32[1,128], index: 3, kind: input, shape index: {}]
  %s4 = inlined_call_operand.hbm [shape: f32[1,128], index: 4, kind: input, shape index: {}]
  %s5 = inlined_call_operand.hbm [shape: f32[1,128], index: 5, kind: input, shape index: {}]
  %s6 = inlined_call_operand.hbm [shape: f32[1,128], index: 6, kind: input, shape index: {}]
  %s7 = inlined_call_operand.vmem [shape: bf16[128,512], index: 7, kind: input, shape index: {}]
  %s8 = inlined_call_operand.hbm [shape: f32[1,512], index: 8, kind: input, shape index: {}]
  %s9 = inlined_call_operand.vmem [shape: bf16[512,128], index: 9, kind: input, shape index: {}]
  %s10 = inlined_call_operand.hbm [shape: f32[1,128], index: 10, kind: input, shape index: {}]
  %s11 = inlined_call_operand.vmem [shape: f32[1,128], index: 11, kind: input, shape index: {}]
  %s12 = inlined_call_operand.hbm [shape: f32[2,16,128], index: 12, kind: output, shape index: {}, may-alias: {0,12}]
  %s13 = sld [smem:[#allocation0]]
  $region113: #{block_forward.5} parent=0
    _
  %s15 = ssub.s32 1, %s13
  %s16 = scalar_select 0, %s15, %s13
  $region1: #{block_forward.5} parent=0
    #allocation2 [shape = 'u8[16384]{0}', space=vmem, size = 0x4000, scoped, tag = 'input window, operand 0']
    #allocation3 [shape = 's32[2]{0}', space=sflag, size = 0x8, scoped, tag = 'scoped memory for block_forward.5']
    #allocation4 [shape = 's32[2]{0}', space=sflag, size = 0x8, scoped, tag = 'scoped memory for block_forward.5']
    #allocation5 [shape = 'u8[32768]{0}', space=vmem, size = 0x8000, scoped, tag = 'input window, operand 2, single buffered']
    #allocation6 [shape = 's32[1]{0}', space=sflag, size = 0x4, scoped, tag = 'scoped memory for block_forward.5']
    #allocation7 [shape = 'u8[512]{0}', space=vmem, size = 0x400, scoped, tag = 'input window, operand 3, single buffered']
    #allocation8 [shape = 'u8[512]{0}', space=vmem, size = 0x400, scoped, tag = 'input window, operand 4, single buffered']
    #allocation9 [shape = 's32[1]{0}', space=sflag, size = 0x4, scoped, tag = 'scoped memory for block_forward.5']
    #allocation10 [shape = 'u8[512]{0}', space=vmem, size = 0x400, scoped, tag = 'input window, operand 5, single buffered']
    #allocation11 [shape = 'u8[512]{0}', space=vmem, size = 0x400, scoped, tag = 'input window, operand 6, single buffered']
    #allocation12 [shape = 's32[1]{0}', space=sflag, size = 0x4, scoped, tag = 'scoped memory for block_forward.5']
    #allocation13 [shape = 'u8[2048]{0}', space=vmem, size = 0x800, scoped, tag = 'input window, operand 8, single buffered']
    #allocation14 [shape = 'u8[512]{0}', space=vmem, size = 0x400, scoped, tag = 'input window, operand 10, single buffered']
    #allocation15 [shape = 's32[1]{0}', space=sflag, size = 0x4, scoped, tag = 'scoped memory for block_forward.5']
    #allocation16 [shape = 'u8[16384]{0}', space=vmem, size = 0x4000, scoped, tag = 'output window, operand 0']
    %17 = vsyncpa [#allocation3], 0
    %s18 = scalar_lea.sflag [#allocation3], 1
    %19 = vsyncpa %s18, 0
    %20 = vsyncpa [#allocation6], 0
    %21 = vsyncpa [#allocation9], 0
    %22 = vsyncpa [#allocation12], 0
    %23 = vsyncpa [#allocation15], 0
    %24 = vsyncpa [#allocation4], 0
    %s25 = scalar_lea.sflag [#allocation4], 1
    %26 = vsyncpa %s25, 0
    loop: start=0, step=1, limit=4
    $region2: #{block_forward.5} parent=1 // loop_pre_header
      _
    $region3: #{block_forward.5} parent=1 // loop_header
      %s28 = sphi 0, %s32
      %p29 = scmp.ge.s32.totalorder %s28, 4
      %s35 = sphi 0, %s47
      %s36 = sphi 0, %s43
      %s37 = sphi 0, %s35
      %s38 = sphi 0, %s36
      %s39 = sphi 0, %s37
      %s40 = sphi 0, %s38
      %s52 = sphi 0, %s54
      %s55 = sphi 0, %s52
      %s56 = sphi 0, %s55
      %s72 = sphi 0, %s56
      %s80 = sphi 0, %s82
      %s83 = sphi 0, %s80
      %s84 = sphi 0, %s83
      %s100 = sphi 0, %s84
      %s104 = sphi 0, %s104
      %s106 = sphi 0, %s104
      %s107 = sphi 0, %s106
      %s121 = sphi 0, %s107
      %s125 = sphi 0, %s125
      %s127 = sphi 0, %s125
      %s128 = sphi 0, %s127
      %s142 = sphi 0, %s128
      %s146 = sphi 0, %s146
      %s148 = sphi 0, %s146
      %s149 = sphi 0, %s148
      %s163 = sphi 0, %s149
      %s167 = sphi 0, %s167
      %s169 = sphi 0, %s167
      %s170 = sphi 0, %s169
      %s184 = sphi 0, %s170
      %s188 = sphi 0, %s188
      %s190 = sphi 0, %s188
      %s191 = sphi 0, %s190
      %s205 = sphi 0, %s191
      %s209 = sphi 0, %s209
      %s211 = sphi 0, %s209
      %s212 = sphi 0, %s211
      %s226 = sphi 0, %s212
      %s230 = sphi 0, %s230
      %s232 = sphi 0, %s230
      %s233 = sphi 0, %s232
      %s247 = sphi 0, %s233
      %s251 = sphi 0, %s251
      %s253 = sphi 0, %s251
      %s254 = sphi 0, %s253
      %s268 = sphi 0, %s254
      %s272 = sphi 0, %s272
      %s274 = sphi 0, %s272
      %s275 = sphi 0, %s274
      %s289 = sphi 0, %s275
      %s293 = sphi 0, %s293
      %s295 = sphi 0, %s293
      %s296 = sphi 0, %s295
      %s310 = sphi 0, %s296
      %s318 = sphi 0, %s320
      %s321 = sphi 0, %s318
      %s322 = sphi 0, %s321
      %s338 = sphi 0, %s322
    $region4: #{block_forward.5} parent=1 // loop_header_branch
      %31 = sbr.rel (%p29) target = $region8
    $region5: #{block_forward.5} parent=1 // loop_body
      %s33 = ssub.s32 %s28, 1
      %s34 = ssub.s32 %s28, 2
      %s41 = sadd.s32 1, %s36
      %p42 = scmp.ge.s32.totalorder %s41, 1
      %s43 = scalar_select %p42, 0, %s41
      %s44 = sadd.s32 1, %s35
      %s45 = scalar_select %p42, %s44, %s35
      %p46 = scmp.ge.s32.totalorder %s45, 2
      %s47 = scalar_select %p46, 0, %s45
      %s48 = ssub.s32 %s35, %s47
      %s49 = ssub.s32 %s36, %s43
      %s50 = sor.u32 %s48, %s49
      %p51 = scmp.eq.s32.totalorder %s50, 0
      %s53 = sadd.s32 %s52, 1
      %s54 = scalar_select %p51, %s52, %s53
      %p57 = pneg %p51
      %p58 = scmp.eq.s32.totalorder %s28, 1
      %p59 = por %p57, %p58
      %p60 = scmp.ne.s32.totalorder %s52, %s55
      %p61 = scmp.eq.s32.totalorder %s28, 0
      %p62 = por %p60, %p61
      %p63 = scmp.ne.s32.totalorder %s52, %s55
      %p64 = scmp.eq.s32.totalorder %s33, 1
      %p65 = por %p63, %p64
      %p66 = scmp.ne.s32.totalorder %s55, %s56
      %p67 = scmp.eq.s32.totalorder %s33, 0
      %p68 = por %p66, %p67
      %p69 = scmp.ne.s32.totalorder %s55, %s56
      %p70 = scmp.eq.s32.totalorder %s34, 1
      %p71 = por %p69, %p70
      %p73 = scmp.ne.s32.totalorder %s56, %s72
      %p74 = scmp.eq.s32.totalorder %s34, 0
      %p75 = por %p73, %p74
      %s76 = ssub.s32 %s35, %s47
      %s77 = ssub.s32 %s36, %s43
      %s78 = sor.u32 %s76, %s77
      %p79 = scmp.eq.s32.totalorder %s78, 0
      %s81 = sadd.s32 %s80, 1
      %s82 = scalar_select %p79, %s80, %s81
      %p85 = pneg %p79
      %p86 = scmp.eq.s32.totalorder %s28, 1
      %p87 = por %p85, %p86
      %p88 = scmp.ne.s32.totalorder %s80, %s83
      %p89 = scmp.eq.s32.totalorder %s28, 0
      %p90 = por %p88, %p89
      %p91 = scmp.ne.s32.totalorder %s80, %s83
      %p92 = scmp.eq.s32.totalorder %s33, 1
      %p93 = por %p91, %p92
      %p94 = scmp.ne.s32.totalorder %s83, %s84
      %p95 = scmp.eq.s32.totalorder %s33, 0
      %p96 = por %p94, %p95
      %p97 = scmp.ne.s32.totalorder %s83, %s84
      %p98 = scmp.eq.s32.totalorder %s34, 1
      %p99 = por %p97, %p98
      %p101 = scmp.ne.s32.totalorder %s84, %s100
      %p102 = scmp.eq.s32.totalorder %s34, 0
      %p103 = por %p101, %p102
      %s105 = sadd.s32 %s104, 1
      %p108 = scmp.eq.s32.totalorder %s28, 1
      %p109 = scmp.ne.s32.totalorder %s104, %s106
      %p110 = scmp.eq.s32.totalorder %s28, 0
      %p111 = por %p109, %p110
      %p112 = scmp.ne.s32.totalorder %s104, %s106
      %p113 = scmp.eq.s32.totalorder %s33, 1
      %p114 = por %p112, %p113
      %p115 = scmp.ne.s32.totalorder %s106, %s107
      %p116 = scmp.eq.s32.totalorder %s33, 0
      %p117 = por %p115, %p116
      %p118 = scmp.ne.s32.totalorder %s106, %s107
      %p119 = scmp.eq.s32.totalorder %s34, 1
      %p120 = por %p118, %p119
      %p122 = scmp.ne.s32.totalorder %s107, %s121
      %p123 = scmp.eq.s32.totalorder %s34, 0
      %p124 = por %p122, %p123
      %s126 = sadd.s32 %s125, 1
      %p129 = scmp.eq.s32.totalorder %s28, 1
      %p130 = scmp.ne.s32.totalorder %s125, %s127
      %p131 = scmp.eq.s32.totalorder %s28, 0
      %p132 = por %p130, %p131
      %p133 = scmp.ne.s32.totalorder %s125, %s127
      %p134 = scmp.eq.s32.totalorder %s33, 1
      %p135 = por %p133, %p134
      %p136 = scmp.ne.s32.totalorder %s127, %s128
      %p137 = scmp.eq.s32.totalorder %s33, 0
      %p138 = por %p136, %p137
      %p139 = scmp.ne.s32.totalorder %s127, %s128
      %p140 = scmp.eq.s32.totalorder %s34, 1
      %p141 = por %p139, %p140
      %p143 = scmp.ne.s32.totalorder %s128, %s142
      %p144 = scmp.eq.s32.totalorder %s34, 0
      %p145 = por %p143, %p144
      %s147 = sadd.s32 %s146, 1
      %p150 = scmp.eq.s32.totalorder %s28, 1
      %p151 = scmp.ne.s32.totalorder %s146, %s148
      %p152 = scmp.eq.s32.totalorder %s28, 0
      %p153 = por %p151, %p152
      %p154 = scmp.ne.s32.totalorder %s146, %s148
      %p155 = scmp.eq.s32.totalorder %s33, 1
      %p156 = por %p154, %p155
      %p157 = scmp.ne.s32.totalorder %s148, %s149
      %p158 = scmp.eq.s32.totalorder %s33, 0
      %p159 = por %p157, %p158
      %p160 = scmp.ne.s32.totalorder %s148, %s149
      %p161 = scmp.eq.s32.totalorder %s34, 1
      %p162 = por %p160, %p161
      %p164 = scmp.ne.s32.totalorder %s149, %s163
      %p165 = scmp.eq.s32.totalorder %s34, 0
      %p166 = por %p164, %p165
      %s168 = sadd.s32 %s167, 1
      %p171 = scmp.eq.s32.totalorder %s28, 1
      %p172 = scmp.ne.s32.totalorder %s167, %s169
      %p173 = scmp.eq.s32.totalorder %s28, 0
      %p174 = por %p172, %p173
      %p175 = scmp.ne.s32.totalorder %s167, %s169
      %p176 = scmp.eq.s32.totalorder %s33, 1
      %p177 = por %p175, %p176
      %p178 = scmp.ne.s32.totalorder %s169, %s170
      %p179 = scmp.eq.s32.totalorder %s33, 0
      %p180 = por %p178, %p179
      %p181 = scmp.ne.s32.totalorder %s169, %s170
      %p182 = scmp.eq.s32.totalorder %s34, 1
      %p183 = por %p181, %p182
      %p185 = scmp.ne.s32.totalorder %s170, %s184
      %p186 = scmp.eq.s32.totalorder %s34, 0
      %p187 = por %p185, %p186
      %s189 = sadd.s32 %s188, 1
      %p192 = scmp.eq.s32.totalorder %s28, 1
      %p193 = scmp.ne.s32.totalorder %s188, %s190
      %p194 = scmp.eq.s32.totalorder %s28, 0
      %p195 = por %p193, %p194
      %p196 = scmp.ne.s32.totalorder %s188, %s190
      %p197 = scmp.eq.s32.totalorder %s33, 1
      %p198 = por %p196, %p197
      %p199 = scmp.ne.s32.totalorder %s190, %s191
      %p200 = scmp.eq.s32.totalorder %s33, 0
      %p201 = por %p199, %p200
      %p202 = scmp.ne.s32.totalorder %s190, %s191
      %p203 = scmp.eq.s32.totalorder %s34, 1
      %p204 = por %p202, %p203
      %p206 = scmp.ne.s32.totalorder %s191, %s205
      %p207 = scmp.eq.s32.totalorder %s34, 0
      %p208 = por %p206, %p207
      %s210 = sadd.s32 %s209, 1
      %p213 = scmp.eq.s32.totalorder %s28, 1
      %p214 = scmp.ne.s32.totalorder %s209, %s211
      %p215 = scmp.eq.s32.totalorder %s28, 0
      %p216 = por %p214, %p215
      %p217 = scmp.ne.s32.totalorder %s209, %s211
      %p218 = scmp.eq.s32.totalorder %s33, 1
      %p219 = por %p217, %p218
      %p220 = scmp.ne.s32.totalorder %s211, %s212
      %p221 = scmp.eq.s32.totalorder %s33, 0
      %p222 = por %p220, %p221
      %p223 = scmp.ne.s32.totalorder %s211, %s212
      %p224 = scmp.eq.s32.totalorder %s34, 1
      %p225 = por %p223, %p224
      %p227 = scmp.ne.s32.totalorder %s212, %s226
      %p228 = scmp.eq.s32.totalorder %s34, 0
      %p229 = por %p227, %p228
      %s231 = sadd.s32 %s230, 1
      %p234 = scmp.eq.s32.totalorder %s28, 1
      %p235 = scmp.ne.s32.totalorder %s230, %s232
      %p236 = scmp.eq.s32.totalorder %s28, 0
      %p237 = por %p235, %p236
      %p238 = scmp.ne.s32.totalorder %s230, %s232
      %p239 = scmp.eq.s32.totalorder %s33, 1
      %p240 = por %p238, %p239
      %p241 = scmp.ne.s32.totalorder %s232, %s233
      %p242 = scmp.eq.s32.totalorder %s33, 0
      %p243 = por %p241, %p242
      %p244 = scmp.ne.s32.totalorder %s232, %s233
      %p245 = scmp.eq.s32.totalorder %s34, 1
      %p246 = por %p244, %p245
      %p248 = scmp.ne.s32.totalorder %s233, %s247
      %p249 = scmp.eq.s32.totalorder %s34, 0
      %p250 = por %p248, %p249
      %s252 = sadd.s32 %s251, 1
      %p255 = scmp.eq.s32.totalorder %s28, 1
      %p256 = scmp.ne.s32.totalorder %s251, %s253
      %p257 = scmp.eq.s32.totalorder %s28, 0
      %p258 = por %p256, %p257
      %p259 = scmp.ne.s32.totalorder %s251, %s253
      %p260 = scmp.eq.s32.totalorder %s33, 1
      %p261 = por %p259, %p260
      %p262 = scmp.ne.s32.totalorder %s253, %s254
      %p263 = scmp.eq.s32.totalorder %s33, 0
      %p264 = por %p262, %p263
      %p265 = scmp.ne.s32.totalorder %s253, %s254
      %p266 = scmp.eq.s32.totalorder %s34, 1
      %p267 = por %p265, %p266
      %p269 = scmp.ne.s32.totalorder %s254, %s268
      %p270 = scmp.eq.s32.totalorder %s34, 0
      %p271 = por %p269, %p270
      %s273 = sadd.s32 %s272, 1
      %p276 = scmp.eq.s32.totalorder %s28, 1
      %p277 = scmp.ne.s32.totalorder %s272, %s274
      %p278 = scmp.eq.s32.totalorder %s28, 0
      %p279 = por %p277, %p278
      %p280 = scmp.ne.s32.totalorder %s272, %s274
      %p281 = scmp.eq.s32.totalorder %s33, 1
      %p282 = por %p280, %p281
      %p283 = scmp.ne.s32.totalorder %s274, %s275
      %p284 = scmp.eq.s32.totalorder %s33, 0
      %p285 = por %p283, %p284
      %p286 = scmp.ne.s32.totalorder %s274, %s275
      %p287 = scmp.eq.s32.totalorder %s34, 1
      %p288 = por %p286, %p287
      %p290 = scmp.ne.s32.totalorder %s275, %s289
      %p291 = scmp.eq.s32.totalorder %s34, 0
      %p292 = por %p290, %p291
      %s294 = sadd.s32 %s293, 1
      %p297 = scmp.eq.s32.totalorder %s28, 1
      %p298 = scmp.ne.s32.totalorder %s293, %s295
      %p299 = scmp.eq.s32.totalorder %s28, 0
      %p300 = por %p298, %p299
      %p301 = scmp.ne.s32.totalorder %s293, %s295
      %p302 = scmp.eq.s32.totalorder %s33, 1
      %p303 = por %p301, %p302
      %p304 = scmp.ne.s32.totalorder %s295, %s296
      %p305 = scmp.eq.s32.totalorder %s33, 0
      %p306 = por %p304, %p305
      %p307 = scmp.ne.s32.totalorder %s295, %s296
      %p308 = scmp.eq.s32.totalorder %s34, 1
      %p309 = por %p307, %p308
      %p311 = scmp.ne.s32.totalorder %s296, %s310
      %p312 = scmp.eq.s32.totalorder %s34, 0
      %p313 = por %p311, %p312
      %s314 = ssub.s32 %s35, %s47
      %s315 = ssub.s32 %s36, %s43
      %s316 = sor.u32 %s314, %s315
      %p317 = scmp.eq.s32.totalorder %s316, 0
      %s319 = sadd.s32 %s318, 1
      %s320 = scalar_select %p317, %s318, %s319
      %p323 = pneg %p317
      %p324 = scmp.eq.s32.totalorder %s28, 1
      %p325 = por %p323, %p324
      %p326 = scmp.ne.s32.totalorder %s318, %s321
      %p327 = scmp.eq.s32.totalorder %s28, 0
      %p328 = por %p326, %p327
      %p329 = scmp.ne.s32.totalorder %s318, %s321
      %p330 = scmp.eq.s32.totalorder %s33, 1
      %p331 = por %p329, %p330
      %p332 = scmp.ne.s32.totalorder %s321, %s322
      %p333 = scmp.eq.s32.totalorder %s33, 0
      %p334 = por %p332, %p333
      %p335 = scmp.ne.s32.totalorder %s321, %s322
      %p336 = scmp.eq.s32.totalorder %s34, 1
      %p337 = por %p335, %p336
      %p339 = scmp.ne.s32.totalorder %s322, %s338
      %p340 = scmp.eq.s32.totalorder %s34, 0
      %p341 = por %p339, %p340
      %p342 = scmp.le.s32.totalorder 1, %s28
      %p343 = scmp.lt.s32.totalorder %s28, 3
      %p344 = pnand %p342, %p343
      %p345 = pneg %p344
      // Predicated region
      $region9: #{block_forward.5} parent=5 // pred_check
        _
      $region10: #{block_forward.5} parent=5 // pred_check_branch
        %347 = sbr.rel (%p344) target = $region12
      $region11: #{block_forward.5} parent=5 // pred_region
        %s348 = ssub.s32 %s28, 1
        // Predicated region
        $region13: #{block_forward.5} parent=11 // pred_check
          %p349 = pneg %p117
        $region14: #{block_forward.5} parent=11 // pred_check_branch
          %351 = sbr.rel (%p349) target = $region16
        $region15: #{block_forward.5} parent=11 // pred_region
          %s353 = ssub.s32 1024, 1024
          %354 = vsyncadd [#allocation6], %s353
          %s355 = sshll.u32 [#allocation5], 4
          %s356 = int_to_ptr.vmem [resolvable:$true] %s355
          %361 = dma.hbm_to_vmem [thread:$0]  %s2, 1024, %s356, [#allocation6], 64, 64, 4
        $region16: #{block_forward.5} parent=11 // pred_fallthru
          _
        // Predicated region
        $region17: #{block_forward.5} parent=11 // pred_check
          %p362 = pneg %p138
        $region18: #{block_forward.5} parent=11 // pred_check_branch
          %364 = sbr.rel (%p362) target = $region20
        $region19: #{block_forward.5} parent=11 // pred_region
          %s366 = ssub.s32 16, 16
          %367 = vsyncadd [#allocation6], %s366
          %s369 = sshll.u32 [#allocation7], 4
          %s370 = int_to_ptr.vmem [resolvable:$true] %s369
          %372 = dma.hbm_to_vmem [thread:$0]  %s3, 16, %s370, [#allocation6]
        $region20: #{block_forward.5} parent=11 // pred_fallthru
          _
        // Predicated region
        $region21: #{block_forward.5} parent=11 // pred_check
          %p373 = pneg %p159
        $region22: #{block_forward.5} parent=11 // pred_check_branch
          %375 = sbr.rel (%p373) target = $region24
        $region23: #{block_forward.5} parent=11 // pred_region
          %s377 = ssub.s32 16, 16
          %378 = vsyncadd [#allocation9], %s377
          %s380 = sshll.u32 [#allocation8], 4
          %s381 = int_to_ptr.vmem [resolvable:$true] %s380
          %383 = dma.hbm_to_vmem [thread:$0]  %s4, 16, %s381, [#allocation9]
        $region24: #{block_forward.5} parent=11 // pred_fallthru
          _
        // Predicated region
        $region25: #{block_forward.5} parent=11 // pred_check
          %p384 = pneg %p180
        $region26: #{block_forward.5} parent=11 // pred_check_branch
          %386 = sbr.rel (%p384) target = $region28
        $region27: #{block_forward.5} parent=11 // pred_region
          %s388 = ssub.s32 16, 16
          %389 = vsyncadd [#allocation9], %s388
          %s391 = sshll.u32 [#allocation10], 4
          %s392 = int_to_ptr.vmem [resolvable:$true] %s391
          %394 = dma.hbm_to_vmem [thread:$0]  %s5, 16, %s392, [#allocation9]
        $region28: #{block_forward.5} parent=11 // pred_fallthru
          _
        // Predicated region
        $region29: #{block_forward.5} parent=11 // pred_check
          %p395 = pneg %p201
        $region30: #{block_forward.5} parent=11 // pred_check_branch
          %397 = sbr.rel (%p395) target = $region32
        $region31: #{block_forward.5} parent=11 // pred_region
          %s399 = ssub.s32 16, 16
          %400 = vsyncadd [#allocation12], %s399
          %s402 = sshll.u32 [#allocation11], 4
          %s403 = int_to_ptr.vmem [resolvable:$true] %s402
          %405 = dma.hbm_to_vmem [thread:$0]  %s6, 16, %s403, [#allocation12]
        $region32: #{block_forward.5} parent=11 // pred_fallthru
          _
        // Predicated region
        $region33: #{block_forward.5} parent=11 // pred_check
          %p406 = pneg %p222
        $region34: #{block_forward.5} parent=11 // pred_check_branch
          %408 = sbr.rel (%p406) target = $region36
        $region35: #{block_forward.5} parent=11 // pred_region
          _
        $region36: #{block_forward.5} parent=11 // pred_fallthru
          _
        // Predicated region
        $region37: #{block_forward.5} parent=11 // pred_check
          %p409 = pneg %p243
        $region38: #{block_forward.5} parent=11 // pred_check_branch
          %411 = sbr.rel (%p409) target = $region40
        $region39: #{block_forward.5} parent=11 // pred_region
          %s413 = ssub.s32 64, 64
          %414 = vsyncadd [#allocation12], %s413
          %s416 = sshll.u32 [#allocation13], 4
          %s417 = int_to_ptr.vmem [resolvable:$true] %s416
          %419 = dma.hbm_to_vmem [thread:$0]  %s8, 64, %s417, [#allocation12]
        $region40: #{block_forward.5} parent=11 // pred_fallthru
          _
        // Predicated region
        $region41: #{block_forward.5} parent=11 // pred_check
          %p420 = pneg %p264
        $region42: #{block_forward.5} parent=11 // pred_check_branch
          %422 = sbr.rel (%p420) target = $region44
        $region43: #{block_forward.5} parent=11 // pred_region
          _
        $region44: #{block_forward.5} parent=11 // pred_fallthru
          _
        // Predicated region
        $region45: #{block_forward.5} parent=11 // pred_check
          %p423 = pneg %p285
        $region46: #{block_forward.5} parent=11 // pred_check_branch
          %425 = sbr.rel (%p423) target = $region48
        $region47: #{block_forward.5} parent=11 // pred_region
          %s427 = ssub.s32 16, 16
          %428 = vsyncadd [#allocation15], %s427
          %s430 = sshll.u32 [#allocation14], 4
          %s431 = int_to_ptr.vmem [resolvable:$true] %s430
          %433 = dma.hbm_to_vmem [thread:$0]  %s10, 16, %s431, [#allocation15]
        $region48: #{block_forward.5} parent=11 // pred_fallthru
          _
        // Predicated region
        $region49: #{block_forward.5} parent=11 // pred_check
          %p434 = pneg %p306
        $region50: #{block_forward.5} parent=11 // pred_check_branch
          %436 = sbr.rel (%p434) target = $region52
        $region51: #{block_forward.5} parent=11 // pred_region
          _
        $region52: #{block_forward.5} parent=11 // pred_fallthru
          _
      $region12: #{block_forward.5} parent=5 // pred_fallthru
        _
      %p437 = scmp.lt.s32.totalorder %s28, 2
      // Predicated region
      $region53: #{block_forward.5} parent=5 // pred_check
        %p438 = pneg %p437
      $region54: #{block_forward.5} parent=5 // pred_check_branch
        %440 = sbr.rel (%p438) target = $region56
      $region55: #{block_forward.5} parent=5 // pred_region
        // Predicated region
        $region57: #{block_forward.5} parent=55 // pred_check
          %p441 = pneg %p62
        $region58: #{block_forward.5} parent=55 // pred_check_branch
          %443 = sbr.rel (%p441) target = $region60
        $region59: #{block_forward.5} parent=55 // pred_region
          %s444 = sand.u32 %s52, 1
          %s445 = scalar_lea.sflag [#allocation3], %s444
          %s446 = sand.u32 %s52, 1
          %s447 = smul.addr %s446, 16
          %s448 = scalar_lea.vmem [#allocation2], %s447
          %s449 = smul.u32 2, %s36
          %s451 = ssub.s32 256, 256
          %452 = vsyncadd %s445, %s451
          %s453 = smul.addr %s35, 2
          %s454 = sadd.s32 %s449, %s453
          %s455 = smul.addr %s454, 128
          %s456 = scalar_lea.hbm %s0, %s455
          %s457 = sshll.u32 %s448, 4
          %s458 = int_to_ptr.vmem [resolvable:$true] %s457
          %463 = dma.hbm_to_vmem [thread:$0]  %s456, 256, %s458, %s445, 128, 128, 8
        $region60: #{block_forward.5} parent=55 // pred_fallthru
          _
        // Predicated region
        $region61: #{block_forward.5} parent=55 // pred_check
          %p464 = pneg %p90
        $region62: #{block_forward.5} parent=55 // pred_check_branch
          %466 = sbr.rel (%p464) target = $region64
        $region63: #{block_forward.5} parent=55 // pred_region
          %s467 = smul.u32 2, %s36
          %p468 = scmp.lt.s32.totalorder %s35, 1
          %s469 = scalar_select %p468, %s35, 1
          %p470 = scmp.lt.s32.totalorder %s467, 1
          %s471 = scalar_select %p470, %s467, 1
          %s472 = smul.addr %s469, 2
          %s473 = sadd.s32 %s471, %s472
          %s474 = smul.addr %s473, 4
          %s475 = scalar_lea.vmem %s1, %s474
          %s476 = smul.u32 2, %s36
        $region64: #{block_forward.5} parent=55 // pred_fallthru
          _
      $region56: #{block_forward.5} parent=5 // pred_fallthru
        _
      %p477 = scmp.le.s32.totalorder 1, %s28
      %p478 = scmp.lt.s32.totalorder %s28, 3
      %p479 = pnand %p477, %p478
      %p480 = pneg %p479
      // Predicated region
      $region65: #{block_forward.5} parent=5 // pred_check
        _
      $region66: #{block_forward.5} parent=5 // pred_check_branch
        %482 = sbr.rel (%p479) target = $region68
      $region67: #{block_forward.5} parent=5 // pred_region
        %s483 = ssub.s32 %s28, 1
        %s484 = sand.u32 %s55, 1
        %s485 = scalar_lea.sflag [#allocation3], %s484
        %s486 = sand.u32 %s55, 1
        %s487 = smul.addr %s486, 16
        %s488 = scalar_lea.vmem [#allocation2], %s487
        // Predicated region
        $region69: #{block_forward.5} parent=67 // pred_check
          %p489 = pneg %p68
        $region70: #{block_forward.5} parent=67 // pred_check_branch
          %491 = sbr.rel (%p489) target = $region72
        $region71: #{block_forward.5} parent=67 // pred_region
          %492 = dma.done %s485, 256
        $region72: #{block_forward.5} parent=67 // pred_fallthru
          _
        // Predicated region
        $region73: #{block_forward.5} parent=67 // pred_check
          %p493 = pneg %p117
        $region74: #{block_forward.5} parent=67 // pred_check_branch
          %495 = sbr.rel (%p493) target = $region76
        $region75: #{block_forward.5} parent=67 // pred_region
          %496 = dma.done [#allocation6], 1024
        $region76: #{block_forward.5} parent=67 // pred_fallthru
          _
        // Predicated region
        $region77: #{block_forward.5} parent=67 // pred_check
          %p497 = pneg %p138
        $region78: #{block_forward.5} parent=67 // pred_check_branch
          %499 = sbr.rel (%p497) target = $region80
        $region79: #{block_forward.5} parent=67 // pred_region
          %500 = dma.done [#allocation6], 16
        $region80: #{block_forward.5} parent=67 // pred_fallthru
          _
        // Predicated region
        $region81: #{block_forward.5} parent=67 // pred_check
          %p501 = pneg %p159
        $region82: #{block_forward.5} parent=67 // pred_check_branch
          %503 = sbr.rel (%p501) target = $region84
        $region83: #{block_forward.5} parent=67 // pred_region
          %504 = dma.done [#allocation9], 16
        $region84: #{block_forward.5} parent=67 // pred_fallthru
          _
        // Predicated region
        $region85: #{block_forward.5} parent=67 // pred_check
          %p505 = pneg %p180
        $region86: #{block_forward.5} parent=67 // pred_check_branch
          %507 = sbr.rel (%p505) target = $region88
        $region87: #{block_forward.5} parent=67 // pred_region
          %508 = dma.done [#allocation9], 16
        $region88: #{block_forward.5} parent=67 // pred_fallthru
          _
        // Predicated region
        $region89: #{block_forward.5} parent=67 // pred_check
          %p509 = pneg %p201
        $region90: #{block_forward.5} parent=67 // pred_check_branch
          %511 = sbr.rel (%p509) target = $region92
        $region91: #{block_forward.5} parent=67 // pred_region
          %512 = dma.done [#allocation12], 16
        $region92: #{block_forward.5} parent=67 // pred_fallthru
          _
        // Predicated region
        $region93: #{block_forward.5} parent=67 // pred_check
          %p513 = pneg %p243
        $region94: #{block_forward.5} parent=67 // pred_check_branch
          %515 = sbr.rel (%p513) target = $region96
        $region95: #{block_forward.5} parent=67 // pred_region
          %516 = dma.done [#allocation12], 64
        $region96: #{block_forward.5} parent=67 // pred_fallthru
          _
        // Predicated region
        $region97: #{block_forward.5} parent=67 // pred_check
          %p517 = pneg %p285
        $region98: #{block_forward.5} parent=67 // pred_check_branch
          %519 = sbr.rel (%p517) target = $region100
        $region99: #{block_forward.5} parent=67 // pred_region
          %520 = dma.done [#allocation15], 16
        $region100: #{block_forward.5} parent=67 // pred_fallthru
          _
        %s521 = sand.u32 %s55, 1
        %s522 = scalar_lea.sflag [#allocation3], %s521
        %s523 = sand.u32 %s55, 1
        %s524 = smul.addr %s523, 16
        %s525 = scalar_lea.vmem [#allocation2], %s524
        %p526 = pneg %p68
        %p527 = pneg %p65
        %s528 = smul.u32 2, %s38
        %p529 = scmp.lt.s32.totalorder %s37, 1
        %s530 = scalar_select %p529, %s37, 1
        %p531 = scmp.lt.s32.totalorder %s528, 1
        %s532 = scalar_select %p531, %s528, 1
        %s533 = smul.addr %s530, 2
        %s534 = sadd.s32 %s532, %s533
        %s535 = smul.addr %s534, 4
        %s536 = scalar_lea.vmem %s1, %s535
        %p537 = pneg %p96
        %p538 = pneg %p93
        %p539 = pneg %p117
        %p540 = pneg %p114
        %p541 = pneg %p138
        %p542 = pneg %p135
        %p543 = pneg %p159
        %p544 = pneg %p156
        %p545 = pneg %p180
        %p546 = pneg %p177
        %p547 = pneg %p201
        %p548 = pneg %p198
        %p549 = pneg %p222
        %p550 = pneg %p219
        %p551 = pneg %p243
        %p552 = pneg %p240
        %p553 = pneg %p264
        %p554 = pneg %p261
        %p555 = pneg %p285
        %p556 = pneg %p282
        %p557 = pneg %p306
        %p558 = pneg %p303
        %p559 = pneg %p334
        %p560 = pneg %p331
        %s561 = sand.u32 %s321, 1
        %s562 = scalar_lea.sflag [#allocation4], %s561
        %s563 = sand.u32 %s321, 1
        %s564 = smul.addr %s563, 16
        %s565 = scalar_lea.vmem [#allocation16], %s564
        %s566 = smul.u32 2, %s38
        %s567 = smul.u32 2, %s38
        %p568 = scmp.lt.s32.totalorder %s37, 1
        %s569 = scalar_select %p568, %s37, 1
        %p570 = scmp.lt.s32.totalorder %s567, 1
        %s571 = scalar_select %p570, %s567, 1
        %s572 = smul.addr %s569, 2
        %s573 = sadd.s32 %s571, %s572
        %s574 = smul.addr %s573, 4
        %s575 = scalar_lea.vmem %s1, %s574
        %s576 = smul.u32 2, %s38
        %s577 = smul.u32 2, %s38
        %v579 = vld [vmem:[%s488] sm:$0xff]
        %v580 = vld [vmem:[%s488 + $0x8] sm:$0xff]
        %v581 = vld [vmem:[%s575] sm:$0xf]
        %v582 = vld [vmem:[%s575 + $0x4] sm:$0xf]
        %v583 = vld [vmem:[#allocation5] sm:$0xf]
        %v584 = vld [vmem:[#allocation5 + $0x4] sm:$0xf]
        %v585 = vld [vmem:[#allocation5 + $0x8] sm:$0xf]
        %v586 = vld [vmem:[#allocation5 + $0xc] sm:$0xf]
        %v587 = vld [vmem:[#allocation5 + $0x10] sm:$0xf]
        %v588 = vld [vmem:[#allocation5 + $0x14] sm:$0xf]
        %v589 = vld [vmem:[#allocation5 + $0x18] sm:$0xf]
        %v590 = vld [vmem:[#allocation5 + $0x1c] sm:$0xf]
        %v591 = vld [vmem:[#allocation5 + $0x20] sm:$0xf]
        %v592 = vld [vmem:[#allocation5 + $0x24] sm:$0xf]
        %v593 = vld [vmem:[#allocation5 + $0x28] sm:$0xf]
        %v594 = vld [vmem:[#allocation5 + $0x2c] sm:$0xf]
        %v595 = vld [vmem:[#allocation5 + $0x30] sm:$0xf]
        %v596 = vld [vmem:[#allocation5 + $0x34] sm:$0xf]
        %v597 = vld [vmem:[#allocation5 + $0x38] sm:$0xf]
        %v598 = vld [vmem:[#allocation5 + $0x3c] sm:$0xf]
        %v599 = vld [vmem:[#allocation7] sm:$0x1]
        %v601 = vlaneseq
        %v602 = vshrl.u32 %v601, 7
        %v603 = vsub.s32 0, %v602
        %v604 = vrot.slane %v599, %v603
        %v608 = vunpack.c.l.b16 %v581
        %v609 = vunpack.c.l.b16 %v582
        %v610 = vpack.c.b16 %v609, %v608
        %v628 = vunpack.c.l.b16 %v583
        %v629 = vunpack.c.l.b16 %v584
        %v630 = vunpack.c.l.b16 %v585
        %v631 = vunpack.c.l.b16 %v586
        %v632 = vunpack.c.l.b16 %v587
        %v633 = vunpack.c.l.b16 %v588
        %v634 = vunpack.c.l.b16 %v589
        %v635 = vunpack.c.l.b16 %v590
        %v636 = vunpack.c.l.b16 %v591
        %v637 = vunpack.c.l.b16 %v592
        %v638 = vunpack.c.l.b16 %v593
        %v639 = vunpack.c.l.b16 %v594
        %v640 = vunpack.c.l.b16 %v595
        %v641 = vunpack.c.l.b16 %v596
        %v642 = vunpack.c.l.b16 %v597
        %v643 = vunpack.c.l.b16 %v598
        %v644 = vpack.c.b16 %v629, %v628
        %v645 = vpack.c.b16 %v631, %v630
        %v646 = vpack.c.b16 %v633, %v632
        %v647 = vpack.c.b16 %v635, %v634
        %v648 = vpack.c.b16 %v637, %v636
        %v649 = vpack.c.b16 %v639, %v638
        %v650 = vpack.c.b16 %v641, %v640
        %v651 = vpack.c.b16 %v643, %v642
        %660 = vmatprep.subr.bf16.mxu0 0
        %661 = vmatpush1.bf16.msra.mxu0 %v651
        %662 = vmatprep.subr.bf16.mxu0 0
        %663 = vmatpush1.bf16.msra.mxu0 %v650
        %664 = vmatprep.subr.bf16.mxu0 0
        %665 = vmatpush1.bf16.msra.mxu0 %v649
        %666 = vmatprep.subr.bf16.mxu0 0
        %667 = vmatpush1.bf16.msra.mxu0 %v648
        %668 = vmatprep.subr.bf16.mxu0 0
        %669 = vmatpush1.bf16.msra.mxu0 %v647
        %670 = vmatprep.subr.bf16.mxu0 0
        %671 = vmatpush1.bf16.msra.mxu0 %v646
        %672 = vmatprep.subr.bf16.mxu0 0
        %673 = vmatpush1.bf16.msra.mxu0 %v645
        %674 = vmatprep.subr.bf16.mxu0 0
        %675 = vmatpush1.bf16.msra.mxu0 %v644
        %676 = vmatprep.subr.bf16.mxu0 0
        %677 = vmatpush2.bf16.msra.mxu0 0
        %678 = vmatprep.subr.bf16.mxu0 0
        %679 = vmatpush2.bf16.msra.mxu0 0
        %680 = vmatprep.subr.bf16.mxu0 0
        %681 = vmatpush2.bf16.msra.mxu0 0
        %682 = vmatprep.subr.bf16.mxu0 0
        %683 = vmatpush2.bf16.msra.mxu0 0
        %684 = vmatprep.subr.bf16.mxu0 0
        %685 = vmatpush2.bf16.msra.mxu0 0
        %686 = vmatprep.subr.bf16.mxu0 0
        %687 = vmatpush2.bf16.msra.mxu0 0
        %688 = vmatprep.subr.bf16.mxu0 0
        %689 = vmatpush2.bf16.msra.mxu0 0
        %690 = vmatprep.subr.bf16.mxu0 0
        %691 = vmatpush2.bf16.msra.mxu0 0
        %692 = vmatprep.mubr.bf16.mxu0 0
        %693 = vmatmul.mubr.bf16.gmra.mxu0 %v610
        %v694 = vpop.f32.mrf.mxu0
        %v695 = vadd.f32 %v604, %v694
        %v696 = vpop.f32.mrf.mxu0
        %v697 = vpop.f32.mrf.mxu0
        %v698 = vadd.f32 %v604, %v697
        %v699 = vpop.f32.mrf.mxu0
        %700 = vdwg.mxu0
        %v701 = vld [vmem:[#allocation8] sm:$0x1]
        %v703 = vlaneseq
        %v704 = vshrl.u32 %v703, 7
        %v705 = vsub.s32 0, %v704
        %v706 = vrot.slane %v701, %v705
        %v708 = vmul.f32 %v695, %v706
        %v709 = vmul.f32 %v698, %v706
        %v710 = vadd.f32 %v579, %v708
        %v711 = vadd.f32 %v580, %v709
        %v712 = vld [vmem:[#allocation10] sm:$0x1]
        %v713 = vld [vmem:[#allocation11] sm:$0x1]
        %714 = vadd.xlane.f32.xlu0 %v710
        %v715 = vpop.xlane.xlu0 %714
        %716 = vadd.xlane.f32.xlu0 %v711
        %v717 = vpop.xlane.xlu0 %716
        %v718 = vrcp.pop 128.0
        %v719 = vmul.f32 %v715, %v718
        %v720 = vmul.f32 %v717, %v718
        %v721 = vsub.f32 %v710, %v719
        %v722 = vsub.f32 %v711, %v720
        %v723 = vmul.f32 %v721, %v721
        %v724 = vmul.f32 %v722, %v722
        %725 = vadd.xlane.f32.xlu0 %v723
        %v726 = vpop.xlane.xlu0 %725
        %727 = vadd.xlane.f32.xlu0 %v724
        %v728 = vpop.xlane.xlu0 %727
        %v729 = vmul.f32 %v726, %v718
        %v730 = vmul.f32 %v728, %v718
        %v731 = vadd.f32 %v729, 1e-05
        %v732 = vadd.f32 %v730, 1e-05
        %v733 = vrsqrt.pop %v731
        %v734 = vrsqrt.pop %v732
        %v735 = vmul.f32 %v721, %v733
        %v736 = vmul.f32 %v722, %v734
        %v738 = vlaneseq
        %v739 = vshrl.u32 %v738, 7
        %v740 = vsub.s32 0, %v739
        %v741 = vrot.slane %v712, %v740
        %v743 = vmul.f32 %v735, %v741
        %v744 = vmul.f32 %v736, %v741
        %v746 = vlaneseq
        %v747 = vshrl.u32 %v746, 7
        %v748 = vsub.s32 0, %v747
        %v749 = vrot.slane %v713, %v748
        %v751 = vadd.f32 %v743, %v749
        %v752 = vadd.f32 %v744, %v749
        %v753 = vpack.c.bf16 %v752, %v751
        %v754 = vld [vmem:[%s7] sm:$0xff]
        %v755 = vld [vmem:[%s7 + $0x8] sm:$0xff]
        %v756 = vld [vmem:[%s7 + $0x10] sm:$0xff]
        %v757 = vld [vmem:[%s7 + $0x18] sm:$0xff]
        %v758 = vld [vmem:[%s7 + $0x20] sm:$0xff]
        %v759 = vld [vmem:[%s7 + $0x28] sm:$0xff]
        %v760 = vld [vmem:[%s7 + $0x30] sm:$0xff]
        %v761 = vld [vmem:[%s7 + $0x38] sm:$0xff]
        %v762 = vld [vmem:[%s7 + $0x40] sm:$0xff]
        %v763 = vld [vmem:[%s7 + $0x48] sm:$0xff]
        %v764 = vld [vmem:[%s7 + $0x50] sm:$0xff]
        %v765 = vld [vmem:[%s7 + $0x58] sm:$0xff]
        %v766 = vld [vmem:[%s7 + $0x60] sm:$0xff]
        %v767 = vld [vmem:[%s7 + $0x68] sm:$0xff]
        %v768 = vld [vmem:[%s7 + $0x70] sm:$0xff]
        %v769 = vld [vmem:[%s7 + $0x78] sm:$0xff]
        %v770 = vld [vmem:[%s7 + $0x80] sm:$0xff]
        %v771 = vld [vmem:[%s7 + $0x88] sm:$0xff]
        %v772 = vld [vmem:[%s7 + $0x90] sm:$0xff]
        %v773 = vld [vmem:[%s7 + $0x98] sm:$0xff]
        %v774 = vld [vmem:[%s7 + $0xa0] sm:$0xff]
        %v775 = vld [vmem:[%s7 + $0xa8] sm:$0xff]
        %v776 = vld [vmem:[%s7 + $0xb0] sm:$0xff]
        %v777 = vld [vmem:[%s7 + $0xb8] sm:$0xff]
        %v778 = vld [vmem:[%s7 + $0xc0] sm:$0xff]
        %v779 = vld [vmem:[%s7 + $0xc8] sm:$0xff]
        %v780 = vld [vmem:[%s7 + $0xd0] sm:$0xff]
        %v781 = vld [vmem:[%s7 + $0xd8] sm:$0xff]
        %v782 = vld [vmem:[%s7 + $0xe0] sm:$0xff]
        %v783 = vld [vmem:[%s7 + $0xe8] sm:$0xff]
        %v784 = vld [vmem:[%s7 + $0xf0] sm:$0xff]
        %v785 = vld [vmem:[%s7 + $0xf8] sm:$0xff]
        %v786 = vld [vmem:[#allocation13] sm:$0xf]
        %v788 = vlaneseq
        %v789 = vshrl.u32 %v788, 7
        %v790 = vsub.s32 0, %v789
        %v791 = vrot.slane %v786, %v790
        %v792 = vlaneseq
        %v793 = vshrl.u32 %v792, 7
        %v794 = vsub.s32 1, %v793
        %v795 = vrot.slane %v786, %v794
        %v796 = vlaneseq
        %v797 = vshrl.u32 %v796, 7
        %v798 = vsub.s32 2, %v797
        %v799 = vrot.slane %v786, %v798
        %v800 = vlaneseq
        %v801 = vshrl.u32 %v800, 7
        %v802 = vsub.s32 3, %v801
        %v803 = vrot.slane %v786, %v802
        %v840 = vunpack.c.l.b16 %v754
        %v841 = vunpack.c.h.b16 %v754
        %v842 = vunpack.c.l.b16 %v755
        %v843 = vunpack.c.h.b16 %v755
        %v844 = vunpack.c.l.b16 %v756
        %v845 = vunpack.c.h.b16 %v756
        %v846 = vunpack.c.l.b16 %v757
        %v847 = vunpack.c.h.b16 %v757
        %v848 = vunpack.c.l.b16 %v758
        %v849 = vunpack.c.h.b16 %v758
        %v850 = vunpack.c.l.b16 %v759
        %v851 = vunpack.c.h.b16 %v759
        %v852 = vunpack.c.l.b16 %v760
        %v853 = vunpack.c.h.b16 %v760
        %v854 = vunpack.c.l.b16 %v761
        %v855 = vunpack.c.h.b16 %v761
        %v856 = vunpack.c.l.b16 %v762
        %v857 = vunpack.c.h.b16 %v762
        %v858 = vunpack.c.l.b16 %v763
        %v859 = vunpack.c.h.b16 %v763
        %v860 = vunpack.c.l.b16 %v764
        %v861 = vunpack.c.h.b16 %v764
        %v862 = vunpack.c.l.b16 %v765
        %v863 = vunpack.c.h.b16 %v765
        %v864 = vunpack.c.l.b16 %v766
        %v865 = vunpack.c.h.b16 %v766
        %v866 = vunpack.c.l.b16 %v767
        %v867 = vunpack.c.h.b16 %v767
        %v868 = vunpack.c.l.b16 %v768
        %v869 = vunpack.c.h.b16 %v768
        %v870 = vunpack.c.l.b16 %v769
        %v871 = vunpack.c.h.b16 %v769
        %v872 = vunpack.c.l.b16 %v770
        %v873 = vunpack.c.h.b16 %v770
        %v874 = vunpack.c.l.b16 %v771
        %v875 = vunpack.c.h.b16 %v771
        %v876 = vunpack.c.l.b16 %v772
        %v877 = vunpack.c.h.b16 %v772
        %v878 = vunpack.c.l.b16 %v773
        %v879 = vunpack.c.h.b16 %v773
        %v880 = vunpack.c.l.b16 %v774
        %v881 = vunpack.c.h.b16 %v774
        %v882 = vunpack.c.l.b16 %v775
        %v883 = vunpack.c.h.b16 %v775
        %v884 = vunpack.c.l.b16 %v776
        %v885 = vunpack.c.h.b16 %v776
        %v886 = vunpack.c.l.b16 %v777
        %v887 = vunpack.c.h.b16 %v777
        %v888 = vunpack.c.l.b16 %v778
        %v889 = vunpack.c.h.b16 %v778
        %v890 = vunpack.c.l.b16 %v779
        %v891 = vunpack.c.h.b16 %v779
        %v892 = vunpack.c.l.b16 %v780
        %v893 = vunpack.c.h.b16 %v780
        %v894 = vunpack.c.l.b16 %v781
        %v895 = vunpack.c.h.b16 %v781
        %v896 = vunpack.c.l.b16 %v782
        %v897 = vunpack.c.h.b16 %v782
        %v898 = vunpack.c.l.b16 %v783
        %v899 = vunpack.c.h.b16 %v783
        %v900 = vunpack.c.l.b16 %v784
        %v901 = vunpack.c.h.b16 %v784
        %v902 = vunpack.c.l.b16 %v785
        %v903 = vunpack.c.h.b16 %v785
        %v904 = vpack.c.b16 %v844, %v840
        %v905 = vpack.c.b16 %v845, %v841
        %v906 = vpack.c.b16 %v846, %v842
        %v907 = vpack.c.b16 %v847, %v843
        %v908 = vpack.c.b16 %v852, %v848
        %v909 = vpack.c.b16 %v853, %v849
        %v910 = vpack.c.b16 %v854, %v850
        %v911 = vpack.c.b16 %v855, %v851
        %v912 = vpack.c.b16 %v860, %v856
        %v913 = vpack.c.b16 %v861, %v857
        %v914 = vpack.c.b16 %v862, %v858
        %v915 = vpack.c.b16 %v863, %v859
        %v916 = vpack.c.b16 %v868, %v864
        %v917 = vpack.c.b16 %v869, %v865
        %v918 = vpack.c.b16 %v870, %v866
        %v919 = vpack.c.b16 %v871, %v867
        %v920 = vpack.c.b16 %v876, %v872
        %v921 = vpack.c.b16 %v877, %v873
        %v922 = vpack.c.b16 %v878, %v874
        %v923 = vpack.c.b16 %v879, %v875
        %v924 = vpack.c.b16 %v884, %v880
        %v925 = vpack.c.b16 %v885, %v881
        %v926 = vpack.c.b16 %v886, %v882
        %v927 = vpack.c.b16 %v887, %v883
        %v928 = vpack.c.b16 %v892, %v888
        %v929 = vpack.c.b16 %v893, %v889
        %v930 = vpack.c.b16 %v894, %v890
        %v931 = vpack.c.b16 %v895, %v891
        %v932 = vpack.c.b16 %v900, %v896
        %v933 = vpack.c.b16 %v901, %v897
        %v934 = vpack.c.b16 %v902, %v898
        %v935 = vpack.c.b16 %v903, %v899
        %968 = vmatprep.subr.bf16.mxu0 %v933
        %969 = vmatpush1.bf16.msra.mxu0 %v932
        %970 = vmatprep.subr.bf16.mxu0 %v929
        %971 = vmatpush1.bf16.msra.mxu0 %v928
        %972 = vmatprep.subr.bf16.mxu0 %v925
        %973 = vmatpush1.bf16.msra.mxu0 %v924
        %974 = vmatprep.subr.bf16.mxu0 %v921
        %975 = vmatpush1.bf16.msra.mxu0 %v920
        %976 = vmatprep.subr.bf16.mxu0 %v917
        %977 = vmatpush1.bf16.msra.mxu0 %v916
        %978 = vmatprep.subr.bf16.mxu0 %v913
        %979 = vmatpush1.bf16.msra.mxu0 %v912
        %980 = vmatprep.subr.bf16.mxu0 %v909
        %981 = vmatpush1.bf16.msra.mxu0 %v908
        %982 = vmatprep.subr.bf16.mxu0 %v905
        %983 = vmatpush1.bf16.msra.mxu0 %v904
        %984 = vmatprep.subr.bf16.mxu0 0
        %985 = vmatpush2.bf16.msra.mxu0 0
        %986 = vmatprep.subr.bf16.mxu0 0
        %987 = vmatpush2.bf16.msra.mxu0 0
        %988 = vmatprep.subr.bf16.mxu0 0
        %989 = vmatpush2.bf16.msra.mxu0 0
        %990 = vmatprep.subr.bf16.mxu0 0
        %991 = vmatpush2.bf16.msra.mxu0 0
        %992 = vmatprep.subr.bf16.mxu0 0
        %993 = vmatpush2.bf16.msra.mxu0 0
        %994 = vmatprep.subr.bf16.mxu0 0
        %995 = vmatpush2.bf16.msra.mxu0 0
        %996 = vmatprep.subr.bf16.mxu0 0
        %997 = vmatpush2.bf16.msra.mxu0 0
        %998 = vmatprep.subr.bf16.mxu0 0
        %999 = vmatpush2.bf16.msra.mxu0 0
        %1000 = vmatprep.mubr.bf16.mxu0 0
        %1001 = vmatmul.mubr.bf16.gmra.mxu0 %v753
        %v1002 = vpop.f32.mrf.mxu0
        %v1003 = vadd.f32 %v791, %v1002
        %v1004 = vpop.f32.mrf.mxu0
        %v1005 = vadd.f32 %v795, %v1004
        %v1006 = vpop.f32.mrf.mxu0
        %v1007 = vadd.f32 %v791, %v1006
        %v1008 = vpop.f32.mrf.mxu0
        %v1009 = vadd.f32 %v795, %v1008
        %1010 = vdwg.mxu0
        %1011 = vmatprep.subr.bf16.mxu0 %v935
        %1012 = vmatpush1.bf16.msra.mxu0 %v934
        %1013 = vmatprep.subr.bf16.mxu0 %v931
        %1014 = vmatpush1.bf16.msra.mxu0 %v930
        %1015 = vmatprep.subr.bf16.mxu0 %v927
        %1016 = vmatpush1.bf16.msra.mxu0 %v926
        %1017 = vmatprep.subr.bf16.mxu0 %v923
        %1018 = vmatpush1.bf16.msra.mxu0 %v922
        %1019 = vmatprep.subr.bf16.mxu0 %v919
        %1020 = vmatpush1.bf16.msra.mxu0 %v918
        %1021 = vmatprep.subr.bf16.mxu0 %v915
        %1022 = vmatpush1.bf16.msra.mxu0 %v914
        %1023 = vmatprep.subr.bf16.mxu0 %v911
        %1024 = vmatpush1.bf16.msra.mxu0 %v910
        %1025 = vmatprep.subr.bf16.mxu0 %v907
        %1026 = vmatpush1.bf16.msra.mxu0 %v906
        %1027 = vmatprep.subr.bf16.mxu0 0
        %1028 = vmatpush2.bf16.msra.mxu0 0
        %1029 = vmatprep.subr.bf16.mxu0 0
        %1030 = vmatpush2.bf16.msra.mxu0 0
        %1031 = vmatprep.subr.bf16.mxu0 0
        %1032 = vmatpush2.bf16.msra.mxu0 0
        %1033 = vmatprep.subr.bf16.mxu0 0
        %1034 = vmatpush2.bf16.msra.mxu0 0
        %1035 = vmatprep.subr.bf16.mxu0 0
        %1036 = vmatpush2.bf16.msra.mxu0 0
        %1037 = vmatprep.subr.bf16.mxu0 0
        %1038 = vmatpush2.bf16.msra.mxu0 0
        %1039 = vmatprep.subr.bf16.mxu0 0
        %1040 = vmatpush2.bf16.msra.mxu0 0
        %1041 = vmatprep.subr.bf16.mxu0 0
        %1042 = vmatpush2.bf16.msra.mxu0 0
        %1043 = vmatprep.mubr.bf16.mxu0 0
        %1044 = vmatmul.mubr.bf16.gmra.mxu0 %v753
        %v1045 = vpop.f32.mrf.mxu0
        %v1046 = vadd.f32 %v799, %v1045
        %v1047 = vpop.f32.mrf.mxu0
        %v1048 = vadd.f32 %v803, %v1047
        %v1049 = vpop.f32.mrf.mxu0
        %v1050 = vadd.f32 %v799, %v1049
        %v1051 = vpop.f32.mrf.mxu0
        %v1052 = vadd.f32 %v803, %v1051
        %1053 = vdwg.mxu0
        %v1054 = vmul.f32 %v1003, 0.5
        %v1055 = vmul.f32 %v1005, 0.5
        %v1056 = vmul.f32 %v1046, 0.5
        %v1057 = vmul.f32 %v1048, 0.5
        %v1058 = vmul.f32 %v1007, 0.5
        %v1059 = vmul.f32 %v1009, 0.5
        %v1060 = vmul.f32 %v1050, 0.5
        %v1061 = vmul.f32 %v1052, 0.5
        %v1062 = vmul.f32 %v1003, %v1003
        %v1063 = vmul.f32 %v1005, %v1005
        %v1064 = vmul.f32 %v1046, %v1046
        %v1065 = vmul.f32 %v1048, %v1048
        %v1066 = vmul.f32 %v1007, %v1007
        %v1067 = vmul.f32 %v1009, %v1009
        %v1068 = vmul.f32 %v1050, %v1050
        %v1069 = vmul.f32 %v1052, %v1052
        %v1070 = vmul.f32 %v1062, %v1003
        %v1071 = vmul.f32 %v1063, %v1005
        %v1072 = vmul.f32 %v1064, %v1046
        %v1073 = vmul.f32 %v1065, %v1048
        %v1074 = vmul.f32 %v1066, %v1007
        %v1075 = vmul.f32 %v1067, %v1009
        %v1076 = vmul.f32 %v1068, %v1050
        %v1077 = vmul.f32 %v1069, %v1052
        %v1078 = vmul.f32 %v1070, 0.044715
        %v1079 = vmul.f32 %v1071, 0.044715
        %v1080 = vmul.f32 %v1072, 0.044715
        %v1081 = vmul.f32 %v1073, 0.044715
        %v1082 = vmul.f32 %v1074, 0.044715
        %v1083 = vmul.f32 %v1075, 0.044715
        %v1084 = vmul.f32 %v1076, 0.044715
        %v1085 = vmul.f32 %v1077, 0.044715
        %v1086 = vadd.f32 %v1003, %v1078
        %v1087 = vadd.f32 %v1005, %v1079
        %v1088 = vadd.f32 %v1046, %v1080
        %v1089 = vadd.f32 %v1048, %v1081
        %v1090 = vadd.f32 %v1007, %v1082
        %v1091 = vadd.f32 %v1009, %v1083
        %v1092 = vadd.f32 %v1050, %v1084
        %v1093 = vadd.f32 %v1052, %v1085
        %v1094 = vmul.f32 %v1086, 0.7978846
        %v1095 = vmul.f32 %v1087, 0.7978846
        %v1096 = vmul.f32 %v1088, 0.7978846
        %v1097 = vmul.f32 %v1089, 0.7978846
        %v1098 = vmul.f32 %v1090, 0.7978846
        %v1099 = vmul.f32 %v1091, 0.7978846
        %v1100 = vmul.f32 %v1092, 0.7978846
        %v1101 = vmul.f32 %v1093, 0.7978846
        %v1102 = vtanh.pop %v1094
        %v1103 = vtanh.pop %v1095
        %v1104 = vtanh.pop %v1096
        %v1105 = vtanh.pop %v1097
        %v1106 = vtanh.pop %v1098
        %v1107 = vtanh.pop %v1099
        %v1108 = vtanh.pop %v1100
        %v1109 = vtanh.pop %v1101
        %v1110 = vadd.f32 %v1102, 1.0
        %v1111 = vadd.f32 %v1103, 1.0
        %v1112 = vadd.f32 %v1104, 1.0
        %v1113 = vadd.f32 %v1105, 1.0
        %v1114 = vadd.f32 %v1106, 1.0
        %v1115 = vadd.f32 %v1107, 1.0
        %v1116 = vadd.f32 %v1108, 1.0
        %v1117 = vadd.f32 %v1109, 1.0
        %v1118 = vmul.f32 %v1054, %v1110
        %v1119 = vmul.f32 %v1055, %v1111
        %v1120 = vmul.f32 %v1056, %v1112
        %v1121 = vmul.f32 %v1057, %v1113
        %v1122 = vmul.f32 %v1058, %v1114
        %v1123 = vmul.f32 %v1059, %v1115
        %v1124 = vmul.f32 %v1060, %v1116
        %v1125 = vmul.f32 %v1061, %v1117
        %v1126 = vpack.c.bf16 %v1122, %v1118
        %v1127 = vpack.c.bf16 %v1123, %v1119
        %v1128 = vpack.c.bf16 %v1124, %v1120
        %v1129 = vpack.c.bf16 %v1125, %v1121
        %v1130 = vld [vmem:[%s9] sm:$0xf]
        %v1131 = vld [vmem:[%s9 + $0x4] sm:$0xf]
        %v1132 = vld [vmem:[%s9 + $0x8] sm:$0xf]
        %v1133 = vld [vmem:[%s9 + $0xc] sm:$0xf]
        %v1134 = vld [vmem:[%s9 + $0x10] sm:$0xf]
        %v1135 = vld [vmem:[%s9 + $0x14] sm:$0xf]
        %v1136 = vld [vmem:[%s9 + $0x18] sm:$0xf]
        %v1137 = vld [vmem:[%s9 + $0x1c] sm:$0xf]
        %v1138 = vld [vmem:[%s9 + $0x20] sm:$0xf]
        %v1139 = vld [vmem:[%s9 + $0x24] sm:$0xf]
        %v1140 = vld [vmem:[%s9 + $0x28] sm:$0xf]
        %v1141 = vld [vmem:[%s9 + $0x2c] sm:$0xf]
        %v1142 = vld [vmem:[%s9 + $0x30] sm:$0xf]
        %v1143 = vld [vmem:[%s9 + $0x34] sm:$0xf]
        %v1144 = vld [vmem:[%s9 + $0x38] sm:$0xf]
        %v1145 = vld [vmem:[%s9 + $0x3c] sm:$0xf]
        %v1146 = vld [vmem:[%s9 + $0x40] sm:$0xf]
        %v1147 = vld [vmem:[%s9 + $0x44] sm:$0xf]
        %v1148 = vld [vmem:[%s9 + $0x48] sm:$0xf]
        %v1149 = vld [vmem:[%s9 + $0x4c] sm:$0xf]
        %v1150 = vld [vmem:[%s9 + $0x50] sm:$0xf]
        %v1151 = vld [vmem:[%s9 + $0x54] sm:$0xf]
        %v1152 = vld [vmem:[%s9 + $0x58] sm:$0xf]
        %v1153 = vld [vmem:[%s9 + $0x5c] sm:$0xf]
        %v1154 = vld [vmem:[%s9 + $0x60] sm:$0xf]
        %v1155 = vld [vmem:[%s9 + $0x64] sm:$0xf]
        %v1156 = vld [vmem:[%s9 + $0x68] sm:$0xf]
        %v1157 = vld [vmem:[%s9 + $0x6c] sm:$0xf]
        %v1158 = vld [vmem:[%s9 + $0x70] sm:$0xf]
        %v1159 = vld [vmem:[%s9 + $0x74] sm:$0xf]
        %v1160 = vld [vmem:[%s9 + $0x78] sm:$0xf]
        %v1161 = vld [vmem:[%s9 + $0x7c] sm:$0xf]
        %v1162 = vld [vmem:[%s9 + $0x80] sm:$0xf]
        %v1163 = vld [vmem:[%s9 + $0x84] sm:$0xf]
        %v1164 = vld [vmem:[%s9 + $0x88] sm:$0xf]
        %v1165 = vld [vmem:[%s9 + $0x8c] sm:$0xf]
        %v1166 = vld [vmem:[%s9 + $0x90] sm:$0xf]
        %v1167 = vld [vmem:[%s9 + $0x94] sm:$0xf]
        %v1168 = vld [vmem:[%s9 + $0x98] sm:$0xf]
        %v1169 = vld [vmem:[%s9 + $0x9c] sm:$0xf]
        %v1170 = vld [vmem:[%s9 + $0xa0] sm:$0xf]
        %v1171 = vld [vmem:[%s9 + $0xa4] sm:$0xf]
        %v1172 = vld [vmem:[%s9 + $0xa8] sm:$0xf]
        %v1173 = vld [vmem:[%s9 + $0xac] sm:$0xf]
        %v1174 = vld [vmem:[%s9 + $0xb0] sm:$0xf]
        %v1175 = vld [vmem:[%s9 + $0xb4] sm:$0xf]
        %v1176 = vld [vmem:[%s9 + $0xb8] sm:$0xf]
        %v1177 = vld [vmem:[%s9 + $0xbc] sm:$0xf]
        %v1178 = vld [vmem:[%s9 + $0xc0] sm:$0xf]
        %v1179 = vld [vmem:[%s9 + $0xc4] sm:$0xf]
        %v1180 = vld [vmem:[%s9 + $0xc8] sm:$0xf]
        %v1181 = vld [vmem:[%s9 + $0xcc] sm:$0xf]
        %v1182 = vld [vmem:[%s9 + $0xd0] sm:$0xf]
        %v1183 = vld [vmem:[%s9 + $0xd4] sm:$0xf]
        %v1184 = vld [vmem:[%s9 + $0xd8] sm:$0xf]
        %v1185 = vld [vmem:[%s9 + $0xdc] sm:$0xf]
        %v1186 = vld [vmem:[%s9 + $0xe0] sm:$0xf]
        %v1187 = vld [vmem:[%s9 + $0xe4] sm:$0xf]
        %v1188 = vld [vmem:[%s9 + $0xe8] sm:$0xf]
        %v1189 = vld [vmem:[%s9 + $0xec] sm:$0xf]
        %v1190 = vld [vmem:[%s9 + $0xf0] sm:$0xf]
        %v1191 = vld [vmem:[%s9 + $0xf4] sm:$0xf]
        %v1192 = vld [vmem:[%s9 + $0xf8] sm:$0xf]
        %v1193 = vld [vmem:[%s9 + $0xfc] sm:$0xf]
        %v1194 = vld [vmem:[#allocation14] sm:$0x1]
        %v1196 = vlaneseq
        %v1197 = vshrl.u32 %v1196, 7
        %v1198 = vsub.s32 0, %v1197
        %v1199 = vrot.slane %v1194, %v1198
        %v1265 = vunpack.c.l.b16 %v1130
        %v1266 = vunpack.c.l.b16 %v1131
        %v1267 = vunpack.c.l.b16 %v1132
        %v1268 = vunpack.c.l.b16 %v1133
        %v1269 = vunpack.c.l.b16 %v1134
        %v1270 = vunpack.c.l.b16 %v1135
        %v1271 = vunpack.c.l.b16 %v1136
        %v1272 = vunpack.c.l.b16 %v1137
        %v1273 = vunpack.c.l.b16 %v1138
        %v1274 = vunpack.c.l.b16 %v1139
        %v1275 = vunpack.c.l.b16 %v1140
        %v1276 = vunpack.c.l.b16 %v1141
        %v1277 = vunpack.c.l.b16 %v1142
        %v1278 = vunpack.c.l.b16 %v1143
        %v1279 = vunpack.c.l.b16 %v1144
        %v1280 = vunpack.c.l.b16 %v1145
        %v1281 = vunpack.c.l.b16 %v1146
        %v1282 = vunpack.c.l.b16 %v1147
        %v1283 = vunpack.c.l.b16 %v1148
        %v1284 = vunpack.c.l.b16 %v1149
        %v1285 = vunpack.c.l.b16 %v1150
        %v1286 = vunpack.c.l.b16 %v1151
        %v1287 = vunpack.c.l.b16 %v1152
        %v1288 = vunpack.c.l.b16 %v1153
        %v1289 = vunpack.c.l.b16 %v1154
        %v1290 = vunpack.c.l.b16 %v1155
        %v1291 = vunpack.c.l.b16 %v1156
        %v1292 = vunpack.c.l.b16 %v1157
        %v1293 = vunpack.c.l.b16 %v1158
        %v1294 = vunpack.c.l.b16 %v1159
        %v1295 = vunpack.c.l.b16 %v1160
        %v1296 = vunpack.c.l.b16 %v1161
        %v1297 = vunpack.c.l.b16 %v1162
        %v1298 = vunpack.c.l.b16 %v1163
        %v1299 = vunpack.c.l.b16 %v1164
        %v1300 = vunpack.c.l.b16 %v1165
        %v1301 = vunpack.c.l.b16 %v1166
        %v1302 = vunpack.c.l.b16 %v1167
        %v1303 = vunpack.c.l.b16 %v1168
        %v1304 = vunpack.c.l.b16 %v1169
        %v1305 = vunpack.c.l.b16 %v1170
        %v1306 = vunpack.c.l.b16 %v1171
        %v1307 = vunpack.c.l.b16 %v1172
        %v1308 = vunpack.c.l.b16 %v1173
        %v1309 = vunpack.c.l.b16 %v1174
        %v1310 = vunpack.c.l.b16 %v1175
        %v1311 = vunpack.c.l.b16 %v1176
        %v1312 = vunpack.c.l.b16 %v1177
        %v1313 = vunpack.c.l.b16 %v1178
        %v1314 = vunpack.c.l.b16 %v1179
        %v1315 = vunpack.c.l.b16 %v1180
        %v1316 = vunpack.c.l.b16 %v1181
        %v1317 = vunpack.c.l.b16 %v1182
        %v1318 = vunpack.c.l.b16 %v1183
        %v1319 = vunpack.c.l.b16 %v1184
        %v1320 = vunpack.c.l.b16 %v1185
        %v1321 = vunpack.c.l.b16 %v1186
        %v1322 = vunpack.c.l.b16 %v1187
        %v1323 = vunpack.c.l.b16 %v1188
        %v1324 = vunpack.c.l.b16 %v1189
        %v1325 = vunpack.c.l.b16 %v1190
        %v1326 = vunpack.c.l.b16 %v1191
        %v1327 = vunpack.c.l.b16 %v1192
        %v1328 = vunpack.c.l.b16 %v1193
        %v1329 = vpack.c.b16 %v1266, %v1265
        %v1330 = vpack.c.b16 %v1268, %v1267
        %v1331 = vpack.c.b16 %v1270, %v1269
        %v1332 = vpack.c.b16 %v1272, %v1271
        %v1333 = vpack.c.b16 %v1274, %v1273
        %v1334 = vpack.c.b16 %v1276, %v1275
        %v1335 = vpack.c.b16 %v1278, %v1277
        %v1336 = vpack.c.b16 %v1280, %v1279
        %v1337 = vpack.c.b16 %v1282, %v1281
        %v1338 = vpack.c.b16 %v1284, %v1283
        %v1339 = vpack.c.b16 %v1286, %v1285
        %v1340 = vpack.c.b16 %v1288, %v1287
        %v1341 = vpack.c.b16 %v1290, %v1289
        %v1342 = vpack.c.b16 %v1292, %v1291
        %v1343 = vpack.c.b16 %v1294, %v1293
        %v1344 = vpack.c.b16 %v1296, %v1295
        %v1345 = vpack.c.b16 %v1298, %v1297
        %v1346 = vpack.c.b16 %v1300, %v1299
        %v1347 = vpack.c.b16 %v1302, %v1301
        %v1348 = vpack.c.b16 %v1304, %v1303
        %v1349 = vpack.c.b16 %v1306, %v1305
        %v1350 = vpack.c.b16 %v1308, %v1307
        %v1351 = vpack.c.b16 %v1310, %v1309
        %v1352 = vpack.c.b16 %v1312, %v1311
        %v1353 = vpack.c.b16 %v1314, %v1313
        %v1354 = vpack.c.b16 %v1316, %v1315
        %v1355 = vpack.c.b16 %v1318, %v1317
        %v1356 = vpack.c.b16 %v1320, %v1319
        %v1357 = vpack.c.b16 %v1322, %v1321
        %v1358 = vpack.c.b16 %v1324, %v1323
        %v1359 = vpack.c.b16 %v1326, %v1325
        %v1360 = vpack.c.b16 %v1328, %v1327
        %1393 = vmatprep.subr.bf16.mxu0 0
        %1394 = vmatpush1.bf16.msra.mxu0 %v1336
        %1395 = vmatprep.subr.bf16.mxu0 0
        %1396 = vmatpush1.bf16.msra.mxu0 %v1335
        %1397 = vmatprep.subr.bf16.mxu0 0
        %1398 = vmatpush1.bf16.msra.mxu0 %v1334
        %1399 = vmatprep.subr.bf16.mxu0 0
        %1400 = vmatpush1.bf16.msra.mxu0 %v1333
        %1401 = vmatprep.subr.bf16.mxu0 0
        %1402 = vmatpush1.bf16.msra.mxu0 %v1332
        %1403 = vmatprep.subr.bf16.mxu0 0
        %1404 = vmatpush1.bf16.msra.mxu0 %v1331
        %1405 = vmatprep.subr.bf16.mxu0 0
        %1406 = vmatpush1.bf16.msra.mxu0 %v1330
        %1407 = vmatprep.subr.bf16.mxu0 0
        %1408 = vmatpush1.bf16.msra.mxu0 %v1329
        %1409 = vmatprep.subr.bf16.mxu0 0
        %1410 = vmatpush2.bf16.msra.mxu0 %v1344
        %1411 = vmatprep.subr.bf16.mxu0 0
        %1412 = vmatpush2.bf16.msra.mxu0 %v1343
        %1413 = vmatprep.subr.bf16.mxu0 0
        %1414 = vmatpush2.bf16.msra.mxu0 %v1342
        %1415 = vmatprep.subr.bf16.mxu0 0
        %1416 = vmatpush2.bf16.msra.mxu0 %v1341
        %1417 = vmatprep.subr.bf16.mxu0 0
        %1418 = vmatpush2.bf16.msra.mxu0 %v1340
        %1419 = vmatprep.subr.bf16.mxu0 0
        %1420 = vmatpush2.bf16.msra.mxu0 %v1339
        %1421 = vmatprep.subr.bf16.mxu0 0
        %1422 = vmatpush2.bf16.msra.mxu0 %v1338
        %1423 = vmatprep.subr.bf16.mxu0 0
        %1424 = vmatpush2.bf16.msra.mxu0 %v1337
        %1425 = vmatprep.mubr.bf16.mxu0 %v1127
        %1426 = vmatmul.mubr.bf16.gmra.mxu0 %v1126
        %v1427 = vpop.f32.mrf.mxu0
        %v1428 = vadd.f32 %v1199, %v1427
        %v1429 = vpop.f32.mrf.mxu0
        %v1430 = vpop.f32.mrf.mxu0
        %v1431 = vadd.f32 %v1199, %v1430
        %v1432 = vpop.f32.mrf.mxu0
        %1433 = vdwg.mxu0
        %1434 = vmatprep.subr.bf16.mxu0 0
        %1435 = vmatpush1.bf16.msra.mxu0 %v1352
        %1436 = vmatprep.subr.bf16.mxu0 0
        %1437 = vmatpush1.bf16.msra.mxu0 %v1351
        %1438 = vmatprep.subr.bf16.mxu0 0
        %1439 = vmatpush1.bf16.msra.mxu0 %v1350
        %1440 = vmatprep.subr.bf16.mxu0 0
        %1441 = vmatpush1.bf16.msra.mxu0 %v1349
        %1442 = vmatprep.subr.bf16.mxu0 0
        %1443 = vmatpush1.bf16.msra.mxu0 %v1348
        %1444 = vmatprep.subr.bf16.mxu0 0
        %1445 = vmatpush1.bf16.msra.mxu0 %v1347
        %1446 = vmatprep.subr.bf16.mxu0 0
        %1447 = vmatpush1.bf16.msra.mxu0 %v1346
        %1448 = vmatprep.subr.bf16.mxu0 0
        %1449 = vmatpush1.bf16.msra.mxu0 %v1345
        %1450 = vmatprep.subr.bf16.mxu0 0
        %1451 = vmatpush2.bf16.msra.mxu0 %v1360
        %1452 = vmatprep.subr.bf16.mxu0 0
        %1453 = vmatpush2.bf16.msra.mxu0 %v1359
        %1454 = vmatprep.subr.bf16.mxu0 0
        %1455 = vmatpush2.bf16.msra.mxu0 %v1358
        %1456 = vmatprep.subr.bf16.mxu0 0
        %1457 = vmatpush2.bf16.msra.mxu0 %v1357
        %1458 = vmatprep.subr.bf16.mxu0 0
        %1459 = vmatpush2.bf16.msra.mxu0 %v1356
        %1460 = vmatprep.subr.bf16.mxu0 0
        %1461 = vmatpush2.bf16.msra.mxu0 %v1355
        %1462 = vmatprep.subr.bf16.mxu0 0
        %1463 = vmatpush2.bf16.msra.mxu0 %v1354
        %1464 = vmatprep.subr.bf16.mxu0 0
        %1465 = vmatpush2.bf16.msra.mxu0 %v1353
        %1466 = vmatprep.mubr.bf16.mxu0 %v1129
        %1467 = vmatmul.mubr.bf16.gmra.mxu0 %v1128
        %v1468 = vpop.f32.mrf.mxu0
        %v1469 = vadd.f32 %v1428, %v1468
        %v1470 = vpop.f32.mrf.mxu0
        %v1471 = vpop.f32.mrf.mxu0
        %v1472 = vadd.f32 %v1431, %v1471
        %v1473 = vpop.f32.mrf.mxu0
        %1474 = vdwg.mxu0
        %v1475 = vld [vmem:[%s11] sm:$0x1]
        %v1477 = vlaneseq
        %v1478 = vshrl.u32 %v1477, 7
        %v1479 = vsub.s32 0, %v1478
        %v1480 = vrot.slane %v1475, %v1479
        %v1482 = vmul.f32 %v1469, %v1480
        %v1483 = vmul.f32 %v1472, %v1480
        %v1484 = vadd.f32 %v710, %v1482
        %v1485 = vadd.f32 %v711, %v1483
        %1486 = vst [vmem:[%s565] sm:$0xff] %v1484
        %1487 = vst [vmem:[%s565 + $0x8] sm:$0xff] %v1485
        %s1488 = sand.u32 %s321, 1
        %s1489 = scalar_lea.sflag [#allocation4], %s1488
        %s1490 = sand.u32 %s321, 1
        %s1491 = smul.addr %s1490, 16
        %s1492 = scalar_lea.vmem [#allocation16], %s1491
        // Predicated region
        $region101: #{block_forward.5} parent=67 // pred_check
          %p1493 = pneg %p331
        $region102: #{block_forward.5} parent=67 // pred_check_branch
          %1495 = sbr.rel (%p1493) target = $region104
        $region103: #{block_forward.5} parent=67 // pred_region
          %s1496 = smul.u32 2, %s38
          %s1498 = ssub.s32 256, 256
          %1499 = vsyncadd %s1489, %s1498
          %s1500 = smul.addr %s37, 2
          %s1501 = sadd.s32 %s1496, %s1500
          %s1502 = smul.addr %s1501, 128
          %s1503 = scalar_lea.hbm %s12, %s1502
          %s1504 = sshll.u32 %s1492, 4
          %s1505 = int_to_ptr.vmem [resolvable:$true] %s1504
          %1510 = dma.vmem_to_hbm [thread:$0]  %s1505, 256, %s1503, %s1489, 128, 128, 8
        $region104: #{block_forward.5} parent=67 // pred_fallthru
          _
      $region68: #{block_forward.5} parent=5 // pred_fallthru
        _
      %p1511 = scmp.le.s32.totalorder 2, %s28
      // Predicated region
      $region105: #{block_forward.5} parent=5 // pred_check
        %p1512 = pneg %p1511
      $region106: #{block_forward.5} parent=5 // pred_check_branch
        %1514 = sbr.rel (%p1512) target = $region108
      $region107: #{block_forward.5} parent=5 // pred_region
        %s1515 = ssub.s32 %s28, 2
        // Predicated region
        $region109: #{block_forward.5} parent=107 // pred_check
          %p1516 = pneg %p337
        $region110: #{block_forward.5} parent=107 // pred_check_branch
          %1518 = sbr.rel (%p1516) target = $region112
        $region111: #{block_forward.5} parent=107 // pred_region
          %s1519 = sand.u32 %s322, 1
          %s1520 = scalar_lea.sflag [#allocation4], %s1519
          %s1521 = sand.u32 %s322, 1
          %s1522 = smul.addr %s1521, 16
          %s1523 = scalar_lea.vmem [#allocation16], %s1522
          %1524 = dma.done %s1520, 256
        $region112: #{block_forward.5} parent=107 // pred_fallthru
          _
      $region108: #{block_forward.5} parent=5 // pred_fallthru
        _
    $region6: #{block_forward.5} parent=1 // loop_footer
      %s32 = sadd.s32 1, %s28
    $region7: #{block_forward.5} parent=1 // loop_footer_branch
      %27 = sbr.rel target = $region3
    $region8: #{block_forward.5} parent=1 // loop_exit
      _
    %1525 = vsyncpa [#allocation3], 1
    %s1526 = scalar_lea.sflag [#allocation3], 1
    %1527 = vsyncpa %s1526, 1
    %1528 = vsyncpa [#allocation6], 1
    %1529 = vsyncpa [#allocation9], 1
    %1530 = vsyncpa [#allocation12], 1
    %1531 = vsyncpa [#allocation15], 1
    %1532 = vsyncpa [#allocation4], 1
    %s1533 = scalar_lea.sflag [#allocation4], 1
    %1534 = vsyncpa %s1533, 1

</llo_original>
